<compile_context>
chip_gen: v5e
topology: v5e:2x2
jax: 0.10.0
libtpu: 0.0.40
codegen_flags: <defaults>
</compile_context>

<pallas_src>
import functools

import jax
import jax.numpy as jnp
from jax.experimental import pallas as pl
from jax.experimental.pallas import tpu as pltpu

_BN_EPS = 1e-5


# ----------------------------------------------------------------------------
# Fused kernel: LSTM (time-major, hoisted x-projection) + folded-BN MLP head.
# ----------------------------------------------------------------------------
def _lstm_encoder_kernel(x2d_ref, wih_ref, whh_ref, bias_ref,
                         w1_ref, w2_ref, w3_ref,
                         out_ref, states_ref, gx_ref):
    Tp1, B, H = states_ref.shape
    T = Tp1 - 1
    H3 = 3 * H
    H4 = 4 * H
    # Packed bias layout: [lstm_bias(4H) | b1 | b2 | b3]; offsets all static
    # and multiples of 128 lanes.
    o1 = H4
    o2 = o1 + w1_ref.shape[1]
    o3 = o2 + w2_ref.shape[1]
    o4 = o3 + w3_ref.shape[1]

    # Hoisted input projection: one (T*B, H) @ (H, 4H) bf16 matmul with f32
    # accumulation, landed in VMEM scratch so its live range does not span the
    # unrolled recurrence (keeps the register file for the serial chain).
    gx_ref[...] = (jnp.dot(x2d_ref[...], wih_ref[...],
                           preferred_element_type=jnp.float32)
                   + bias_ref[:, :o1])

    h = jnp.zeros((B, H), jnp.float32)
    c = jnp.zeros((B, H), jnp.float32)

    # Serial recurrence: only h @ W_hh remains on the critical path.
    # T is small & static -> fully unrolled so cross-step scheduling is visible.
    for t in range(T):
        g_x = gx_ref[t * B:(t + 1) * B, :]
        if t == 0:
            gates = g_x                       # h == 0 -> skip the matmul
        else:
            gates = g_x + jnp.dot(h.astype(jnp.bfloat16), whh_ref[...],
                                  preferred_element_type=jnp.float32)
        # Gate columns host-permuted to [i | f | o | g]:
        # one sigmoid over 3H lanes + one tanh over H lanes (f32 VPU/EUP math).
        sg = jax.nn.sigmoid(gates[:, :H3])
        g_g = jnp.tanh(gates[:, H3:])
        i_g = sg[:, :H]
        o_g = sg[:, 2 * H:H3]
        if t == 0:
            c = i_g * g_g                     # c == 0 -> skip f*c
        else:
            f_g = sg[:, H:2 * H]
            c = f_g * c + i_g * g_g
        h = o_g * jnp.tanh(c)
        states_ref[t] = h.astype(states_ref.dtype)

    # Final cell state as one extra row (h_n == states[T-1]); written once.
    states_ref[T] = c.astype(states_ref.dtype)

    # Fused MLP head on the final hidden state (== lstm_out[:, -1]).
    # BatchNorm scale/shift folded into the weights host-side; Dropout is
    # identity in eval mode.
    z1 = jnp.maximum(
        jnp.dot(h.astype(jnp.bfloat16), w1_ref[...],
                preferred_element_type=jnp.float32) + bias_ref[:, o1:o2],
        0.0)
    z2 = jnp.maximum(
        jnp.dot(z1.astype(jnp.bfloat16), w2_ref[...],
                preferred_element_type=jnp.float32) + bias_ref[:, o2:o3],
        0.0)
    logits = (jnp.dot(z2.astype(jnp.bfloat16), w3_ref[...],
                      preferred_element_type=jnp.float32)
              + bias_ref[:, o3:o4])
    out_ref[...] = jax.nn.sigmoid(logits).astype(out_ref.dtype)


# ----------------------------------------------------------------------------
# Host-side one-time parameter preparation.
# ----------------------------------------------------------------------------
def _permute_gate_columns(a):
    """Reorder gate column blocks [i | f | g | o] -> [i | f | o | g]."""
    i, f, g, o = jnp.split(a, 4, axis=-1)
    return jnp.concatenate([i, f, o, g], axis=-1)


def _fold_bn_into_linear(gamma, beta, mean, var, w, b):
    """BN(x) @ w + b  ==  x @ (scale[:,None]*w) + (shift @ w + b)."""
    scale = gamma * jax.lax.rsqrt(var + _BN_EPS)           # (d_in,)
    shift = beta - mean * scale                            # (d_in,)
    return w * scale[:, None], shift @ w + b               # (d_in,d_out),(d_out,)


def prepare_kernel_params(params):
    """Gate permutation, BN folding, bf16 weight cast, packed bias vector."""
    m = params["mlp"]
    wih = _permute_gate_columns(params["w_ih_t"]).astype(jnp.bfloat16)
    whh = _permute_gate_columns(params["w_hh_t"]).astype(jnp.bfloat16)
    lstm_b = _permute_gate_columns(params["lstm_bias"].reshape(1, -1))

    folded_w, folded_b = [], []
    for li in range(1, 4):
        w_f, b_f = _fold_bn_into_linear(
            m[f"bn{li}_gamma"], m[f"bn{li}_beta"],
            m[f"bn{li}_mean"], m[f"bn{li}_var"],
            m[f"w{li}"], m[f"b{li}"])
        folded_w.append(w_f.astype(jnp.bfloat16))
        folded_b.append(b_f.reshape(1, -1))

    bias_packed = jnp.concatenate([lstm_b] + folded_b, axis=-1)
    bias_packed = bias_packed.astype(jnp.float32)
    return {"w_ih": wih, "w_hh": whh, "bias": bias_packed,
            "w1": folded_w[0], "w2": folded_w[1], "w3": folded_w[2]}


# ----------------------------------------------------------------------------
# Wrapper: mirrors lstm_encoder.forward -> (output, lstm_out, (h_n, c_n)).
# ----------------------------------------------------------------------------
@jax.jit
def lstm_encoder_forward(kparams, x_bth):
    B, T, H = x_bth.shape
    n_out = kparams["w3"].shape[-1]
    # Time-major, flattened (T*B, H) so the x-projection is one matmul.
    x2d = jnp.transpose(x_bth, (1, 0, 2)).reshape(T * B, H).astype(jnp.bfloat16)

    vmem = pl.BlockSpec(memory_space=pltpu.MemorySpace.VMEM)
    args = (x2d, kparams["w_ih"], kparams["w_hh"], kparams["bias"],
            kparams["w1"], kparams["w2"], kparams["w3"])

    out, states = pl.pallas_call(
        _lstm_encoder_kernel,
        out_shape=(
            jax.ShapeDtypeStruct((B, n_out), jnp.float32),
            jax.ShapeDtypeStruct((T + 1, B, H), x_bth.dtype),
        ),
        in_specs=[vmem] * len(args),
        out_specs=(vmem, vmem),
        scratch_shapes=[pltpu.VMEM((T * B, 4 * H), jnp.float32)],
    )(*args)

    lstm_out = jnp.transpose(states[:T], (1, 0, 2))        # (B, T, H)
    h_n = states[T - 1][None]                              # (1, B, H)
    c_n = states[T][None]                                  # (1, B, H)
    return out, lstm_out, (h_n, c_n)


# ----------------------------------------------------------------------------
# Parameter init (deterministic, synthetic, PyTorch-layout equivalents).
# NOTE: the original module hard-codes the head input width to 8560 (its real
# input_size); here input_size is shrunk to 128 so the same structure runs at
# demo scale (see production-scale notes in the header).
# ----------------------------------------------------------------------------
def init_params(key, input_size, head_dims=(1024, 128, 9)):
    H = input_size
    ks = iter(jax.random.split(key, 32))

    def unif(shape, scale):
        return jax.random.uniform(next(ks), shape, jnp.float32, -scale, scale)

    p = {}
    s = 1.0 / float(H) ** 0.5
    p["w_ih_t"] = unif((H, 4 * H), s)            # transpose of torch (4H, H)
    p["w_hh_t"] = unif((H, 4 * H), s)
    p["lstm_bias"] = unif((4 * H,), s) + unif((4 * H,), s)   # b_ih + b_hh

    dims = (H,) + tuple(head_dims)               # (H, 1024, 128, 9)
    mlp = {}
    for li in range(3):
        d_in, d_out = dims[li], dims[li + 1]
        mlp[f"bn{li+1}_gamma"] = 1.0 + 0.1 * unif((d_in,), 1.0)
        mlp[f"bn{li+1}_beta"] = 0.1 * unif((d_in,), 1.0)
        mlp[f"bn{li+1}_mean"] = 0.1 * unif((d_in,), 1.0)
        mlp[f"bn{li+1}_var"] = 1.0 + 0.1 * jnp.abs(unif((d_in,), 1.0))
        ls = 1.0 / float(d_in) ** 0.5
        mlp[f"w{li+1}"] = unif((d_in, d_out), ls)   # (in, out)
        mlp[f"b{li+1}"] = unif((d_out,), ls)
    p["mlp"] = mlp
    return p


# ----------------------------------------------------------------------------
# Pure-JAX f32 reference in the ORIGINAL (unpermuted, unfolded) formulation.
# ----------------------------------------------------------------------------
def _ref_forward(params, x):
    B, T, H = x.shape
    w_ih, w_hh = params["w_ih_t"], params["w_hh_t"]
    bias = params["lstm_bias"].reshape(1, -1)

    def step(carry, x_t):
        h, c = carry
        g = x_t @ w_ih + h @ w_hh + bias
        i = jax.nn.sigmoid(g[:, :H])
        f = jax.nn.sigmoid(g[:, H:2 * H])
        gg = jnp.tanh(g[:, 2 * H:3 * H])
        o = jax.nn.sigmoid(g[:, 3 * H:])
        c = f * c + i * gg
        h = o * jnp.tanh(c)
        return (h, c), h

    (h_n, c_n), hs = jax.lax.scan(
        step, (jnp.zeros((B, H)), jnp.zeros((B, H))),
        jnp.transpose(x, (1, 0, 2)))
    lstm_out = jnp.transpose(hs, (1, 0, 2))

    m = params["mlp"]
    z = h_n
    for li in range(1, 4):
        z = ((z - m[f"bn{li}_mean"])
             * jax.lax.rsqrt(m[f"bn{li}_var"] + _BN_EPS) * m[f"bn{li}_gamma"]
             + m[f"bn{li}_beta"])
        z = z @ m[f"w{li}"] + m[f"b{li}"]
        if li < 3:
            z = jnp.maximum(z, 0.0)
    out = jax.nn.sigmoid(z)
    return out, lstm_out, (h_n[None], c_n[None])


if __name__ == "__main__":
    B, T, H = 8, 8, 128                          # batch, seq, input_size(=hidden)
    key = jax.random.PRNGKey(0)
    k_param, k_x = jax.random.split(key)
    params = init_params(k_param, H)
    kparams = prepare_kernel_params(params)
    x = jax.random.normal(k_x, (B, T, H), jnp.float32)

    output, lstm_out, (h_n, c_n) = jax.block_until_ready(
        lstm_encoder_forward(kparams, x))

    # Sanity check vs pure-f32 reference.  Kernel uses bf16 matmul operands
    # with f32 accumulation, so the tolerance is relaxed accordingly.
    ro, rl, (rh, rc) = _ref_forward(params, x)
    assert output.shape == (B, 9) and lstm_out.shape == (B, T, H)
    assert h_n.shape == (1, B, H) and c_n.shape == (1, B, H)
    tol = dict(atol=2e-2, rtol=2e-2)
    assert jnp.allclose(output, ro, **tol)
    assert jnp.allclose(lstm_out, rl, **tol)
    assert jnp.allclose(h_n, rh, **tol)
    assert jnp.allclose(c_n, rc, **tol)

    print("KERNEL_OK")
</pallas_src>

<mosaic_0001>
module attributes {stable_mosaic.version = 11 : i64} {
  func.func @_lstm_encoder_kernel(%arg0: memref<64x128xbf16, #tpu.memory_space<vmem>>, %arg1: memref<128x512xbf16, #tpu.memory_space<vmem>>, %arg2: memref<128x512xbf16, #tpu.memory_space<vmem>>, %arg3: memref<1x1673xf32, #tpu.memory_space<vmem>>, %arg4: memref<128x1024xbf16, #tpu.memory_space<vmem>>, %arg5: memref<1024x128xbf16, #tpu.memory_space<vmem>>, %arg6: memref<128x9xbf16, #tpu.memory_space<vmem>>, %arg7: memref<8x9xf32, #tpu.memory_space<vmem>>, %arg8: memref<9x8x128xf32, #tpu.memory_space<vmem>>, %arg9: memref<64x512xf32, #tpu.memory_space<vmem>>) attributes {dimension_semantics = [], scalar_prefetch = 0 : i64, scratch_operands = 1 : i64, tpu.core_type = #tpu.core_type<tc>} {
    %c0 = arith.constant 0 : index
    %c0_0 = arith.constant 0 : index
    %0 = vector.load %arg0[%c0, %c0_0] : memref<64x128xbf16, #tpu.memory_space<vmem>>, vector<64x128xbf16>
    %c0_1 = arith.constant 0 : index
    %c0_2 = arith.constant 0 : index
    %1 = vector.load %arg1[%c0_1, %c0_2] : memref<128x512xbf16, #tpu.memory_space<vmem>>, vector<128x512xbf16>
    %cst = arith.constant dense<0.000000e+00> : vector<64x512xf32>
    %2 = tpu.matmul %0, %1, %cst {dimension_numbers = #tpu.dot_dimension_numbers<[1], [0], [0], [1], [0, 0, 1, 1], [], []>} : vector<64x128xbf16>, vector<128x512xbf16>, vector<64x512xf32> -> vector<64x512xf32>
    %c0_3 = arith.constant 0 : index
    %c0_4 = arith.constant 0 : index
    %3 = vector.load %arg3[%c0_3, %c0_4] : memref<1x1673xf32, #tpu.memory_space<vmem>>, vector<1x512xf32>
    %4 = vector.broadcast %3 : vector<1x512xf32> to vector<64x512xf32>
    %5 = arith.addf %2, %4 : vector<64x512xf32>
    %c0_5 = arith.constant 0 : index
    %c0_6 = arith.constant 0 : index
    %6 = vector.load %arg9[%c0_5, %c0_6] : memref<64x512xf32, #tpu.memory_space<vmem>>, vector<64x512xf32>
    tpu.vector_store %arg9[%c0_5, %c0_6], %5 {strides = array<i32>} : memref<64x512xf32, #tpu.memory_space<vmem>>, vector<64x512xf32>,
    %c0_7 = arith.constant 0 : index
    %c0_8 = arith.constant 0 : index
    %7 = vector.load %arg9[%c0_7, %c0_8] : memref<64x512xf32, #tpu.memory_space<vmem>>, vector<8x512xf32>
    %8 = vector.extract_strided_slice %7 {offsets = [0, 0], sizes = [8, 384], strides = [1, 1]} : vector<8x512xf32> to vector<8x384xf32>
    %9 = arith.negf %8 : vector<8x384xf32>
    %10 = math.exp %9 : vector<8x384xf32>
    %cst_9 = arith.constant 1.000000e+00 : f32
    %11 = vector.broadcast %cst_9 : f32 to vector<8x384xf32>
    %12 = arith.addf %11, %10 : vector<8x384xf32>
    %13 = arith.divf %11, %12 : vector<8x384xf32>
    %14 = vector.extract_strided_slice %7 {offsets = [0, 384], sizes = [8, 128], strides = [1, 1]} : vector<8x512xf32> to vector<8x128xf32>
    %15 = math.tanh %14 : vector<8x128xf32>
    %16 = vector.extract_strided_slice %13 {offsets = [0, 0], sizes = [8, 128], strides = [1, 1]} : vector<8x384xf32> to vector<8x128xf32>
    %17 = vector.extract_strided_slice %13 {offsets = [0, 256], sizes = [8, 128], strides = [1, 1]} : vector<8x384xf32> to vector<8x128xf32>
    %18 = arith.mulf %16, %15 : vector<8x128xf32>
    %19 = math.tanh %18 : vector<8x128xf32>
    %20 = arith.mulf %17, %19 : vector<8x128xf32>
    %c0_10 = arith.constant 0 : index
    %c0_11 = arith.constant 0 : index
    %c0_12 = arith.constant 0 : index
    %21 = vector.load %arg8[%c0_10, %c0_11, %c0_12] : memref<9x8x128xf32, #tpu.memory_space<vmem>>, vector<1x8x128xf32>
    %22 = vector.shape_cast %21 : vector<1x8x128xf32> to vector<8x128xf32>
    %23 = vector.shape_cast %20 : vector<8x128xf32> to vector<1x8x128xf32>
    tpu.vector_store %arg8[%c0_10, %c0_11, %c0_12], %23 {strides = array<i32>} : memref<9x8x128xf32, #tpu.memory_space<vmem>>, vector<1x8x128xf32>,
    %c8 = arith.constant 8 : index
    %c0_13 = arith.constant 0 : index
    %24 = vector.load %arg9[%c8, %c0_13] : memref<64x512xf32, #tpu.memory_space<vmem>>, vector<8x512xf32>
    %25 = arith.truncf %20 : vector<8x128xf32> to vector<8x128xbf16>
    %c0_14 = arith.constant 0 : index
    %c0_15 = arith.constant 0 : index
    %26 = vector.load %arg2[%c0_14, %c0_15] : memref<128x512xbf16, #tpu.memory_space<vmem>>, vector<128x512xbf16>
    %cst_16 = arith.constant dense<0.000000e+00> : vector<8x512xf32>
    %27 = tpu.matmul %25, %26, %cst_16 {dimension_numbers = #tpu.dot_dimension_numbers<[1], [0], [0], [1], [0, 0, 1, 1], [], []>} : vector<8x128xbf16>, vector<128x512xbf16>, vector<8x512xf32> -> vector<8x512xf32>
    %28 = arith.addf %24, %27 : vector<8x512xf32>
    %29 = vector.extract_strided_slice %28 {offsets = [0, 0], sizes = [8, 384], strides = [1, 1]} : vector<8x512xf32> to vector<8x384xf32>
    %30 = arith.negf %29 : vector<8x384xf32>
    %31 = math.exp %30 : vector<8x384xf32>
    %cst_17 = arith.constant 1.000000e+00 : f32
    %32 = vector.broadcast %cst_17 : f32 to vector<8x384xf32>
    %33 = arith.addf %32, %31 : vector<8x384xf32>
    %34 = arith.divf %32, %33 : vector<8x384xf32>
    %35 = vector.extract_strided_slice %28 {offsets = [0, 384], sizes = [8, 128], strides = [1, 1]} : vector<8x512xf32> to vector<8x128xf32>
    %36 = math.tanh %35 : vector<8x128xf32>
    %37 = vector.extract_strided_slice %34 {offsets = [0, 0], sizes = [8, 128], strides = [1, 1]} : vector<8x384xf32> to vector<8x128xf32>
    %38 = vector.extract_strided_slice %34 {offsets = [0, 256], sizes = [8, 128], strides = [1, 1]} : vector<8x384xf32> to vector<8x128xf32>
    %39 = vector.extract_strided_slice %34 {offsets = [0, 128], sizes = [8, 128], strides = [1, 1]} : vector<8x384xf32> to vector<8x128xf32>
    %40 = arith.mulf %39, %18 : vector<8x128xf32>
    %41 = arith.mulf %37, %36 : vector<8x128xf32>
    %42 = arith.addf %40, %41 : vector<8x128xf32>
    %43 = math.tanh %42 : vector<8x128xf32>
    %44 = arith.mulf %38, %43 : vector<8x128xf32>
    %c1 = arith.constant 1 : index
    %c0_18 = arith.constant 0 : index
    %c0_19 = arith.constant 0 : index
    %45 = vector.load %arg8[%c1, %c0_18, %c0_19] : memref<9x8x128xf32, #tpu.memory_space<vmem>>, vector<1x8x128xf32>
    %46 = vector.shape_cast %45 : vector<1x8x128xf32> to vector<8x128xf32>
    %47 = vector.shape_cast %44 : vector<8x128xf32> to vector<1x8x128xf32>
    tpu.vector_store %arg8[%c1, %c0_18, %c0_19], %47 {strides = array<i32>} : memref<9x8x128xf32, #tpu.memory_space<vmem>>, vector<1x8x128xf32>,
    %c16 = arith.constant 16 : index
    %c0_20 = arith.constant 0 : index
    %48 = vector.load %arg9[%c16, %c0_20] : memref<64x512xf32, #tpu.memory_space<vmem>>, vector<8x512xf32>
    %49 = arith.truncf %44 : vector<8x128xf32> to vector<8x128xbf16>
    %c0_21 = arith.constant 0 : index
    %c0_22 = arith.constant 0 : index
    %50 = vector.load %arg2[%c0_21, %c0_22] : memref<128x512xbf16, #tpu.memory_space<vmem>>, vector<128x512xbf16>
    %cst_23 = arith.constant dense<0.000000e+00> : vector<8x512xf32>
    %51 = tpu.matmul %49, %50, %cst_23 {dimension_numbers = #tpu.dot_dimension_numbers<[1], [0], [0], [1], [0, 0, 1, 1], [], []>} : vector<8x128xbf16>, vector<128x512xbf16>, vector<8x512xf32> -> vector<8x512xf32>
    %52 = arith.addf %48, %51 : vector<8x512xf32>
    %53 = vector.extract_strided_slice %52 {offsets = [0, 0], sizes = [8, 384], strides = [1, 1]} : vector<8x512xf32> to vector<8x384xf32>
    %54 = arith.negf %53 : vector<8x384xf32>
    %55 = math.exp %54 : vector<8x384xf32>
    %cst_24 = arith.constant 1.000000e+00 : f32
    %56 = vector.broadcast %cst_24 : f32 to vector<8x384xf32>
    %57 = arith.addf %56, %55 : vector<8x384xf32>
    %58 = arith.divf %56, %57 : vector<8x384xf32>
    %59 = vector.extract_strided_slice %52 {offsets = [0, 384], sizes = [8, 128], strides = [1, 1]} : vector<8x512xf32> to vector<8x128xf32>
    %60 = math.tanh %59 : vector<8x128xf32>
    %61 = vector.extract_strided_slice %58 {offsets = [0, 0], sizes = [8, 128], strides = [1, 1]} : vector<8x384xf32> to vector<8x128xf32>
    %62 = vector.extract_strided_slice %58 {offsets = [0, 256], sizes = [8, 128], strides = [1, 1]} : vector<8x384xf32> to vector<8x128xf32>
    %63 = vector.extract_strided_slice %58 {offsets = [0, 128], sizes = [8, 128], strides = [1, 1]} : vector<8x384xf32> to vector<8x128xf32>
    %64 = arith.mulf %63, %42 : vector<8x128xf32>
    %65 = arith.mulf %61, %60 : vector<8x128xf32>
    %66 = arith.addf %64, %65 : vector<8x128xf32>
    %67 = math.tanh %66 : vector<8x128xf32>
    %68 = arith.mulf %62, %67 : vector<8x128xf32>
    %c2 = arith.constant 2 : index
    %c0_25 = arith.constant 0 : index
    %c0_26 = arith.constant 0 : index
    %69 = vector.load %arg8[%c2, %c0_25, %c0_26] : memref<9x8x128xf32, #tpu.memory_space<vmem>>, vector<1x8x128xf32>
    %70 = vector.shape_cast %69 : vector<1x8x128xf32> to vector<8x128xf32>
    %71 = vector.shape_cast %68 : vector<8x128xf32> to vector<1x8x128xf32>
    tpu.vector_store %arg8[%c2, %c0_25, %c0_26], %71 {strides = array<i32>} : memref<9x8x128xf32, #tpu.memory_space<vmem>>, vector<1x8x128xf32>,
    %c24 = arith.constant 24 : index
    %c0_27 = arith.constant 0 : index
    %72 = vector.load %arg9[%c24, %c0_27] : memref<64x512xf32, #tpu.memory_space<vmem>>, vector<8x512xf32>
    %73 = arith.truncf %68 : vector<8x128xf32> to vector<8x128xbf16>
    %c0_28 = arith.constant 0 : index
    %c0_29 = arith.constant 0 : index
    %74 = vector.load %arg2[%c0_28, %c0_29] : memref<128x512xbf16, #tpu.memory_space<vmem>>, vector<128x512xbf16>
    %cst_30 = arith.constant dense<0.000000e+00> : vector<8x512xf32>
    %75 = tpu.matmul %73, %74, %cst_30 {dimension_numbers = #tpu.dot_dimension_numbers<[1], [0], [0], [1], [0, 0, 1, 1], [], []>} : vector<8x128xbf16>, vector<128x512xbf16>, vector<8x512xf32> -> vector<8x512xf32>
    %76 = arith.addf %72, %75 : vector<8x512xf32>
    %77 = vector.extract_strided_slice %76 {offsets = [0, 0], sizes = [8, 384], strides = [1, 1]} : vector<8x512xf32> to vector<8x384xf32>
    %78 = arith.negf %77 : vector<8x384xf32>
    %79 = math.exp %78 : vector<8x384xf32>
    %cst_31 = arith.constant 1.000000e+00 : f32
    %80 = vector.broadcast %cst_31 : f32 to vector<8x384xf32>
    %81 = arith.addf %80, %79 : vector<8x384xf32>
    %82 = arith.divf %80, %81 : vector<8x384xf32>
    %83 = vector.extract_strided_slice %76 {offsets = [0, 384], sizes = [8, 128], strides = [1, 1]} : vector<8x512xf32> to vector<8x128xf32>
    %84 = math.tanh %83 : vector<8x128xf32>
    %85 = vector.extract_strided_slice %82 {offsets = [0, 0], sizes = [8, 128], strides = [1, 1]} : vector<8x384xf32> to vector<8x128xf32>
    %86 = vector.extract_strided_slice %82 {offsets = [0, 256], sizes = [8, 128], strides = [1, 1]} : vector<8x384xf32> to vector<8x128xf32>
    %87 = vector.extract_strided_slice %82 {offsets = [0, 128], sizes = [8, 128], strides = [1, 1]} : vector<8x384xf32> to vector<8x128xf32>
    %88 = arith.mulf %87, %66 : vector<8x128xf32>
    %89 = arith.mulf %85, %84 : vector<8x128xf32>
    %90 = arith.addf %88, %89 : vector<8x128xf32>
    %91 = math.tanh %90 : vector<8x128xf32>
    %92 = arith.mulf %86, %91 : vector<8x128xf32>
    %c3 = arith.constant 3 : index
    %c0_32 = arith.constant 0 : index
    %c0_33 = arith.constant 0 : index
    %93 = vector.load %arg8[%c3, %c0_32, %c0_33] : memref<9x8x128xf32, #tpu.memory_space<vmem>>, vector<1x8x128xf32>
    %94 = vector.shape_cast %93 : vector<1x8x128xf32> to vector<8x128xf32>
    %95 = vector.shape_cast %92 : vector<8x128xf32> to vector<1x8x128xf32>
    tpu.vector_store %arg8[%c3, %c0_32, %c0_33], %95 {strides = array<i32>} : memref<9x8x128xf32, #tpu.memory_space<vmem>>, vector<1x8x128xf32>,
    %c32 = arith.constant 32 : index
    %c0_34 = arith.constant 0 : index
    %96 = vector.load %arg9[%c32, %c0_34] : memref<64x512xf32, #tpu.memory_space<vmem>>, vector<8x512xf32>
    %97 = arith.truncf %92 : vector<8x128xf32> to vector<8x128xbf16>
    %c0_35 = arith.constant 0 : index
    %c0_36 = arith.constant 0 : index
    %98 = vector.load %arg2[%c0_35, %c0_36] : memref<128x512xbf16, #tpu.memory_space<vmem>>, vector<128x512xbf16>
    %cst_37 = arith.constant dense<0.000000e+00> : vector<8x512xf32>
    %99 = tpu.matmul %97, %98, %cst_37 {dimension_numbers = #tpu.dot_dimension_numbers<[1], [0], [0], [1], [0, 0, 1, 1], [], []>} : vector<8x128xbf16>, vector<128x512xbf16>, vector<8x512xf32> -> vector<8x512xf32>
    %100 = arith.addf %96, %99 : vector<8x512xf32>
    %101 = vector.extract_strided_slice %100 {offsets = [0, 0], sizes = [8, 384], strides = [1, 1]} : vector<8x512xf32> to vector<8x384xf32>
    %102 = arith.negf %101 : vector<8x384xf32>
    %103 = math.exp %102 : vector<8x384xf32>
    %cst_38 = arith.constant 1.000000e+00 : f32
    %104 = vector.broadcast %cst_38 : f32 to vector<8x384xf32>
    %105 = arith.addf %104, %103 : vector<8x384xf32>
    %106 = arith.divf %104, %105 : vector<8x384xf32>
    %107 = vector.extract_strided_slice %100 {offsets = [0, 384], sizes = [8, 128], strides = [1, 1]} : vector<8x512xf32> to vector<8x128xf32>
    %108 = math.tanh %107 : vector<8x128xf32>
    %109 = vector.extract_strided_slice %106 {offsets = [0, 0], sizes = [8, 128], strides = [1, 1]} : vector<8x384xf32> to vector<8x128xf32>
    %110 = vector.extract_strided_slice %106 {offsets = [0, 256], sizes = [8, 128], strides = [1, 1]} : vector<8x384xf32> to vector<8x128xf32>
    %111 = vector.extract_strided_slice %106 {offsets = [0, 128], sizes = [8, 128], strides = [1, 1]} : vector<8x384xf32> to vector<8x128xf32>
    %112 = arith.mulf %111, %90 : vector<8x128xf32>
    %113 = arith.mulf %109, %108 : vector<8x128xf32>
    %114 = arith.addf %112, %113 : vector<8x128xf32>
    %115 = math.tanh %114 : vector<8x128xf32>
    %116 = arith.mulf %110, %115 : vector<8x128xf32>
    %c4 = arith.constant 4 : index
    %c0_39 = arith.constant 0 : index
    %c0_40 = arith.constant 0 : index
    %117 = vector.load %arg8[%c4, %c0_39, %c0_40] : memref<9x8x128xf32, #tpu.memory_space<vmem>>, vector<1x8x128xf32>
    %118 = vector.shape_cast %117 : vector<1x8x128xf32> to vector<8x128xf32>
    %119 = vector.shape_cast %116 : vector<8x128xf32> to vector<1x8x128xf32>
    tpu.vector_store %arg8[%c4, %c0_39, %c0_40], %119 {strides = array<i32>} : memref<9x8x128xf32, #tpu.memory_space<vmem>>, vector<1x8x128xf32>,
    %c40 = arith.constant 40 : index
    %c0_41 = arith.constant 0 : index
    %120 = vector.load %arg9[%c40, %c0_41] : memref<64x512xf32, #tpu.memory_space<vmem>>, vector<8x512xf32>
    %121 = arith.truncf %116 : vector<8x128xf32> to vector<8x128xbf16>
    %c0_42 = arith.constant 0 : index
    %c0_43 = arith.constant 0 : index
    %122 = vector.load %arg2[%c0_42, %c0_43] : memref<128x512xbf16, #tpu.memory_space<vmem>>, vector<128x512xbf16>
    %cst_44 = arith.constant dense<0.000000e+00> : vector<8x512xf32>
    %123 = tpu.matmul %121, %122, %cst_44 {dimension_numbers = #tpu.dot_dimension_numbers<[1], [0], [0], [1], [0, 0, 1, 1], [], []>} : vector<8x128xbf16>, vector<128x512xbf16>, vector<8x512xf32> -> vector<8x512xf32>
    %124 = arith.addf %120, %123 : vector<8x512xf32>
    %125 = vector.extract_strided_slice %124 {offsets = [0, 0], sizes = [8, 384], strides = [1, 1]} : vector<8x512xf32> to vector<8x384xf32>
    %126 = arith.negf %125 : vector<8x384xf32>
    %127 = math.exp %126 : vector<8x384xf32>
    %cst_45 = arith.constant 1.000000e+00 : f32
    %128 = vector.broadcast %cst_45 : f32 to vector<8x384xf32>
    %129 = arith.addf %128, %127 : vector<8x384xf32>
    %130 = arith.divf %128, %129 : vector<8x384xf32>
    %131 = vector.extract_strided_slice %124 {offsets = [0, 384], sizes = [8, 128], strides = [1, 1]} : vector<8x512xf32> to vector<8x128xf32>
    %132 = math.tanh %131 : vector<8x128xf32>
    %133 = vector.extract_strided_slice %130 {offsets = [0, 0], sizes = [8, 128], strides = [1, 1]} : vector<8x384xf32> to vector<8x128xf32>
    %134 = vector.extract_strided_slice %130 {offsets = [0, 256], sizes = [8, 128], strides = [1, 1]} : vector<8x384xf32> to vector<8x128xf32>
    %135 = vector.extract_strided_slice %130 {offsets = [0, 128], sizes = [8, 128], strides = [1, 1]} : vector<8x384xf32> to vector<8x128xf32>
    %136 = arith.mulf %135, %114 : vector<8x128xf32>
    %137 = arith.mulf %133, %132 : vector<8x128xf32>
    %138 = arith.addf %136, %137 : vector<8x128xf32>
    %139 = math.tanh %138 : vector<8x128xf32>
    %140 = arith.mulf %134, %139 : vector<8x128xf32>
    %c5 = arith.constant 5 : index
    %c0_46 = arith.constant 0 : index
    %c0_47 = arith.constant 0 : index
    %141 = vector.load %arg8[%c5, %c0_46, %c0_47] : memref<9x8x128xf32, #tpu.memory_space<vmem>>, vector<1x8x128xf32>
    %142 = vector.shape_cast %141 : vector<1x8x128xf32> to vector<8x128xf32>
    %143 = vector.shape_cast %140 : vector<8x128xf32> to vector<1x8x128xf32>
    tpu.vector_store %arg8[%c5, %c0_46, %c0_47], %143 {strides = array<i32>} : memref<9x8x128xf32, #tpu.memory_space<vmem>>, vector<1x8x128xf32>,
    %c48 = arith.constant 48 : index
    %c0_48 = arith.constant 0 : index
    %144 = vector.load %arg9[%c48, %c0_48] : memref<64x512xf32, #tpu.memory_space<vmem>>, vector<8x512xf32>
    %145 = arith.truncf %140 : vector<8x128xf32> to vector<8x128xbf16>
    %c0_49 = arith.constant 0 : index
    %c0_50 = arith.constant 0 : index
    %146 = vector.load %arg2[%c0_49, %c0_50] : memref<128x512xbf16, #tpu.memory_space<vmem>>, vector<128x512xbf16>
    %cst_51 = arith.constant dense<0.000000e+00> : vector<8x512xf32>
    %147 = tpu.matmul %145, %146, %cst_51 {dimension_numbers = #tpu.dot_dimension_numbers<[1], [0], [0], [1], [0, 0, 1, 1], [], []>} : vector<8x128xbf16>, vector<128x512xbf16>, vector<8x512xf32> -> vector<8x512xf32>
    %148 = arith.addf %144, %147 : vector<8x512xf32>
    %149 = vector.extract_strided_slice %148 {offsets = [0, 0], sizes = [8, 384], strides = [1, 1]} : vector<8x512xf32> to vector<8x384xf32>
    %150 = arith.negf %149 : vector<8x384xf32>
    %151 = math.exp %150 : vector<8x384xf32>
    %cst_52 = arith.constant 1.000000e+00 : f32
    %152 = vector.broadcast %cst_52 : f32 to vector<8x384xf32>
    %153 = arith.addf %152, %151 : vector<8x384xf32>
    %154 = arith.divf %152, %153 : vector<8x384xf32>
    %155 = vector.extract_strided_slice %148 {offsets = [0, 384], sizes = [8, 128], strides = [1, 1]} : vector<8x512xf32> to vector<8x128xf32>
    %156 = math.tanh %155 : vector<8x128xf32>
    %157 = vector.extract_strided_slice %154 {offsets = [0, 0], sizes = [8, 128], strides = [1, 1]} : vector<8x384xf32> to vector<8x128xf32>
    %158 = vector.extract_strided_slice %154 {offsets = [0, 256], sizes = [8, 128], strides = [1, 1]} : vector<8x384xf32> to vector<8x128xf32>
    %159 = vector.extract_strided_slice %154 {offsets = [0, 128], sizes = [8, 128], strides = [1, 1]} : vector<8x384xf32> to vector<8x128xf32>
    %160 = arith.mulf %159, %138 : vector<8x128xf32>
    %161 = arith.mulf %157, %156 : vector<8x128xf32>
    %162 = arith.addf %160, %161 : vector<8x128xf32>
    %163 = math.tanh %162 : vector<8x128xf32>
    %164 = arith.mulf %158, %163 : vector<8x128xf32>
    %c6 = arith.constant 6 : index
    %c0_53 = arith.constant 0 : index
    %c0_54 = arith.constant 0 : index
    %165 = vector.load %arg8[%c6, %c0_53, %c0_54] : memref<9x8x128xf32, #tpu.memory_space<vmem>>, vector<1x8x128xf32>
    %166 = vector.shape_cast %165 : vector<1x8x128xf32> to vector<8x128xf32>
    %167 = vector.shape_cast %164 : vector<8x128xf32> to vector<1x8x128xf32>
    tpu.vector_store %arg8[%c6, %c0_53, %c0_54], %167 {strides = array<i32>} : memref<9x8x128xf32, #tpu.memory_space<vmem>>, vector<1x8x128xf32>,
    %c56 = arith.constant 56 : index
    %c0_55 = arith.constant 0 : index
    %168 = vector.load %arg9[%c56, %c0_55] : memref<64x512xf32, #tpu.memory_space<vmem>>, vector<8x512xf32>
    %169 = arith.truncf %164 : vector<8x128xf32> to vector<8x128xbf16>
    %c0_56 = arith.constant 0 : index
    %c0_57 = arith.constant 0 : index
    %170 = vector.load %arg2[%c0_56, %c0_57] : memref<128x512xbf16, #tpu.memory_space<vmem>>, vector<128x512xbf16>
    %cst_58 = arith.constant dense<0.000000e+00> : vector<8x512xf32>
    %171 = tpu.matmul %169, %170, %cst_58 {dimension_numbers = #tpu.dot_dimension_numbers<[1], [0], [0], [1], [0, 0, 1, 1], [], []>} : vector<8x128xbf16>, vector<128x512xbf16>, vector<8x512xf32> -> vector<8x512xf32>
    %172 = arith.addf %168, %171 : vector<8x512xf32>
    %173 = vector.extract_strided_slice %172 {offsets = [0, 0], sizes = [8, 384], strides = [1, 1]} : vector<8x512xf32> to vector<8x384xf32>
    %174 = arith.negf %173 : vector<8x384xf32>
    %175 = math.exp %174 : vector<8x384xf32>
    %cst_59 = arith.constant 1.000000e+00 : f32
    %176 = vector.broadcast %cst_59 : f32 to vector<8x384xf32>
    %177 = arith.addf %176, %175 : vector<8x384xf32>
    %178 = arith.divf %176, %177 : vector<8x384xf32>
    %179 = vector.extract_strided_slice %172 {offsets = [0, 384], sizes = [8, 128], strides = [1, 1]} : vector<8x512xf32> to vector<8x128xf32>
    %180 = math.tanh %179 : vector<8x128xf32>
    %181 = vector.extract_strided_slice %178 {offsets = [0, 0], sizes = [8, 128], strides = [1, 1]} : vector<8x384xf32> to vector<8x128xf32>
    %182 = vector.extract_strided_slice %178 {offsets = [0, 256], sizes = [8, 128], strides = [1, 1]} : vector<8x384xf32> to vector<8x128xf32>
    %183 = vector.extract_strided_slice %178 {offsets = [0, 128], sizes = [8, 128], strides = [1, 1]} : vector<8x384xf32> to vector<8x128xf32>
    %184 = arith.mulf %183, %162 : vector<8x128xf32>
    %185 = arith.mulf %181, %180 : vector<8x128xf32>
    %186 = arith.addf %184, %185 : vector<8x128xf32>
    %187 = math.tanh %186 : vector<8x128xf32>
    %188 = arith.mulf %182, %187 : vector<8x128xf32>
    %c7 = arith.constant 7 : index
    %c0_60 = arith.constant 0 : index
    %c0_61 = arith.constant 0 : index
    %189 = vector.load %arg8[%c7, %c0_60, %c0_61] : memref<9x8x128xf32, #tpu.memory_space<vmem>>, vector<1x8x128xf32>
    %190 = vector.shape_cast %189 : vector<1x8x128xf32> to vector<8x128xf32>
    %191 = vector.shape_cast %188 : vector<8x128xf32> to vector<1x8x128xf32>
    tpu.vector_store %arg8[%c7, %c0_60, %c0_61], %191 {strides = array<i32>} : memref<9x8x128xf32, #tpu.memory_space<vmem>>, vector<1x8x128xf32>,
    %c8_62 = arith.constant 8 : index
    %c0_63 = arith.constant 0 : index
    %c0_64 = arith.constant 0 : index
    %192 = vector.load %arg8[%c8_62, %c0_63, %c0_64] : memref<9x8x128xf32, #tpu.memory_space<vmem>>, vector<1x8x128xf32>
    %193 = vector.shape_cast %192 : vector<1x8x128xf32> to vector<8x128xf32>
    %194 = vector.shape_cast %186 : vector<8x128xf32> to vector<1x8x128xf32>
    tpu.vector_store %arg8[%c8_62, %c0_63, %c0_64], %194 {strides = array<i32>} : memref<9x8x128xf32, #tpu.memory_space<vmem>>, vector<1x8x128xf32>,
    %195 = arith.truncf %188 : vector<8x128xf32> to vector<8x128xbf16>
    %c0_65 = arith.constant 0 : index
    %c0_66 = arith.constant 0 : index
    %196 = vector.load %arg4[%c0_65, %c0_66] : memref<128x1024xbf16, #tpu.memory_space<vmem>>, vector<128x1024xbf16>
    %cst_67 = arith.constant dense<0.000000e+00> : vector<8x1024xf32>
    %197 = tpu.matmul %195, %196, %cst_67 {dimension_numbers = #tpu.dot_dimension_numbers<[1], [0], [0], [1], [0, 0, 1, 1], [], []>} : vector<8x128xbf16>, vector<128x1024xbf16>, vector<8x1024xf32> -> vector<8x1024xf32>
    %c0_68 = arith.constant 0 : index
    %c512 = arith.constant 512 : index
    %198 = vector.load %arg3[%c0_68, %c512] : memref<1x1673xf32, #tpu.memory_space<vmem>>, vector<1x1024xf32>
    %199 = vector.broadcast %198 : vector<1x1024xf32> to vector<8x1024xf32>
    %200 = arith.addf %197, %199 : vector<8x1024xf32>
    %cst_69 = arith.constant 0.000000e+00 : f32
    %201 = vector.broadcast %cst_69 : f32 to vector<8x1024xf32>
    %202 = arith.maximumf %200, %201 : vector<8x1024xf32>
    %203 = arith.truncf %202 : vector<8x1024xf32> to vector<8x1024xbf16>
    %c0_70 = arith.constant 0 : index
    %c0_71 = arith.constant 0 : index
    %204 = vector.load %arg5[%c0_70, %c0_71] : memref<1024x128xbf16, #tpu.memory_space<vmem>>, vector<1024x128xbf16>
    %cst_72 = arith.constant dense<0.000000e+00> : vector<8x128xf32>
    %205 = tpu.matmul %203, %204, %cst_72 {dimension_numbers = #tpu.dot_dimension_numbers<[1], [0], [0], [1], [0, 0, 1, 1], [], []>} : vector<8x1024xbf16>, vector<1024x128xbf16>, vector<8x128xf32> -> vector<8x128xf32>
    %c0_73 = arith.constant 0 : index
    %c1536 = arith.constant 1536 : index
    %206 = vector.load %arg3[%c0_73, %c1536] : memref<1x1673xf32, #tpu.memory_space<vmem>>, vector<1x128xf32>
    %207 = vector.broadcast %206 : vector<1x128xf32> to vector<8x128xf32>
    %208 = arith.addf %205, %207 : vector<8x128xf32>
    %cst_74 = arith.constant 0.000000e+00 : f32
    %209 = vector.broadcast %cst_74 : f32 to vector<8x128xf32>
    %210 = arith.maximumf %208, %209 : vector<8x128xf32>
    %211 = arith.truncf %210 : vector<8x128xf32> to vector<8x128xbf16>
    %c0_75 = arith.constant 0 : index
    %c0_76 = arith.constant 0 : index
    %212 = vector.load %arg6[%c0_75, %c0_76] : memref<128x9xbf16, #tpu.memory_space<vmem>>, vector<128x9xbf16>
    %cst_77 = arith.constant dense<0.000000e+00> : vector<8x9xf32>
    %213 = tpu.matmul %211, %212, %cst_77 {dimension_numbers = #tpu.dot_dimension_numbers<[1], [0], [0], [1], [0, 0, 1, 1], [], []>} : vector<8x128xbf16>, vector<128x9xbf16>, vector<8x9xf32> -> vector<8x9xf32>
    %c0_78 = arith.constant 0 : index
    %c1664 = arith.constant 1664 : index
    %214 = vector.load %arg3[%c0_78, %c1664] : memref<1x1673xf32, #tpu.memory_space<vmem>>, vector<1x9xf32>
    %215 = vector.broadcast %214 : vector<1x9xf32> to vector<8x9xf32>
    %216 = arith.addf %213, %215 : vector<8x9xf32>
    %217 = arith.negf %216 : vector<8x9xf32>
    %218 = math.exp %217 : vector<8x9xf32>
    %cst_79 = arith.constant 1.000000e+00 : f32
    %219 = vector.broadcast %cst_79 : f32 to vector<8x9xf32>
    %220 = arith.addf %219, %218 : vector<8x9xf32>
    %221 = arith.divf %219, %220 : vector<8x9xf32>
    %c0_80 = arith.constant 0 : index
    %c0_81 = arith.constant 0 : index
    %222 = vector.load %arg7[%c0_80, %c0_81] : memref<8x9xf32, #tpu.memory_space<vmem>>, vector<8x9xf32>
    tpu.vector_store %arg7[%c0_80, %c0_81], %221 {strides = array<i32>} : memref<8x9xf32, #tpu.memory_space<vmem>>, vector<8x9xf32>,
    return
  }
}

</mosaic_0001>

<llo_original>
// kernel: lstm_encoder_forward.1
$region0: #{lstm_encoder_forward.1}
  #allocation0 [shape = 'u32[]', space=smem, size = 0x4, offset = 0x4, fixed_abs, tag = 'smem constant byte address 0x4 - core index']
  #allocation1 [shape = 'u32[72,128]{1,0:T(1,128)}', space=vmem, size = 0x9000, scoped, tag = 'internal scratch']
  #allocation2 [shape = 'f32[64,512]{1,0:T(8,128)}', space=vmem, size = 0x20000, scoped, tag = 'scratch operand']
  %s0 = inlined_call_operand.vmem [shape: bf16[64,128], index: 0, kind: input, shape index: {}]
  %s1 = inlined_call_operand.hbm [shape: bf16[128,512], index: 1, kind: input, shape index: {}]
  %s2 = inlined_call_operand.hbm [shape: bf16[128,512], index: 2, kind: input, shape index: {}]
  %s3 = inlined_call_operand.vmem [shape: f32[1,1673], index: 3, kind: input, shape index: {}]
  %s4 = inlined_call_operand.hbm [shape: bf16[128,1024], index: 4, kind: input, shape index: {}]
  %s5 = inlined_call_operand.hbm [shape: bf16[1024,128], index: 5, kind: input, shape index: {}]
  %s6 = inlined_call_operand.vmem [shape: bf16[128,9], index: 6, kind: input, shape index: {}]
  %s7 = inlined_call_operand.hbm [shape: f32[8,9], index: 7, kind: output, shape index: {0}]
  %s8 = inlined_call_operand.vmem [shape: f32[9,8,128], index: 8, kind: output, shape index: {1}]
  %9 = xla_tuple %s7, %s8
  %s10 = sld [smem:[#allocation0]]
  $region62: #{lstm_encoder_forward.1} parent=0
    _
  %s12 = ssub.s32 1, %s10
  %s13 = scalar_select 0, %s12, %s10
  $region1: #{lstm_encoder_forward.1} parent=0
    #allocation3 [shape = 'u8[131072]{0}', space=vmem, size = 0x20000, scoped, tag = 'input window, operand 1, single buffered']
    #allocation4 [shape = 's32[1]{0}', space=sflag, size = 0x4, scoped, tag = 'scoped memory for lstm_encoder_forward.1']
    #allocation5 [shape = 's32[1]{0}', space=sflag, size = 0x4, scoped, tag = 'scoped memory for lstm_encoder_forward.1']
    #allocation6 [shape = 'u8[131072]{0}', space=vmem, size = 0x20000, scoped, tag = 'input window, operand 2, single buffered']
    #allocation7 [shape = 's32[1]{0}', space=sflag, size = 0x4, scoped, tag = 'scoped memory for lstm_encoder_forward.1']
    #allocation8 [shape = 'u8[262144]{0}', space=vmem, size = 0x40000, scoped, tag = 'input window, operand 4, single buffered']
    #allocation9 [shape = 'u8[262144]{0}', space=vmem, size = 0x40000, scoped, tag = 'input window, operand 5, single buffered']
    #allocation10 [shape = 's32[1]{0}', space=sflag, size = 0x4, scoped, tag = 'scoped memory for lstm_encoder_forward.1']
    #allocation11 [shape = 'u8[4096]{0}', space=vmem, size = 0x1000, scoped, tag = 'output window, operand 0, single buffered']
    %14 = vsyncpa [#allocation4], 0
    %15 = vsyncpa [#allocation7], 0
    %16 = vsyncpa [#allocation10], 0
    %17 = vsyncpa [#allocation5], 0
    // Predicated region
    $region2: #{lstm_encoder_forward.1} parent=1 // pred_check
      _
    $region3: #{lstm_encoder_forward.1} parent=1 // pred_check_branch
      %19 = sbr.rel (0) target = $region5
    $region4: #{lstm_encoder_forward.1} parent=1 // pred_region
      _
    $region5: #{lstm_encoder_forward.1} parent=1 // pred_fallthru
      _
    // Predicated region
    $region6: #{lstm_encoder_forward.1} parent=1 // pred_check
      _
    $region7: #{lstm_encoder_forward.1} parent=1 // pred_check_branch
      %21 = sbr.rel (0) target = $region9
    $region8: #{lstm_encoder_forward.1} parent=1 // pred_region
      %23 = vsyncadd [#allocation4], 0
      %s24 = sshll.u32 %s1, 4
      %s25 = int_to_ptr.hbm [resolvable:$true] %s24
      %s26 = sshll.u32 [#allocation3], 4
      %s27 = int_to_ptr.vmem [resolvable:$true] %s26
      %32 = dma.hbm_to_vmem [thread:$0]  %s25, 4096, %s27, [#allocation4], 256, 256, 16
    $region9: #{lstm_encoder_forward.1} parent=1 // pred_fallthru
      _
    // Predicated region
    $region10: #{lstm_encoder_forward.1} parent=1 // pred_check
      _
    $region11: #{lstm_encoder_forward.1} parent=1 // pred_check_branch
      %34 = sbr.rel (0) target = $region13
    $region12: #{lstm_encoder_forward.1} parent=1 // pred_region
      %36 = vsyncadd [#allocation7], 0
      %s37 = sshll.u32 %s2, 4
      %s38 = int_to_ptr.hbm [resolvable:$true] %s37
      %s39 = sshll.u32 [#allocation6], 4
      %s40 = int_to_ptr.vmem [resolvable:$true] %s39
      %45 = dma.hbm_to_vmem [thread:$0]  %s38, 4096, %s40, [#allocation7], 256, 256, 16
    $region13: #{lstm_encoder_forward.1} parent=1 // pred_fallthru
      _
    // Predicated region
    $region14: #{lstm_encoder_forward.1} parent=1 // pred_check
      _
    $region15: #{lstm_encoder_forward.1} parent=1 // pred_check_branch
      %47 = sbr.rel (0) target = $region17
    $region16: #{lstm_encoder_forward.1} parent=1 // pred_region
      _
    $region17: #{lstm_encoder_forward.1} parent=1 // pred_fallthru
      _
    // Predicated region
    $region18: #{lstm_encoder_forward.1} parent=1 // pred_check
      _
    $region19: #{lstm_encoder_forward.1} parent=1 // pred_check_branch
      %49 = sbr.rel (0) target = $region21
    $region20: #{lstm_encoder_forward.1} parent=1 // pred_region
      %51 = vsyncadd [#allocation7], 0
      %s52 = sshll.u32 %s4, 4
      %s53 = int_to_ptr.hbm [resolvable:$true] %s52
      %s54 = sshll.u32 [#allocation8], 4
      %s55 = int_to_ptr.vmem [resolvable:$true] %s54
      %60 = dma.hbm_to_vmem [thread:$0]  %s53, 8192, %s55, [#allocation7], 512, 512, 32
    $region21: #{lstm_encoder_forward.1} parent=1 // pred_fallthru
      _
    // Predicated region
    $region22: #{lstm_encoder_forward.1} parent=1 // pred_check
      _
    $region23: #{lstm_encoder_forward.1} parent=1 // pred_check_branch
      %62 = sbr.rel (0) target = $region25
    $region24: #{lstm_encoder_forward.1} parent=1 // pred_region
      %64 = vsyncadd [#allocation10], 0
      %s65 = sshll.u32 %s5, 4
      %s66 = int_to_ptr.hbm [resolvable:$true] %s65
      %s67 = sshll.u32 [#allocation9], 4
      %s68 = int_to_ptr.vmem [resolvable:$true] %s67
      %73 = dma.hbm_to_vmem [thread:$0]  %s66, 8192, %s68, [#allocation10], 64, 64, 4
    $region25: #{lstm_encoder_forward.1} parent=1 // pred_fallthru
      _
    // Predicated region
    $region26: #{lstm_encoder_forward.1} parent=1 // pred_check
      _
    $region27: #{lstm_encoder_forward.1} parent=1 // pred_check_branch
      %75 = sbr.rel (0) target = $region29
    $region28: #{lstm_encoder_forward.1} parent=1 // pred_region
      _
    $region29: #{lstm_encoder_forward.1} parent=1 // pred_fallthru
      _
    // Predicated region
    $region30: #{lstm_encoder_forward.1} parent=1 // pred_check
      _
    $region31: #{lstm_encoder_forward.1} parent=1 // pred_check_branch
      %77 = sbr.rel (0) target = $region33
    $region32: #{lstm_encoder_forward.1} parent=1 // pred_region
      %79 = dma.done [#allocation4], 4096
    $region33: #{lstm_encoder_forward.1} parent=1 // pred_fallthru
      _
    // Predicated region
    $region34: #{lstm_encoder_forward.1} parent=1 // pred_check
      _
    $region35: #{lstm_encoder_forward.1} parent=1 // pred_check_branch
      %81 = sbr.rel (0) target = $region37
    $region36: #{lstm_encoder_forward.1} parent=1 // pred_region
      %83 = dma.done [#allocation7], 4096
    $region37: #{lstm_encoder_forward.1} parent=1 // pred_fallthru
      _
    // Predicated region
    $region38: #{lstm_encoder_forward.1} parent=1 // pred_check
      _
    $region39: #{lstm_encoder_forward.1} parent=1 // pred_check_branch
      %85 = sbr.rel (0) target = $region41
    $region40: #{lstm_encoder_forward.1} parent=1 // pred_region
      %87 = dma.done [#allocation7], 8192
    $region41: #{lstm_encoder_forward.1} parent=1 // pred_fallthru
      _
    // Predicated region
    $region42: #{lstm_encoder_forward.1} parent=1 // pred_check
      _
    $region43: #{lstm_encoder_forward.1} parent=1 // pred_check_branch
      %89 = sbr.rel (0) target = $region45
    $region44: #{lstm_encoder_forward.1} parent=1 // pred_region
      %91 = dma.done [#allocation10], 8192
    $region45: #{lstm_encoder_forward.1} parent=1 // pred_fallthru
      _
    %v92 = vld [vmem:[%s0] sm:$0xf]
    %v93 = vld [vmem:[%s0 + $0x4] sm:$0xf]
    %v94 = vld [vmem:[%s0 + $0x8] sm:$0xf]
    %v95 = vld [vmem:[%s0 + $0xc] sm:$0xf]
    %v96 = vld [vmem:[%s0 + $0x10] sm:$0xf]
    %v97 = vld [vmem:[%s0 + $0x14] sm:$0xf]
    %v98 = vld [vmem:[%s0 + $0x18] sm:$0xf]
    %v99 = vld [vmem:[%s0 + $0x1c] sm:$0xf]
    %v100 = vld [vmem:[#allocation3] sm:$0xff]
    %v101 = vld [vmem:[#allocation3 + $0x8] sm:$0xff]
    %v102 = vld [vmem:[#allocation3 + $0x10] sm:$0xff]
    %v103 = vld [vmem:[#allocation3 + $0x18] sm:$0xff]
    %v104 = vld [vmem:[#allocation3 + $0x20] sm:$0xff]
    %v105 = vld [vmem:[#allocation3 + $0x28] sm:$0xff]
    %v106 = vld [vmem:[#allocation3 + $0x30] sm:$0xff]
    %v107 = vld [vmem:[#allocation3 + $0x38] sm:$0xff]
    %v108 = vld [vmem:[#allocation3 + $0x40] sm:$0xff]
    %v109 = vld [vmem:[#allocation3 + $0x48] sm:$0xff]
    %v110 = vld [vmem:[#allocation3 + $0x50] sm:$0xff]
    %v111 = vld [vmem:[#allocation3 + $0x58] sm:$0xff]
    %v112 = vld [vmem:[#allocation3 + $0x60] sm:$0xff]
    %v113 = vld [vmem:[#allocation3 + $0x68] sm:$0xff]
    %v114 = vld [vmem:[#allocation3 + $0x70] sm:$0xff]
    %v115 = vld [vmem:[#allocation3 + $0x78] sm:$0xff]
    %v116 = vld [vmem:[#allocation3 + $0x80] sm:$0xff]
    %v117 = vld [vmem:[#allocation3 + $0x88] sm:$0xff]
    %v118 = vld [vmem:[#allocation3 + $0x90] sm:$0xff]
    %v119 = vld [vmem:[#allocation3 + $0x98] sm:$0xff]
    %v120 = vld [vmem:[#allocation3 + $0xa0] sm:$0xff]
    %v121 = vld [vmem:[#allocation3 + $0xa8] sm:$0xff]
    %v122 = vld [vmem:[#allocation3 + $0xb0] sm:$0xff]
    %v123 = vld [vmem:[#allocation3 + $0xb8] sm:$0xff]
    %v124 = vld [vmem:[#allocation3 + $0xc0] sm:$0xff]
    %v125 = vld [vmem:[#allocation3 + $0xc8] sm:$0xff]
    %v126 = vld [vmem:[#allocation3 + $0xd0] sm:$0xff]
    %v127 = vld [vmem:[#allocation3 + $0xd8] sm:$0xff]
    %v128 = vld [vmem:[#allocation3 + $0xe0] sm:$0xff]
    %v129 = vld [vmem:[#allocation3 + $0xe8] sm:$0xff]
    %v130 = vld [vmem:[#allocation3 + $0xf0] sm:$0xff]
    %v131 = vld [vmem:[#allocation3 + $0xf8] sm:$0xff]
    %v132 = vld [vmem:[%s3] sm:$0xf]
    %v134 = vperm.slane %v132, 0
    %v135 = vperm.slane %v132, 1
    %v136 = vperm.slane %v132, 2
    %v137 = vperm.slane %v132, 3
    %v150 = vunpack.c.l.b16 %v92
    %v151 = vunpack.c.l.b16 %v93
    %v152 = vunpack.c.l.b16 %v94
    %v153 = vunpack.c.l.b16 %v95
    %v154 = vunpack.c.l.b16 %v96
    %v155 = vunpack.c.l.b16 %v97
    %v156 = vunpack.c.l.b16 %v98
    %v157 = vunpack.c.l.b16 %v99
    %v158 = vpack.c.b16 %v151, %v150
    %v159 = vpack.c.b16 %v153, %v152
    %v160 = vpack.c.b16 %v155, %v154
    %v161 = vpack.c.b16 %v157, %v156
    %v198 = vunpack.c.l.b16 %v100
    %v199 = vunpack.c.h.b16 %v100
    %v200 = vunpack.c.l.b16 %v101
    %v201 = vunpack.c.h.b16 %v101
    %v202 = vunpack.c.l.b16 %v102
    %v203 = vunpack.c.h.b16 %v102
    %v204 = vunpack.c.l.b16 %v103
    %v205 = vunpack.c.h.b16 %v103
    %v206 = vunpack.c.l.b16 %v104
    %v207 = vunpack.c.h.b16 %v104
    %v208 = vunpack.c.l.b16 %v105
    %v209 = vunpack.c.h.b16 %v105
    %v210 = vunpack.c.l.b16 %v106
    %v211 = vunpack.c.h.b16 %v106
    %v212 = vunpack.c.l.b16 %v107
    %v213 = vunpack.c.h.b16 %v107
    %v214 = vunpack.c.l.b16 %v108
    %v215 = vunpack.c.h.b16 %v108
    %v216 = vunpack.c.l.b16 %v109
    %v217 = vunpack.c.h.b16 %v109
    %v218 = vunpack.c.l.b16 %v110
    %v219 = vunpack.c.h.b16 %v110
    %v220 = vunpack.c.l.b16 %v111
    %v221 = vunpack.c.h.b16 %v111
    %v222 = vunpack.c.l.b16 %v112
    %v223 = vunpack.c.h.b16 %v112
    %v224 = vunpack.c.l.b16 %v113
    %v225 = vunpack.c.h.b16 %v113
    %v226 = vunpack.c.l.b16 %v114
    %v227 = vunpack.c.h.b16 %v114
    %v228 = vunpack.c.l.b16 %v115
    %v229 = vunpack.c.h.b16 %v115
    %v230 = vunpack.c.l.b16 %v116
    %v231 = vunpack.c.h.b16 %v116
    %v232 = vunpack.c.l.b16 %v117
    %v233 = vunpack.c.h.b16 %v117
    %v234 = vunpack.c.l.b16 %v118
    %v235 = vunpack.c.h.b16 %v118
    %v236 = vunpack.c.l.b16 %v119
    %v237 = vunpack.c.h.b16 %v119
    %v238 = vunpack.c.l.b16 %v120
    %v239 = vunpack.c.h.b16 %v120
    %v240 = vunpack.c.l.b16 %v121
    %v241 = vunpack.c.h.b16 %v121
    %v242 = vunpack.c.l.b16 %v122
    %v243 = vunpack.c.h.b16 %v122
    %v244 = vunpack.c.l.b16 %v123
    %v245 = vunpack.c.h.b16 %v123
    %v246 = vunpack.c.l.b16 %v124
    %v247 = vunpack.c.h.b16 %v124
    %v248 = vunpack.c.l.b16 %v125
    %v249 = vunpack.c.h.b16 %v125
    %v250 = vunpack.c.l.b16 %v126
    %v251 = vunpack.c.h.b16 %v126
    %v252 = vunpack.c.l.b16 %v127
    %v253 = vunpack.c.h.b16 %v127
    %v254 = vunpack.c.l.b16 %v128
    %v255 = vunpack.c.h.b16 %v128
    %v256 = vunpack.c.l.b16 %v129
    %v257 = vunpack.c.h.b16 %v129
    %v258 = vunpack.c.l.b16 %v130
    %v259 = vunpack.c.h.b16 %v130
    %v260 = vunpack.c.l.b16 %v131
    %v261 = vunpack.c.h.b16 %v131
    %v262 = vpack.c.b16 %v202, %v198
    %v263 = vpack.c.b16 %v203, %v199
    %v264 = vpack.c.b16 %v204, %v200
    %v265 = vpack.c.b16 %v205, %v201
    %v266 = vpack.c.b16 %v210, %v206
    %v267 = vpack.c.b16 %v211, %v207
    %v268 = vpack.c.b16 %v212, %v208
    %v269 = vpack.c.b16 %v213, %v209
    %v270 = vpack.c.b16 %v218, %v214
    %v271 = vpack.c.b16 %v219, %v215
    %v272 = vpack.c.b16 %v220, %v216
    %v273 = vpack.c.b16 %v221, %v217
    %v274 = vpack.c.b16 %v226, %v222
    %v275 = vpack.c.b16 %v227, %v223
    %v276 = vpack.c.b16 %v228, %v224
    %v277 = vpack.c.b16 %v229, %v225
    %v278 = vpack.c.b16 %v234, %v230
    %v279 = vpack.c.b16 %v235, %v231
    %v280 = vpack.c.b16 %v236, %v232
    %v281 = vpack.c.b16 %v237, %v233
    %v282 = vpack.c.b16 %v242, %v238
    %v283 = vpack.c.b16 %v243, %v239
    %v284 = vpack.c.b16 %v244, %v240
    %v285 = vpack.c.b16 %v245, %v241
    %v286 = vpack.c.b16 %v250, %v246
    %v287 = vpack.c.b16 %v251, %v247
    %v288 = vpack.c.b16 %v252, %v248
    %v289 = vpack.c.b16 %v253, %v249
    %v290 = vpack.c.b16 %v258, %v254
    %v291 = vpack.c.b16 %v259, %v255
    %v292 = vpack.c.b16 %v260, %v256
    %v293 = vpack.c.b16 %v261, %v257
    %326 = vmatpush.bf16.msra.mxu0 %v290
    %327 = vmatpush.bf16.msra.mxu0 %v286
    %328 = vmatpush.bf16.msra.mxu0 %v282
    %329 = vmatpush.bf16.msra.mxu0 %v278
    %330 = vmatpush.bf16.msra.mxu0 %v274
    %331 = vmatpush.bf16.msra.mxu0 %v270
    %332 = vmatpush.bf16.msra.mxu0 %v266
    %333 = vmatpush.bf16.msra.mxu0 %v262
    %334 = vmatmul.bf16.gmra.mxu0 %v158
    %v335 = vpop.f32.mrf.mxu0
    %v336 = vadd.f32 %v134, %v335
    %v337 = vpop.f32.mrf.mxu0
    %v338 = vadd.f32 %v134, %v337
    %339 = vmatmul.bf16.gmra.mxu0 %v159
    %v340 = vpop.f32.mrf.mxu0
    %v341 = vadd.f32 %v134, %v340
    %v342 = vpop.f32.mrf.mxu0
    %v343 = vadd.f32 %v134, %v342
    %344 = vmatmul.bf16.gmra.mxu0 %v160
    %v345 = vpop.f32.mrf.mxu0
    %v346 = vadd.f32 %v134, %v345
    %v347 = vpop.f32.mrf.mxu0
    %v348 = vadd.f32 %v134, %v347
    %349 = vmatmul.bf16.gmra.mxu0 %v161
    %v350 = vpop.f32.mrf.mxu0
    %v351 = vadd.f32 %v134, %v350
    %v352 = vpop.f32.mrf.mxu0
    %v353 = vadd.f32 %v134, %v352
    %354 = vdwg.mxu0
    %355 = vmatpush.bf16.msra.mxu0 %v291
    %356 = vmatpush.bf16.msra.mxu0 %v287
    %357 = vmatpush.bf16.msra.mxu0 %v283
    %358 = vmatpush.bf16.msra.mxu0 %v279
    %359 = vmatpush.bf16.msra.mxu0 %v275
    %360 = vmatpush.bf16.msra.mxu0 %v271
    %361 = vmatpush.bf16.msra.mxu0 %v267
    %362 = vmatpush.bf16.msra.mxu0 %v263
    %363 = vmatmul.bf16.gmra.mxu0 %v158
    %v364 = vpop.f32.mrf.mxu0
    %v365 = vadd.f32 %v135, %v364
    %v366 = vpop.f32.mrf.mxu0
    %v367 = vadd.f32 %v135, %v366
    %368 = vmatmul.bf16.gmra.mxu0 %v159
    %v369 = vpop.f32.mrf.mxu0
    %v370 = vadd.f32 %v135, %v369
    %v371 = vpop.f32.mrf.mxu0
    %v372 = vadd.f32 %v135, %v371
    %373 = vmatmul.bf16.gmra.mxu0 %v160
    %v374 = vpop.f32.mrf.mxu0
    %v375 = vadd.f32 %v135, %v374
    %v376 = vpop.f32.mrf.mxu0
    %v377 = vadd.f32 %v135, %v376
    %378 = vmatmul.bf16.gmra.mxu0 %v161
    %v379 = vpop.f32.mrf.mxu0
    %v380 = vadd.f32 %v135, %v379
    %v381 = vpop.f32.mrf.mxu0
    %v382 = vadd.f32 %v135, %v381
    %383 = vdwg.mxu0
    %384 = vmatpush.bf16.msra.mxu0 %v292
    %385 = vmatpush.bf16.msra.mxu0 %v288
    %386 = vmatpush.bf16.msra.mxu0 %v284
    %387 = vmatpush.bf16.msra.mxu0 %v280
    %388 = vmatpush.bf16.msra.mxu0 %v276
    %389 = vmatpush.bf16.msra.mxu0 %v272
    %390 = vmatpush.bf16.msra.mxu0 %v268
    %391 = vmatpush.bf16.msra.mxu0 %v264
    %392 = vmatmul.bf16.gmra.mxu0 %v158
    %v393 = vpop.f32.mrf.mxu0
    %v394 = vadd.f32 %v136, %v393
    %v395 = vpop.f32.mrf.mxu0
    %v396 = vadd.f32 %v136, %v395
    %397 = vmatmul.bf16.gmra.mxu0 %v159
    %v398 = vpop.f32.mrf.mxu0
    %v399 = vadd.f32 %v136, %v398
    %v400 = vpop.f32.mrf.mxu0
    %v401 = vadd.f32 %v136, %v400
    %402 = vmatmul.bf16.gmra.mxu0 %v160
    %v403 = vpop.f32.mrf.mxu0
    %v404 = vadd.f32 %v136, %v403
    %v405 = vpop.f32.mrf.mxu0
    %v406 = vadd.f32 %v136, %v405
    %407 = vmatmul.bf16.gmra.mxu0 %v161
    %v408 = vpop.f32.mrf.mxu0
    %v409 = vadd.f32 %v136, %v408
    %v410 = vpop.f32.mrf.mxu0
    %v411 = vadd.f32 %v136, %v410
    %412 = vdwg.mxu0
    %413 = vmatpush.bf16.msra.mxu0 %v293
    %414 = vmatpush.bf16.msra.mxu0 %v289
    %415 = vmatpush.bf16.msra.mxu0 %v285
    %416 = vmatpush.bf16.msra.mxu0 %v281
    %417 = vmatpush.bf16.msra.mxu0 %v277
    %418 = vmatpush.bf16.msra.mxu0 %v273
    %419 = vmatpush.bf16.msra.mxu0 %v269
    %420 = vmatpush.bf16.msra.mxu0 %v265
    %421 = vmatmul.bf16.gmra.mxu0 %v158
    %v422 = vpop.f32.mrf.mxu0
    %v423 = vadd.f32 %v137, %v422
    %v424 = vpop.f32.mrf.mxu0
    %v425 = vadd.f32 %v137, %v424
    %426 = vmatmul.bf16.gmra.mxu0 %v159
    %v427 = vpop.f32.mrf.mxu0
    %v428 = vadd.f32 %v137, %v427
    %v429 = vpop.f32.mrf.mxu0
    %v430 = vadd.f32 %v137, %v429
    %431 = vmatmul.bf16.gmra.mxu0 %v160
    %v432 = vpop.f32.mrf.mxu0
    %v433 = vadd.f32 %v137, %v432
    %v434 = vpop.f32.mrf.mxu0
    %v435 = vadd.f32 %v137, %v434
    %436 = vmatmul.bf16.gmra.mxu0 %v161
    %v437 = vpop.f32.mrf.mxu0
    %v438 = vadd.f32 %v137, %v437
    %v439 = vpop.f32.mrf.mxu0
    %v440 = vadd.f32 %v137, %v439
    %441 = vdwg.mxu0
    %442 = vst [vmem:[#allocation2] sm:$0xff] %v336
    %443 = vst [vmem:[#allocation2 + $0x8] sm:$0xff] %v365
    %444 = vst [vmem:[#allocation2 + $0x10] sm:$0xff] %v394
    %445 = vst [vmem:[#allocation2 + $0x18] sm:$0xff] %v423
    %446 = vst [vmem:[#allocation2 + $0x20] sm:$0xff] %v338
    %447 = vst [vmem:[#allocation2 + $0x28] sm:$0xff] %v367
    %448 = vst [vmem:[#allocation2 + $0x30] sm:$0xff] %v396
    %449 = vst [vmem:[#allocation2 + $0x38] sm:$0xff] %v425
    %450 = vst [vmem:[#allocation2 + $0x40] sm:$0xff] %v341
    %451 = vst [vmem:[#allocation2 + $0x48] sm:$0xff] %v370
    %452 = vst [vmem:[#allocation2 + $0x50] sm:$0xff] %v399
    %453 = vst [vmem:[#allocation2 + $0x58] sm:$0xff] %v428
    %454 = vst [vmem:[#allocation2 + $0x60] sm:$0xff] %v343
    %455 = vst [vmem:[#allocation2 + $0x68] sm:$0xff] %v372
    %456 = vst [vmem:[#allocation2 + $0x70] sm:$0xff] %v401
    %457 = vst [vmem:[#allocation2 + $0x78] sm:$0xff] %v430
    %458 = vst [vmem:[#allocation2 + $0x80] sm:$0xff] %v346
    %459 = vst [vmem:[#allocation2 + $0x88] sm:$0xff] %v375
    %460 = vst [vmem:[#allocation2 + $0x90] sm:$0xff] %v404
    %461 = vst [vmem:[#allocation2 + $0x98] sm:$0xff] %v433
    %462 = vst [vmem:[#allocation2 + $0xa0] sm:$0xff] %v348
    %463 = vst [vmem:[#allocation2 + $0xa8] sm:$0xff] %v377
    %464 = vst [vmem:[#allocation2 + $0xb0] sm:$0xff] %v406
    %465 = vst [vmem:[#allocation2 + $0xb8] sm:$0xff] %v435
    %466 = vst [vmem:[#allocation2 + $0xc0] sm:$0xff] %v351
    %467 = vst [vmem:[#allocation2 + $0xc8] sm:$0xff] %v380
    %468 = vst [vmem:[#allocation2 + $0xd0] sm:$0xff] %v409
    %469 = vst [vmem:[#allocation2 + $0xd8] sm:$0xff] %v438
    %470 = vst [vmem:[#allocation2 + $0xe0] sm:$0xff] %v353
    %471 = vst [vmem:[#allocation2 + $0xe8] sm:$0xff] %v382
    %472 = vst [vmem:[#allocation2 + $0xf0] sm:$0xff] %v411
    %473 = vst [vmem:[#allocation2 + $0xf8] sm:$0xff] %v440
    %v474 = vld [vmem:[#allocation2] sm:$0xff]
    %v475 = vld [vmem:[#allocation2 + $0x10] sm:$0xff]
    %v476 = vld [vmem:[#allocation2 + $0x18] sm:$0xff]
    %v477 = vxor.u32 %v474, 2147483648
    %v478 = vxor.u32 %v475, 2147483648
    %v479 = vmul.f32 %v477, 1.442695
    %v480 = vpow.pop %v479
    %v481 = vmul.f32 %v478, 1.442695
    %v482 = vpow.pop %v481
    %v483 = vadd.f32 %v480, 1.0
    %v484 = vadd.f32 %v482, 1.0
    %v485 = vrcp.pop %v483
    %v486 = vmul.f32 %v483, %v485
    %v487 = vsub.f32 1.0, %v486
    %v488 = vmul.f32 %v485, %v487
    %v489 = vadd.f32 %v485, %v488
    %vm490 = vweird.f32 %v483
    %vm491 = vweird.f32 %v485
    %vm492 = vmor %vm490, %vm491
    %v493 = vsel %vm492, %v485, %v489
    %v494 = vand.u32 2147483647, %v483
    %vm495 = vcmp.eq.f32.partialorder %v494, 8.507059e+37
    %v496 = vand.u32 %v483, 2147483648
    %v497 = vor.u32 1.1754944e-38, %v496
    %v498 = vsel %vm495, %v497, %v493
    %v499 = vmul.f32 1.0, %v498
    %v500 = vrcp.pop %v484
    %v501 = vmul.f32 %v484, %v500
    %v502 = vsub.f32 1.0, %v501
    %v503 = vmul.f32 %v500, %v502
    %v504 = vadd.f32 %v500, %v503
    %vm505 = vweird.f32 %v484
    %vm506 = vweird.f32 %v500
    %vm507 = vmor %vm505, %vm506
    %v508 = vsel %vm507, %v500, %v504
    %v509 = vand.u32 2147483647, %v484
    %vm510 = vcmp.eq.f32.partialorder %v509, 8.507059e+37
    %v511 = vand.u32 %v484, 2147483648
    %v512 = vor.u32 1.1754944e-38, %v511
    %v513 = vsel %vm510, %v512, %v508
    %v514 = vmul.f32 1.0, %v513
    %v515 = vtanh.pop %v476
    %v516 = vmul.f32 %v499, %v515
    %v517 = vtanh.pop %v516
    %v518 = vmul.f32 %v514, %v517
    %519 = vst [vmem:[%s8] sm:$0xff] %v518
    %v520 = vld [vmem:[#allocation2 + $0x20] sm:$0xff]
    %v521 = vld [vmem:[#allocation2 + $0x28] sm:$0xff]
    %v522 = vld [vmem:[#allocation2 + $0x30] sm:$0xff]
    %v523 = vld [vmem:[#allocation2 + $0x38] sm:$0xff]
    %v524 = vpack.c.bf16 %v518, %v518
    %v525 = vld [vmem:[#allocation6] sm:$0xff]
    %v526 = vld [vmem:[#allocation6 + $0x8] sm:$0xff]
    %v527 = vld [vmem:[#allocation6 + $0x10] sm:$0xff]
    %v528 = vld [vmem:[#allocation6 + $0x18] sm:$0xff]
    %v529 = vld [vmem:[#allocation6 + $0x20] sm:$0xff]
    %v530 = vld [vmem:[#allocation6 + $0x28] sm:$0xff]
    %v531 = vld [vmem:[#allocation6 + $0x30] sm:$0xff]
    %v532 = vld [vmem:[#allocation6 + $0x38] sm:$0xff]
    %v533 = vld [vmem:[#allocation6 + $0x40] sm:$0xff]
    %v534 = vld [vmem:[#allocation6 + $0x48] sm:$0xff]
    %v535 = vld [vmem:[#allocation6 + $0x50] sm:$0xff]
    %v536 = vld [vmem:[#allocation6 + $0x58] sm:$0xff]
    %v537 = vld [vmem:[#allocation6 + $0x60] sm:$0xff]
    %v538 = vld [vmem:[#allocation6 + $0x68] sm:$0xff]
    %v539 = vld [vmem:[#allocation6 + $0x70] sm:$0xff]
    %v540 = vld [vmem:[#allocation6 + $0x78] sm:$0xff]
    %v541 = vld [vmem:[#allocation6 + $0x80] sm:$0xff]
    %v542 = vld [vmem:[#allocation6 + $0x88] sm:$0xff]
    %v543 = vld [vmem:[#allocation6 + $0x90] sm:$0xff]
    %v544 = vld [vmem:[#allocation6 + $0x98] sm:$0xff]
    %v545 = vld [vmem:[#allocation6 + $0xa0] sm:$0xff]
    %v546 = vld [vmem:[#allocation6 + $0xa8] sm:$0xff]
    %v547 = vld [vmem:[#allocation6 + $0xb0] sm:$0xff]
    %v548 = vld [vmem:[#allocation6 + $0xb8] sm:$0xff]
    %v549 = vld [vmem:[#allocation6 + $0xc0] sm:$0xff]
    %v550 = vld [vmem:[#allocation6 + $0xc8] sm:$0xff]
    %v551 = vld [vmem:[#allocation6 + $0xd0] sm:$0xff]
    %v552 = vld [vmem:[#allocation6 + $0xd8] sm:$0xff]
    %v553 = vld [vmem:[#allocation6 + $0xe0] sm:$0xff]
    %v554 = vld [vmem:[#allocation6 + $0xe8] sm:$0xff]
    %v555 = vld [vmem:[#allocation6 + $0xf0] sm:$0xff]
    %v556 = vld [vmem:[#allocation6 + $0xf8] sm:$0xff]
    %v589 = vunpack.c.l.b16 %v525
    %v590 = vunpack.c.h.b16 %v525
    %v591 = vunpack.c.l.b16 %v526
    %v592 = vunpack.c.h.b16 %v526
    %v593 = vunpack.c.l.b16 %v527
    %v594 = vunpack.c.h.b16 %v527
    %v595 = vunpack.c.l.b16 %v528
    %v596 = vunpack.c.h.b16 %v528
    %v597 = vunpack.c.l.b16 %v529
    %v598 = vunpack.c.h.b16 %v529
    %v599 = vunpack.c.l.b16 %v530
    %v600 = vunpack.c.h.b16 %v530
    %v601 = vunpack.c.l.b16 %v531
    %v602 = vunpack.c.h.b16 %v531
    %v603 = vunpack.c.l.b16 %v532
    %v604 = vunpack.c.h.b16 %v532
    %v605 = vunpack.c.l.b16 %v533
    %v606 = vunpack.c.h.b16 %v533
    %v607 = vunpack.c.l.b16 %v534
    %v608 = vunpack.c.h.b16 %v534
    %v609 = vunpack.c.l.b16 %v535
    %v610 = vunpack.c.h.b16 %v535
    %v611 = vunpack.c.l.b16 %v536
    %v612 = vunpack.c.h.b16 %v536
    %v613 = vunpack.c.l.b16 %v537
    %v614 = vunpack.c.h.b16 %v537
    %v615 = vunpack.c.l.b16 %v538
    %v616 = vunpack.c.h.b16 %v538
    %v617 = vunpack.c.l.b16 %v539
    %v618 = vunpack.c.h.b16 %v539
    %v619 = vunpack.c.l.b16 %v540
    %v620 = vunpack.c.h.b16 %v540
    %v621 = vunpack.c.l.b16 %v541
    %v622 = vunpack.c.h.b16 %v541
    %v623 = vunpack.c.l.b16 %v542
    %v624 = vunpack.c.h.b16 %v542
    %v625 = vunpack.c.l.b16 %v543
    %v626 = vunpack.c.h.b16 %v543
    %v627 = vunpack.c.l.b16 %v544
    %v628 = vunpack.c.h.b16 %v544
    %v629 = vunpack.c.l.b16 %v545
    %v630 = vunpack.c.h.b16 %v545
    %v631 = vunpack.c.l.b16 %v546
    %v632 = vunpack.c.h.b16 %v546
    %v633 = vunpack.c.l.b16 %v547
    %v634 = vunpack.c.h.b16 %v547
    %v635 = vunpack.c.l.b16 %v548
    %v636 = vunpack.c.h.b16 %v548
    %v637 = vunpack.c.l.b16 %v549
    %v638 = vunpack.c.h.b16 %v549
    %v639 = vunpack.c.l.b16 %v550
    %v640 = vunpack.c.h.b16 %v550
    %v641 = vunpack.c.l.b16 %v551
    %v642 = vunpack.c.h.b16 %v551
    %v643 = vunpack.c.l.b16 %v552
    %v644 = vunpack.c.h.b16 %v552
    %v645 = vunpack.c.l.b16 %v553
    %v646 = vunpack.c.h.b16 %v553
    %v647 = vunpack.c.l.b16 %v554
    %v648 = vunpack.c.h.b16 %v554
    %v649 = vunpack.c.l.b16 %v555
    %v650 = vunpack.c.h.b16 %v555
    %v651 = vunpack.c.l.b16 %v556
    %v652 = vunpack.c.h.b16 %v556
    %v653 = vpack.c.b16 %v593, %v589
    %v654 = vpack.c.b16 %v594, %v590
    %v655 = vpack.c.b16 %v595, %v591
    %v656 = vpack.c.b16 %v596, %v592
    %v657 = vpack.c.b16 %v601, %v597
    %v658 = vpack.c.b16 %v602, %v598
    %v659 = vpack.c.b16 %v603, %v599
    %v660 = vpack.c.b16 %v604, %v600
    %v661 = vpack.c.b16 %v609, %v605
    %v662 = vpack.c.b16 %v610, %v606
    %v663 = vpack.c.b16 %v611, %v607
    %v664 = vpack.c.b16 %v612, %v608
    %v665 = vpack.c.b16 %v617, %v613
    %v666 = vpack.c.b16 %v618, %v614
    %v667 = vpack.c.b16 %v619, %v615
    %v668 = vpack.c.b16 %v620, %v616
    %v669 = vpack.c.b16 %v625, %v621
    %v670 = vpack.c.b16 %v626, %v622
    %v671 = vpack.c.b16 %v627, %v623
    %v672 = vpack.c.b16 %v628, %v624
    %v673 = vpack.c.b16 %v633, %v629
    %v674 = vpack.c.b16 %v634, %v630
    %v675 = vpack.c.b16 %v635, %v631
    %v676 = vpack.c.b16 %v636, %v632
    %v677 = vpack.c.b16 %v641, %v637
    %v678 = vpack.c.b16 %v642, %v638
    %v679 = vpack.c.b16 %v643, %v639
    %v680 = vpack.c.b16 %v644, %v640
    %v681 = vpack.c.b16 %v649, %v645
    %v682 = vpack.c.b16 %v650, %v646
    %v683 = vpack.c.b16 %v651, %v647
    %v684 = vpack.c.b16 %v652, %v648
    %717 = vmatpush.bf16.msra.mxu0 %v681
    %718 = vmatpush.bf16.msra.mxu0 %v677
    %719 = vmatpush.bf16.msra.mxu0 %v673
    %720 = vmatpush.bf16.msra.mxu0 %v669
    %721 = vmatpush.bf16.msra.mxu0 %v665
    %722 = vmatpush.bf16.msra.mxu0 %v661
    %723 = vmatpush.bf16.msra.mxu0 %v657
    %724 = vmatpush.bf16.msra.mxu0 %v653
    %725 = vmatmul.bf16.gmra.mxu0 %v524
    %v726 = vpop.f32.mrf.mxu0
    %v727 = vadd.f32 0.0, %v726
    %v728 = vpop.f32.mrf.mxu0
    %729 = vdwg.mxu0
    %730 = vmatpush.bf16.msra.mxu0 %v682
    %731 = vmatpush.bf16.msra.mxu0 %v678
    %732 = vmatpush.bf16.msra.mxu0 %v674
    %733 = vmatpush.bf16.msra.mxu0 %v670
    %734 = vmatpush.bf16.msra.mxu0 %v666
    %735 = vmatpush.bf16.msra.mxu0 %v662
    %736 = vmatpush.bf16.msra.mxu0 %v658
    %737 = vmatpush.bf16.msra.mxu0 %v654
    %738 = vmatmul.bf16.gmra.mxu0 %v524
    %v739 = vpop.f32.mrf.mxu0
    %v740 = vadd.f32 0.0, %v739
    %v741 = vpop.f32.mrf.mxu0
    %742 = vdwg.mxu0
    %743 = vmatpush.bf16.msra.mxu0 %v683
    %744 = vmatpush.bf16.msra.mxu0 %v679
    %745 = vmatpush.bf16.msra.mxu0 %v675
    %746 = vmatpush.bf16.msra.mxu0 %v671
    %747 = vmatpush.bf16.msra.mxu0 %v667
    %748 = vmatpush.bf16.msra.mxu0 %v663
    %749 = vmatpush.bf16.msra.mxu0 %v659
    %750 = vmatpush.bf16.msra.mxu0 %v655
    %751 = vmatmul.bf16.gmra.mxu0 %v524
    %v752 = vpop.f32.mrf.mxu0
    %v753 = vadd.f32 0.0, %v752
    %v754 = vpop.f32.mrf.mxu0
    %755 = vdwg.mxu0
    %756 = vmatpush.bf16.msra.mxu0 %v684
    %757 = vmatpush.bf16.msra.mxu0 %v680
    %758 = vmatpush.bf16.msra.mxu0 %v676
    %759 = vmatpush.bf16.msra.mxu0 %v672
    %760 = vmatpush.bf16.msra.mxu0 %v668
    %761 = vmatpush.bf16.msra.mxu0 %v664
    %762 = vmatpush.bf16.msra.mxu0 %v660
    %763 = vmatpush.bf16.msra.mxu0 %v656
    %764 = vmatmul.bf16.gmra.mxu0 %v524
    %v765 = vpop.f32.mrf.mxu0
    %v766 = vadd.f32 0.0, %v765
    %v767 = vpop.f32.mrf.mxu0
    %768 = vdwg.mxu0
    %v769 = vadd.f32 %v520, %v727
    %v770 = vadd.f32 %v521, %v740
    %v771 = vadd.f32 %v522, %v753
    %v772 = vadd.f32 %v523, %v766
    %v773 = vxor.u32 %v769, 2147483648
    %v774 = vxor.u32 %v770, 2147483648
    %v775 = vxor.u32 %v771, 2147483648
    %v776 = vmul.f32 %v773, 1.442695
    %v777 = vpow.pop %v776
    %v778 = vmul.f32 %v774, 1.442695
    %v779 = vpow.pop %v778
    %v780 = vmul.f32 %v775, 1.442695
    %v781 = vpow.pop %v780
    %v782 = vadd.f32 %v777, 1.0
    %v783 = vadd.f32 %v779, 1.0
    %v784 = vadd.f32 %v781, 1.0
    %v785 = vrcp.pop %v782
    %v786 = vmul.f32 %v782, %v785
    %v787 = vsub.f32 1.0, %v786
    %v788 = vmul.f32 %v785, %v787
    %v789 = vadd.f32 %v785, %v788
    %vm790 = vweird.f32 %v782
    %vm791 = vweird.f32 %v785
    %vm792 = vmor %vm790, %vm791
    %v793 = vsel %vm792, %v785, %v789
    %v794 = vand.u32 2147483647, %v782
    %vm795 = vcmp.eq.f32.partialorder %v794, 8.507059e+37
    %v796 = vand.u32 %v782, 2147483648
    %v797 = vor.u32 1.1754944e-38, %v796
    %v798 = vsel %vm795, %v797, %v793
    %v799 = vmul.f32 1.0, %v798
    %v800 = vrcp.pop %v783
    %v801 = vmul.f32 %v783, %v800
    %v802 = vsub.f32 1.0, %v801
    %v803 = vmul.f32 %v800, %v802
    %v804 = vadd.f32 %v800, %v803
    %vm805 = vweird.f32 %v783
    %vm806 = vweird.f32 %v800
    %vm807 = vmor %vm805, %vm806
    %v808 = vsel %vm807, %v800, %v804
    %v809 = vand.u32 2147483647, %v783
    %vm810 = vcmp.eq.f32.partialorder %v809, 8.507059e+37
    %v811 = vand.u32 %v783, 2147483648
    %v812 = vor.u32 1.1754944e-38, %v811
    %v813 = vsel %vm810, %v812, %v808
    %v814 = vmul.f32 1.0, %v813
    %v815 = vrcp.pop %v784
    %v816 = vmul.f32 %v784, %v815
    %v817 = vsub.f32 1.0, %v816
    %v818 = vmul.f32 %v815, %v817
    %v819 = vadd.f32 %v815, %v818
    %vm820 = vweird.f32 %v784
    %vm821 = vweird.f32 %v815
    %vm822 = vmor %vm820, %vm821
    %v823 = vsel %vm822, %v815, %v819
    %v824 = vand.u32 2147483647, %v784
    %vm825 = vcmp.eq.f32.partialorder %v824, 8.507059e+37
    %v826 = vand.u32 %v784, 2147483648
    %v827 = vor.u32 1.1754944e-38, %v826
    %v828 = vsel %vm825, %v827, %v823
    %v829 = vmul.f32 1.0, %v828
    %v830 = vtanh.pop %v772
    %v831 = vmul.f32 %v814, %v516
    %v832 = vmul.f32 %v799, %v830
    %v833 = vadd.f32 %v831, %v832
    %v834 = vtanh.pop %v833
    %v835 = vmul.f32 %v829, %v834
    %s836 = scalar_lea.vmem %s8, 8
    %837 = vst [vmem:[%s836] sm:$0xff] %v835
    %v838 = vld [vmem:[#allocation2 + $0x40] sm:$0xff]
    %v839 = vld [vmem:[#allocation2 + $0x48] sm:$0xff]
    %v840 = vld [vmem:[#allocation2 + $0x50] sm:$0xff]
    %v841 = vld [vmem:[#allocation2 + $0x58] sm:$0xff]
    %v842 = vpack.c.bf16 %v835, %v835
    %v843 = vld [vmem:[#allocation6] sm:$0xff]
    %v844 = vld [vmem:[#allocation6 + $0x8] sm:$0xff]
    %v845 = vld [vmem:[#allocation6 + $0x10] sm:$0xff]
    %v846 = vld [vmem:[#allocation6 + $0x18] sm:$0xff]
    %v847 = vld [vmem:[#allocation6 + $0x20] sm:$0xff]
    %v848 = vld [vmem:[#allocation6 + $0x28] sm:$0xff]
    %v849 = vld [vmem:[#allocation6 + $0x30] sm:$0xff]
    %v850 = vld [vmem:[#allocation6 + $0x38] sm:$0xff]
    %v851 = vld [vmem:[#allocation6 + $0x40] sm:$0xff]
    %v852 = vld [vmem:[#allocation6 + $0x48] sm:$0xff]
    %v853 = vld [vmem:[#allocation6 + $0x50] sm:$0xff]
    %v854 = vld [vmem:[#allocation6 + $0x58] sm:$0xff]
    %v855 = vld [vmem:[#allocation6 + $0x60] sm:$0xff]
    %v856 = vld [vmem:[#allocation6 + $0x68] sm:$0xff]
    %v857 = vld [vmem:[#allocation6 + $0x70] sm:$0xff]
    %v858 = vld [vmem:[#allocation6 + $0x78] sm:$0xff]
    %v859 = vld [vmem:[#allocation6 + $0x80] sm:$0xff]
    %v860 = vld [vmem:[#allocation6 + $0x88] sm:$0xff]
    %v861 = vld [vmem:[#allocation6 + $0x90] sm:$0xff]
    %v862 = vld [vmem:[#allocation6 + $0x98] sm:$0xff]
    %v863 = vld [vmem:[#allocation6 + $0xa0] sm:$0xff]
    %v864 = vld [vmem:[#allocation6 + $0xa8] sm:$0xff]
    %v865 = vld [vmem:[#allocation6 + $0xb0] sm:$0xff]
    %v866 = vld [vmem:[#allocation6 + $0xb8] sm:$0xff]
    %v867 = vld [vmem:[#allocation6 + $0xc0] sm:$0xff]
    %v868 = vld [vmem:[#allocation6 + $0xc8] sm:$0xff]
    %v869 = vld [vmem:[#allocation6 + $0xd0] sm:$0xff]
    %v870 = vld [vmem:[#allocation6 + $0xd8] sm:$0xff]
    %v871 = vld [vmem:[#allocation6 + $0xe0] sm:$0xff]
    %v872 = vld [vmem:[#allocation6 + $0xe8] sm:$0xff]
    %v873 = vld [vmem:[#allocation6 + $0xf0] sm:$0xff]
    %v874 = vld [vmem:[#allocation6 + $0xf8] sm:$0xff]
    %v907 = vunpack.c.l.b16 %v843
    %v908 = vunpack.c.h.b16 %v843
    %v909 = vunpack.c.l.b16 %v844
    %v910 = vunpack.c.h.b16 %v844
    %v911 = vunpack.c.l.b16 %v845
    %v912 = vunpack.c.h.b16 %v845
    %v913 = vunpack.c.l.b16 %v846
    %v914 = vunpack.c.h.b16 %v846
    %v915 = vunpack.c.l.b16 %v847
    %v916 = vunpack.c.h.b16 %v847
    %v917 = vunpack.c.l.b16 %v848
    %v918 = vunpack.c.h.b16 %v848
    %v919 = vunpack.c.l.b16 %v849
    %v920 = vunpack.c.h.b16 %v849
    %v921 = vunpack.c.l.b16 %v850
    %v922 = vunpack.c.h.b16 %v850
    %v923 = vunpack.c.l.b16 %v851
    %v924 = vunpack.c.h.b16 %v851
    %v925 = vunpack.c.l.b16 %v852
    %v926 = vunpack.c.h.b16 %v852
    %v927 = vunpack.c.l.b16 %v853
    %v928 = vunpack.c.h.b16 %v853
    %v929 = vunpack.c.l.b16 %v854
    %v930 = vunpack.c.h.b16 %v854
    %v931 = vunpack.c.l.b16 %v855
    %v932 = vunpack.c.h.b16 %v855
    %v933 = vunpack.c.l.b16 %v856
    %v934 = vunpack.c.h.b16 %v856
    %v935 = vunpack.c.l.b16 %v857
    %v936 = vunpack.c.h.b16 %v857
    %v937 = vunpack.c.l.b16 %v858
    %v938 = vunpack.c.h.b16 %v858
    %v939 = vunpack.c.l.b16 %v859
    %v940 = vunpack.c.h.b16 %v859
    %v941 = vunpack.c.l.b16 %v860
    %v942 = vunpack.c.h.b16 %v860
    %v943 = vunpack.c.l.b16 %v861
    %v944 = vunpack.c.h.b16 %v861
    %v945 = vunpack.c.l.b16 %v862
    %v946 = vunpack.c.h.b16 %v862
    %v947 = vunpack.c.l.b16 %v863
    %v948 = vunpack.c.h.b16 %v863
    %v949 = vunpack.c.l.b16 %v864
    %v950 = vunpack.c.h.b16 %v864
    %v951 = vunpack.c.l.b16 %v865
    %v952 = vunpack.c.h.b16 %v865
    %v953 = vunpack.c.l.b16 %v866
    %v954 = vunpack.c.h.b16 %v866
    %v955 = vunpack.c.l.b16 %v867
    %v956 = vunpack.c.h.b16 %v867
    %v957 = vunpack.c.l.b16 %v868
    %v958 = vunpack.c.h.b16 %v868
    %v959 = vunpack.c.l.b16 %v869
    %v960 = vunpack.c.h.b16 %v869
    %v961 = vunpack.c.l.b16 %v870
    %v962 = vunpack.c.h.b16 %v870
    %v963 = vunpack.c.l.b16 %v871
    %v964 = vunpack.c.h.b16 %v871
    %v965 = vunpack.c.l.b16 %v872
    %v966 = vunpack.c.h.b16 %v872
    %v967 = vunpack.c.l.b16 %v873
    %v968 = vunpack.c.h.b16 %v873
    %v969 = vunpack.c.l.b16 %v874
    %v970 = vunpack.c.h.b16 %v874
    %v971 = vpack.c.b16 %v911, %v907
    %v972 = vpack.c.b16 %v912, %v908
    %v973 = vpack.c.b16 %v913, %v909
    %v974 = vpack.c.b16 %v914, %v910
    %v975 = vpack.c.b16 %v919, %v915
    %v976 = vpack.c.b16 %v920, %v916
    %v977 = vpack.c.b16 %v921, %v917
    %v978 = vpack.c.b16 %v922, %v918
    %v979 = vpack.c.b16 %v927, %v923
    %v980 = vpack.c.b16 %v928, %v924
    %v981 = vpack.c.b16 %v929, %v925
    %v982 = vpack.c.b16 %v930, %v926
    %v983 = vpack.c.b16 %v935, %v931
    %v984 = vpack.c.b16 %v936, %v932
    %v985 = vpack.c.b16 %v937, %v933
    %v986 = vpack.c.b16 %v938, %v934
    %v987 = vpack.c.b16 %v943, %v939
    %v988 = vpack.c.b16 %v944, %v940
    %v989 = vpack.c.b16 %v945, %v941
    %v990 = vpack.c.b16 %v946, %v942
    %v991 = vpack.c.b16 %v951, %v947
    %v992 = vpack.c.b16 %v952, %v948
    %v993 = vpack.c.b16 %v953, %v949
    %v994 = vpack.c.b16 %v954, %v950
    %v995 = vpack.c.b16 %v959, %v955
    %v996 = vpack.c.b16 %v960, %v956
    %v997 = vpack.c.b16 %v961, %v957
    %v998 = vpack.c.b16 %v962, %v958
    %v999 = vpack.c.b16 %v967, %v963
    %v1000 = vpack.c.b16 %v968, %v964
    %v1001 = vpack.c.b16 %v969, %v965
    %v1002 = vpack.c.b16 %v970, %v966
    %1035 = vmatpush.bf16.msra.mxu0 %v999
    %1036 = vmatpush.bf16.msra.mxu0 %v995
    %1037 = vmatpush.bf16.msra.mxu0 %v991
    %1038 = vmatpush.bf16.msra.mxu0 %v987
    %1039 = vmatpush.bf16.msra.mxu0 %v983
    %1040 = vmatpush.bf16.msra.mxu0 %v979
    %1041 = vmatpush.bf16.msra.mxu0 %v975
    %1042 = vmatpush.bf16.msra.mxu0 %v971
    %1043 = vmatmul.bf16.gmra.mxu0 %v842
    %v1044 = vpop.f32.mrf.mxu0
    %v1045 = vadd.f32 0.0, %v1044
    %v1046 = vpop.f32.mrf.mxu0
    %1047 = vdwg.mxu0
    %1048 = vmatpush.bf16.msra.mxu0 %v1000
    %1049 = vmatpush.bf16.msra.mxu0 %v996
    %1050 = vmatpush.bf16.msra.mxu0 %v992
    %1051 = vmatpush.bf16.msra.mxu0 %v988
    %1052 = vmatpush.bf16.msra.mxu0 %v984
    %1053 = vmatpush.bf16.msra.mxu0 %v980
    %1054 = vmatpush.bf16.msra.mxu0 %v976
    %1055 = vmatpush.bf16.msra.mxu0 %v972
    %1056 = vmatmul.bf16.gmra.mxu0 %v842
    %v1057 = vpop.f32.mrf.mxu0
    %v1058 = vadd.f32 0.0, %v1057
    %v1059 = vpop.f32.mrf.mxu0
    %1060 = vdwg.mxu0
    %1061 = vmatpush.bf16.msra.mxu0 %v1001
    %1062 = vmatpush.bf16.msra.mxu0 %v997
    %1063 = vmatpush.bf16.msra.mxu0 %v993
    %1064 = vmatpush.bf16.msra.mxu0 %v989
    %1065 = vmatpush.bf16.msra.mxu0 %v985
    %1066 = vmatpush.bf16.msra.mxu0 %v981
    %1067 = vmatpush.bf16.msra.mxu0 %v977
    %1068 = vmatpush.bf16.msra.mxu0 %v973
    %1069 = vmatmul.bf16.gmra.mxu0 %v842
    %v1070 = vpop.f32.mrf.mxu0
    %v1071 = vadd.f32 0.0, %v1070
    %v1072 = vpop.f32.mrf.mxu0
    %1073 = vdwg.mxu0
    %1074 = vmatpush.bf16.msra.mxu0 %v1002
    %1075 = vmatpush.bf16.msra.mxu0 %v998
    %1076 = vmatpush.bf16.msra.mxu0 %v994
    %1077 = vmatpush.bf16.msra.mxu0 %v990
    %1078 = vmatpush.bf16.msra.mxu0 %v986
    %1079 = vmatpush.bf16.msra.mxu0 %v982
    %1080 = vmatpush.bf16.msra.mxu0 %v978
    %1081 = vmatpush.bf16.msra.mxu0 %v974
    %1082 = vmatmul.bf16.gmra.mxu0 %v842
    %v1083 = vpop.f32.mrf.mxu0
    %v1084 = vadd.f32 0.0, %v1083
    %v1085 = vpop.f32.mrf.mxu0
    %1086 = vdwg.mxu0
    %v1087 = vadd.f32 %v838, %v1045
    %v1088 = vadd.f32 %v839, %v1058
    %v1089 = vadd.f32 %v840, %v1071
    %v1090 = vadd.f32 %v841, %v1084
    %v1091 = vxor.u32 %v1087, 2147483648
    %v1092 = vxor.u32 %v1088, 2147483648
    %v1093 = vxor.u32 %v1089, 2147483648
    %v1094 = vmul.f32 %v1091, 1.442695
    %v1095 = vpow.pop %v1094
    %v1096 = vmul.f32 %v1092, 1.442695
    %v1097 = vpow.pop %v1096
    %v1098 = vmul.f32 %v1093, 1.442695
    %v1099 = vpow.pop %v1098
    %v1100 = vadd.f32 %v1095, 1.0
    %v1101 = vadd.f32 %v1097, 1.0
    %v1102 = vadd.f32 %v1099, 1.0
    %v1103 = vrcp.pop %v1100
    %v1104 = vmul.f32 %v1100, %v1103
    %v1105 = vsub.f32 1.0, %v1104
    %v1106 = vmul.f32 %v1103, %v1105
    %v1107 = vadd.f32 %v1103, %v1106
    %vm1108 = vweird.f32 %v1100
    %vm1109 = vweird.f32 %v1103
    %vm1110 = vmor %vm1108, %vm1109
    %v1111 = vsel %vm1110, %v1103, %v1107
    %v1112 = vand.u32 2147483647, %v1100
    %vm1113 = vcmp.eq.f32.partialorder %v1112, 8.507059e+37
    %v1114 = vand.u32 %v1100, 2147483648
    %v1115 = vor.u32 1.1754944e-38, %v1114
    %v1116 = vsel %vm1113, %v1115, %v1111
    %v1117 = vmul.f32 1.0, %v1116
    %v1118 = vrcp.pop %v1101
    %v1119 = vmul.f32 %v1101, %v1118
    %v1120 = vsub.f32 1.0, %v1119
    %v1121 = vmul.f32 %v1118, %v1120
    %v1122 = vadd.f32 %v1118, %v1121
    %vm1123 = vweird.f32 %v1101
    %vm1124 = vweird.f32 %v1118
    %vm1125 = vmor %vm1123, %vm1124
    %v1126 = vsel %vm1125, %v1118, %v1122
    %v1127 = vand.u32 2147483647, %v1101
    %vm1128 = vcmp.eq.f32.partialorder %v1127, 8.507059e+37
    %v1129 = vand.u32 %v1101, 2147483648
    %v1130 = vor.u32 1.1754944e-38, %v1129
    %v1131 = vsel %vm1128, %v1130, %v1126
    %v1132 = vmul.f32 1.0, %v1131
    %v1133 = vrcp.pop %v1102
    %v1134 = vmul.f32 %v1102, %v1133
    %v1135 = vsub.f32 1.0, %v1134
    %v1136 = vmul.f32 %v1133, %v1135
    %v1137 = vadd.f32 %v1133, %v1136
    %vm1138 = vweird.f32 %v1102
    %vm1139 = vweird.f32 %v1133
    %vm1140 = vmor %vm1138, %vm1139
    %v1141 = vsel %vm1140, %v1133, %v1137
    %v1142 = vand.u32 2147483647, %v1102
    %vm1143 = vcmp.eq.f32.partialorder %v1142, 8.507059e+37
    %v1144 = vand.u32 %v1102, 2147483648
    %v1145 = vor.u32 1.1754944e-38, %v1144
    %v1146 = vsel %vm1143, %v1145, %v1141
    %v1147 = vmul.f32 1.0, %v1146
    %v1148 = vtanh.pop %v1090
    %v1149 = vmul.f32 %v1132, %v833
    %v1150 = vmul.f32 %v1117, %v1148
    %v1151 = vadd.f32 %v1149, %v1150
    %v1152 = vtanh.pop %v1151
    %v1153 = vmul.f32 %v1147, %v1152
    %s1154 = scalar_lea.vmem %s8, 16
    %1155 = vst [vmem:[%s1154] sm:$0xff] %v1153
    %v1156 = vld [vmem:[#allocation2 + $0x60] sm:$0xff]
    %v1157 = vld [vmem:[#allocation2 + $0x68] sm:$0xff]
    %v1158 = vld [vmem:[#allocation2 + $0x70] sm:$0xff]
    %v1159 = vld [vmem:[#allocation2 + $0x78] sm:$0xff]
    %v1160 = vpack.c.bf16 %v1153, %v1153
    %v1161 = vld [vmem:[#allocation6] sm:$0xff]
    %v1162 = vld [vmem:[#allocation6 + $0x8] sm:$0xff]
    %v1163 = vld [vmem:[#allocation6 + $0x10] sm:$0xff]
    %v1164 = vld [vmem:[#allocation6 + $0x18] sm:$0xff]
    %v1165 = vld [vmem:[#allocation6 + $0x20] sm:$0xff]
    %v1166 = vld [vmem:[#allocation6 + $0x28] sm:$0xff]
    %v1167 = vld [vmem:[#allocation6 + $0x30] sm:$0xff]
    %v1168 = vld [vmem:[#allocation6 + $0x38] sm:$0xff]
    %v1169 = vld [vmem:[#allocation6 + $0x40] sm:$0xff]
    %v1170 = vld [vmem:[#allocation6 + $0x48] sm:$0xff]
    %v1171 = vld [vmem:[#allocation6 + $0x50] sm:$0xff]
    %v1172 = vld [vmem:[#allocation6 + $0x58] sm:$0xff]
    %v1173 = vld [vmem:[#allocation6 + $0x60] sm:$0xff]
    %v1174 = vld [vmem:[#allocation6 + $0x68] sm:$0xff]
    %v1175 = vld [vmem:[#allocation6 + $0x70] sm:$0xff]
    %v1176 = vld [vmem:[#allocation6 + $0x78] sm:$0xff]
    %v1177 = vld [vmem:[#allocation6 + $0x80] sm:$0xff]
    %v1178 = vld [vmem:[#allocation6 + $0x88] sm:$0xff]
    %v1179 = vld [vmem:[#allocation6 + $0x90] sm:$0xff]
    %v1180 = vld [vmem:[#allocation6 + $0x98] sm:$0xff]
    %v1181 = vld [vmem:[#allocation6 + $0xa0] sm:$0xff]
    %v1182 = vld [vmem:[#allocation6 + $0xa8] sm:$0xff]
    %v1183 = vld [vmem:[#allocation6 + $0xb0] sm:$0xff]
    %v1184 = vld [vmem:[#allocation6 + $0xb8] sm:$0xff]
    %v1185 = vld [vmem:[#allocation6 + $0xc0] sm:$0xff]
    %v1186 = vld [vmem:[#allocation6 + $0xc8] sm:$0xff]
    %v1187 = vld [vmem:[#allocation6 + $0xd0] sm:$0xff]
    %v1188 = vld [vmem:[#allocation6 + $0xd8] sm:$0xff]
    %v1189 = vld [vmem:[#allocation6 + $0xe0] sm:$0xff]
    %v1190 = vld [vmem:[#allocation6 + $0xe8] sm:$0xff]
    %v1191 = vld [vmem:[#allocation6 + $0xf0] sm:$0xff]
    %v1192 = vld [vmem:[#allocation6 + $0xf8] sm:$0xff]
    %v1225 = vunpack.c.l.b16 %v1161
    %v1226 = vunpack.c.h.b16 %v1161
    %v1227 = vunpack.c.l.b16 %v1162
    %v1228 = vunpack.c.h.b16 %v1162
    %v1229 = vunpack.c.l.b16 %v1163
    %v1230 = vunpack.c.h.b16 %v1163
    %v1231 = vunpack.c.l.b16 %v1164
    %v1232 = vunpack.c.h.b16 %v1164
    %v1233 = vunpack.c.l.b16 %v1165
    %v1234 = vunpack.c.h.b16 %v1165
    %v1235 = vunpack.c.l.b16 %v1166
    %v1236 = vunpack.c.h.b16 %v1166
    %v1237 = vunpack.c.l.b16 %v1167
    %v1238 = vunpack.c.h.b16 %v1167
    %v1239 = vunpack.c.l.b16 %v1168
    %v1240 = vunpack.c.h.b16 %v1168
    %v1241 = vunpack.c.l.b16 %v1169
    %v1242 = vunpack.c.h.b16 %v1169
    %v1243 = vunpack.c.l.b16 %v1170
    %v1244 = vunpack.c.h.b16 %v1170
    %v1245 = vunpack.c.l.b16 %v1171
    %v1246 = vunpack.c.h.b16 %v1171
    %v1247 = vunpack.c.l.b16 %v1172
    %v1248 = vunpack.c.h.b16 %v1172
    %v1249 = vunpack.c.l.b16 %v1173
    %v1250 = vunpack.c.h.b16 %v1173
    %v1251 = vunpack.c.l.b16 %v1174
    %v1252 = vunpack.c.h.b16 %v1174
    %v1253 = vunpack.c.l.b16 %v1175
    %v1254 = vunpack.c.h.b16 %v1175
    %v1255 = vunpack.c.l.b16 %v1176
    %v1256 = vunpack.c.h.b16 %v1176
    %v1257 = vunpack.c.l.b16 %v1177
    %v1258 = vunpack.c.h.b16 %v1177
    %v1259 = vunpack.c.l.b16 %v1178
    %v1260 = vunpack.c.h.b16 %v1178
    %v1261 = vunpack.c.l.b16 %v1179
    %v1262 = vunpack.c.h.b16 %v1179
    %v1263 = vunpack.c.l.b16 %v1180
    %v1264 = vunpack.c.h.b16 %v1180
    %v1265 = vunpack.c.l.b16 %v1181
    %v1266 = vunpack.c.h.b16 %v1181
    %v1267 = vunpack.c.l.b16 %v1182
    %v1268 = vunpack.c.h.b16 %v1182
    %v1269 = vunpack.c.l.b16 %v1183
    %v1270 = vunpack.c.h.b16 %v1183
    %v1271 = vunpack.c.l.b16 %v1184
    %v1272 = vunpack.c.h.b16 %v1184
    %v1273 = vunpack.c.l.b16 %v1185
    %v1274 = vunpack.c.h.b16 %v1185
    %v1275 = vunpack.c.l.b16 %v1186
    %v1276 = vunpack.c.h.b16 %v1186
    %v1277 = vunpack.c.l.b16 %v1187
    %v1278 = vunpack.c.h.b16 %v1187
    %v1279 = vunpack.c.l.b16 %v1188
    %v1280 = vunpack.c.h.b16 %v1188
    %v1281 = vunpack.c.l.b16 %v1189
    %v1282 = vunpack.c.h.b16 %v1189
    %v1283 = vunpack.c.l.b16 %v1190
    %v1284 = vunpack.c.h.b16 %v1190
    %v1285 = vunpack.c.l.b16 %v1191
    %v1286 = vunpack.c.h.b16 %v1191
    %v1287 = vunpack.c.l.b16 %v1192
    %v1288 = vunpack.c.h.b16 %v1192
    %v1289 = vpack.c.b16 %v1229, %v1225
    %v1290 = vpack.c.b16 %v1230, %v1226
    %v1291 = vpack.c.b16 %v1231, %v1227
    %v1292 = vpack.c.b16 %v1232, %v1228
    %v1293 = vpack.c.b16 %v1237, %v1233
    %v1294 = vpack.c.b16 %v1238, %v1234
    %v1295 = vpack.c.b16 %v1239, %v1235
    %v1296 = vpack.c.b16 %v1240, %v1236
    %v1297 = vpack.c.b16 %v1245, %v1241
    %v1298 = vpack.c.b16 %v1246, %v1242
    %v1299 = vpack.c.b16 %v1247, %v1243
    %v1300 = vpack.c.b16 %v1248, %v1244
    %v1301 = vpack.c.b16 %v1253, %v1249
    %v1302 = vpack.c.b16 %v1254, %v1250
    %v1303 = vpack.c.b16 %v1255, %v1251
    %v1304 = vpack.c.b16 %v1256, %v1252
    %v1305 = vpack.c.b16 %v1261, %v1257
    %v1306 = vpack.c.b16 %v1262, %v1258
    %v1307 = vpack.c.b16 %v1263, %v1259
    %v1308 = vpack.c.b16 %v1264, %v1260
    %v1309 = vpack.c.b16 %v1269, %v1265
    %v1310 = vpack.c.b16 %v1270, %v1266
    %v1311 = vpack.c.b16 %v1271, %v1267
    %v1312 = vpack.c.b16 %v1272, %v1268
    %v1313 = vpack.c.b16 %v1277, %v1273
    %v1314 = vpack.c.b16 %v1278, %v1274
    %v1315 = vpack.c.b16 %v1279, %v1275
    %v1316 = vpack.c.b16 %v1280, %v1276
    %v1317 = vpack.c.b16 %v1285, %v1281
    %v1318 = vpack.c.b16 %v1286, %v1282
    %v1319 = vpack.c.b16 %v1287, %v1283
    %v1320 = vpack.c.b16 %v1288, %v1284
    %1353 = vmatpush.bf16.msra.mxu0 %v1317
    %1354 = vmatpush.bf16.msra.mxu0 %v1313
    %1355 = vmatpush.bf16.msra.mxu0 %v1309
    %1356 = vmatpush.bf16.msra.mxu0 %v1305
    %1357 = vmatpush.bf16.msra.mxu0 %v1301
    %1358 = vmatpush.bf16.msra.mxu0 %v1297
    %1359 = vmatpush.bf16.msra.mxu0 %v1293
    %1360 = vmatpush.bf16.msra.mxu0 %v1289
    %1361 = vmatmul.bf16.gmra.mxu0 %v1160
    %v1362 = vpop.f32.mrf.mxu0
    %v1363 = vadd.f32 0.0, %v1362
    %v1364 = vpop.f32.mrf.mxu0
    %1365 = vdwg.mxu0
    %1366 = vmatpush.bf16.msra.mxu0 %v1318
    %1367 = vmatpush.bf16.msra.mxu0 %v1314
    %1368 = vmatpush.bf16.msra.mxu0 %v1310
    %1369 = vmatpush.bf16.msra.mxu0 %v1306
    %1370 = vmatpush.bf16.msra.mxu0 %v1302
    %1371 = vmatpush.bf16.msra.mxu0 %v1298
    %1372 = vmatpush.bf16.msra.mxu0 %v1294
    %1373 = vmatpush.bf16.msra.mxu0 %v1290
    %1374 = vmatmul.bf16.gmra.mxu0 %v1160
    %v1375 = vpop.f32.mrf.mxu0
    %v1376 = vadd.f32 0.0, %v1375
    %v1377 = vpop.f32.mrf.mxu0
    %1378 = vdwg.mxu0
    %1379 = vmatpush.bf16.msra.mxu0 %v1319
    %1380 = vmatpush.bf16.msra.mxu0 %v1315
    %1381 = vmatpush.bf16.msra.mxu0 %v1311
    %1382 = vmatpush.bf16.msra.mxu0 %v1307
    %1383 = vmatpush.bf16.msra.mxu0 %v1303
    %1384 = vmatpush.bf16.msra.mxu0 %v1299
    %1385 = vmatpush.bf16.msra.mxu0 %v1295
    %1386 = vmatpush.bf16.msra.mxu0 %v1291
    %1387 = vmatmul.bf16.gmra.mxu0 %v1160
    %v1388 = vpop.f32.mrf.mxu0
    %v1389 = vadd.f32 0.0, %v1388
    %v1390 = vpop.f32.mrf.mxu0
    %1391 = vdwg.mxu0
    %1392 = vmatpush.bf16.msra.mxu0 %v1320
    %1393 = vmatpush.bf16.msra.mxu0 %v1316
    %1394 = vmatpush.bf16.msra.mxu0 %v1312
    %1395 = vmatpush.bf16.msra.mxu0 %v1308
    %1396 = vmatpush.bf16.msra.mxu0 %v1304
    %1397 = vmatpush.bf16.msra.mxu0 %v1300
    %1398 = vmatpush.bf16.msra.mxu0 %v1296
    %1399 = vmatpush.bf16.msra.mxu0 %v1292
    %1400 = vmatmul.bf16.gmra.mxu0 %v1160
    %v1401 = vpop.f32.mrf.mxu0
    %v1402 = vadd.f32 0.0, %v1401
    %v1403 = vpop.f32.mrf.mxu0
    %1404 = vdwg.mxu0
    %v1405 = vadd.f32 %v1156, %v1363
    %v1406 = vadd.f32 %v1157, %v1376
    %v1407 = vadd.f32 %v1158, %v1389
    %v1408 = vadd.f32 %v1159, %v1402
    %v1409 = vxor.u32 %v1405, 2147483648
    %v1410 = vxor.u32 %v1406, 2147483648
    %v1411 = vxor.u32 %v1407, 2147483648
    %v1412 = vmul.f32 %v1409, 1.442695
    %v1413 = vpow.pop %v1412
    %v1414 = vmul.f32 %v1410, 1.442695
    %v1415 = vpow.pop %v1414
    %v1416 = vmul.f32 %v1411, 1.442695
    %v1417 = vpow.pop %v1416
    %v1418 = vadd.f32 %v1413, 1.0
    %v1419 = vadd.f32 %v1415, 1.0
    %v1420 = vadd.f32 %v1417, 1.0
    %v1421 = vrcp.pop %v1418
    %v1422 = vmul.f32 %v1418, %v1421
    %v1423 = vsub.f32 1.0, %v1422
    %v1424 = vmul.f32 %v1421, %v1423
    %v1425 = vadd.f32 %v1421, %v1424
    %vm1426 = vweird.f32 %v1418
    %vm1427 = vweird.f32 %v1421
    %vm1428 = vmor %vm1426, %vm1427
    %v1429 = vsel %vm1428, %v1421, %v1425
    %v1430 = vand.u32 2147483647, %v1418
    %vm1431 = vcmp.eq.f32.partialorder %v1430, 8.507059e+37
    %v1432 = vand.u32 %v1418, 2147483648
    %v1433 = vor.u32 1.1754944e-38, %v1432
    %v1434 = vsel %vm1431, %v1433, %v1429
    %v1435 = vmul.f32 1.0, %v1434
    %v1436 = vrcp.pop %v1419
    %v1437 = vmul.f32 %v1419, %v1436
    %v1438 = vsub.f32 1.0, %v1437
    %v1439 = vmul.f32 %v1436, %v1438
    %v1440 = vadd.f32 %v1436, %v1439
    %vm1441 = vweird.f32 %v1419
    %vm1442 = vweird.f32 %v1436
    %vm1443 = vmor %vm1441, %vm1442
    %v1444 = vsel %vm1443, %v1436, %v1440
    %v1445 = vand.u32 2147483647, %v1419
    %vm1446 = vcmp.eq.f32.partialorder %v1445, 8.507059e+37
    %v1447 = vand.u32 %v1419, 2147483648
    %v1448 = vor.u32 1.1754944e-38, %v1447
    %v1449 = vsel %vm1446, %v1448, %v1444
    %v1450 = vmul.f32 1.0, %v1449
    %v1451 = vrcp.pop %v1420
    %v1452 = vmul.f32 %v1420, %v1451
    %v1453 = vsub.f32 1.0, %v1452
    %v1454 = vmul.f32 %v1451, %v1453
    %v1455 = vadd.f32 %v1451, %v1454
    %vm1456 = vweird.f32 %v1420
    %vm1457 = vweird.f32 %v1451
    %vm1458 = vmor %vm1456, %vm1457
    %v1459 = vsel %vm1458, %v1451, %v1455
    %v1460 = vand.u32 2147483647, %v1420
    %vm1461 = vcmp.eq.f32.partialorder %v1460, 8.507059e+37
    %v1462 = vand.u32 %v1420, 2147483648
    %v1463 = vor.u32 1.1754944e-38, %v1462
    %v1464 = vsel %vm1461, %v1463, %v1459
    %v1465 = vmul.f32 1.0, %v1464
    %v1466 = vtanh.pop %v1408
    %v1467 = vmul.f32 %v1450, %v1151
    %v1468 = vmul.f32 %v1435, %v1466
    %v1469 = vadd.f32 %v1467, %v1468
    %v1470 = vtanh.pop %v1469
    %v1471 = vmul.f32 %v1465, %v1470
    %s1472 = scalar_lea.vmem %s8, 24
    %1473 = vst [vmem:[%s1472] sm:$0xff] %v1471
    %v1474 = vld [vmem:[#allocation2 + $0x80] sm:$0xff]
    %v1475 = vld [vmem:[#allocation2 + $0x88] sm:$0xff]
    %v1476 = vld [vmem:[#allocation2 + $0x90] sm:$0xff]
    %v1477 = vld [vmem:[#allocation2 + $0x98] sm:$0xff]
    %v1478 = vpack.c.bf16 %v1471, %v1471
    %v1479 = vld [vmem:[#allocation6] sm:$0xff]
    %v1480 = vld [vmem:[#allocation6 + $0x8] sm:$0xff]
    %v1481 = vld [vmem:[#allocation6 + $0x10] sm:$0xff]
    %v1482 = vld [vmem:[#allocation6 + $0x18] sm:$0xff]
    %v1483 = vld [vmem:[#allocation6 + $0x20] sm:$0xff]
    %v1484 = vld [vmem:[#allocation6 + $0x28] sm:$0xff]
    %v1485 = vld [vmem:[#allocation6 + $0x30] sm:$0xff]
    %v1486 = vld [vmem:[#allocation6 + $0x38] sm:$0xff]
    %v1487 = vld [vmem:[#allocation6 + $0x40] sm:$0xff]
    %v1488 = vld [vmem:[#allocation6 + $0x48] sm:$0xff]
    %v1489 = vld [vmem:[#allocation6 + $0x50] sm:$0xff]
    %v1490 = vld [vmem:[#allocation6 + $0x58] sm:$0xff]
    %v1491 = vld [vmem:[#allocation6 + $0x60] sm:$0xff]
    %v1492 = vld [vmem:[#allocation6 + $0x68] sm:$0xff]
    %v1493 = vld [vmem:[#allocation6 + $0x70] sm:$0xff]
    %v1494 = vld [vmem:[#allocation6 + $0x78] sm:$0xff]
    %v1495 = vld [vmem:[#allocation6 + $0x80] sm:$0xff]
    %v1496 = vld [vmem:[#allocation6 + $0x88] sm:$0xff]
    %v1497 = vld [vmem:[#allocation6 + $0x90] sm:$0xff]
    %v1498 = vld [vmem:[#allocation6 + $0x98] sm:$0xff]
    %v1499 = vld [vmem:[#allocation6 + $0xa0] sm:$0xff]
    %v1500 = vld [vmem:[#allocation6 + $0xa8] sm:$0xff]
    %v1501 = vld [vmem:[#allocation6 + $0xb0] sm:$0xff]
    %v1502 = vld [vmem:[#allocation6 + $0xb8] sm:$0xff]
    %v1503 = vld [vmem:[#allocation6 + $0xc0] sm:$0xff]
    %v1504 = vld [vmem:[#allocation6 + $0xc8] sm:$0xff]
    %v1505 = vld [vmem:[#allocation6 + $0xd0] sm:$0xff]
    %v1506 = vld [vmem:[#allocation6 + $0xd8] sm:$0xff]
    %v1507 = vld [vmem:[#allocation6 + $0xe0] sm:$0xff]
    %v1508 = vld [vmem:[#allocation6 + $0xe8] sm:$0xff]
    %v1509 = vld [vmem:[#allocation6 + $0xf0] sm:$0xff]
    %v1510 = vld [vmem:[#allocation6 + $0xf8] sm:$0xff]
    %v1543 = vunpack.c.l.b16 %v1479
    %v1544 = vunpack.c.h.b16 %v1479
    %v1545 = vunpack.c.l.b16 %v1480
    %v1546 = vunpack.c.h.b16 %v1480
    %v1547 = vunpack.c.l.b16 %v1481
    %v1548 = vunpack.c.h.b16 %v1481
    %v1549 = vunpack.c.l.b16 %v1482
    %v1550 = vunpack.c.h.b16 %v1482
    %v1551 = vunpack.c.l.b16 %v1483
    %v1552 = vunpack.c.h.b16 %v1483
    %v1553 = vunpack.c.l.b16 %v1484
    %v1554 = vunpack.c.h.b16 %v1484
    %v1555 = vunpack.c.l.b16 %v1485
    %v1556 = vunpack.c.h.b16 %v1485
    %v1557 = vunpack.c.l.b16 %v1486
    %v1558 = vunpack.c.h.b16 %v1486
    %v1559 = vunpack.c.l.b16 %v1487
    %v1560 = vunpack.c.h.b16 %v1487
    %v1561 = vunpack.c.l.b16 %v1488
    %v1562 = vunpack.c.h.b16 %v1488
    %v1563 = vunpack.c.l.b16 %v1489
    %v1564 = vunpack.c.h.b16 %v1489
    %v1565 = vunpack.c.l.b16 %v1490
    %v1566 = vunpack.c.h.b16 %v1490
    %v1567 = vunpack.c.l.b16 %v1491
    %v1568 = vunpack.c.h.b16 %v1491
    %v1569 = vunpack.c.l.b16 %v1492
    %v1570 = vunpack.c.h.b16 %v1492
    %v1571 = vunpack.c.l.b16 %v1493
    %v1572 = vunpack.c.h.b16 %v1493
    %v1573 = vunpack.c.l.b16 %v1494
    %v1574 = vunpack.c.h.b16 %v1494
    %v1575 = vunpack.c.l.b16 %v1495
    %v1576 = vunpack.c.h.b16 %v1495
    %v1577 = vunpack.c.l.b16 %v1496
    %v1578 = vunpack.c.h.b16 %v1496
    %v1579 = vunpack.c.l.b16 %v1497
    %v1580 = vunpack.c.h.b16 %v1497
    %v1581 = vunpack.c.l.b16 %v1498
    %v1582 = vunpack.c.h.b16 %v1498
    %v1583 = vunpack.c.l.b16 %v1499
    %v1584 = vunpack.c.h.b16 %v1499
    %v1585 = vunpack.c.l.b16 %v1500
    %v1586 = vunpack.c.h.b16 %v1500
    %v1587 = vunpack.c.l.b16 %v1501
    %v1588 = vunpack.c.h.b16 %v1501
    %v1589 = vunpack.c.l.b16 %v1502
    %v1590 = vunpack.c.h.b16 %v1502
    %v1591 = vunpack.c.l.b16 %v1503
    %v1592 = vunpack.c.h.b16 %v1503
    %v1593 = vunpack.c.l.b16 %v1504
    %v1594 = vunpack.c.h.b16 %v1504
    %v1595 = vunpack.c.l.b16 %v1505
    %v1596 = vunpack.c.h.b16 %v1505
    %v1597 = vunpack.c.l.b16 %v1506
    %v1598 = vunpack.c.h.b16 %v1506
    %v1599 = vunpack.c.l.b16 %v1507
    %v1600 = vunpack.c.h.b16 %v1507
    %v1601 = vunpack.c.l.b16 %v1508
    %v1602 = vunpack.c.h.b16 %v1508
    %v1603 = vunpack.c.l.b16 %v1509
    %v1604 = vunpack.c.h.b16 %v1509
    %v1605 = vunpack.c.l.b16 %v1510
    %v1606 = vunpack.c.h.b16 %v1510
    %v1607 = vpack.c.b16 %v1547, %v1543
    %v1608 = vpack.c.b16 %v1548, %v1544
    %v1609 = vpack.c.b16 %v1549, %v1545
    %v1610 = vpack.c.b16 %v1550, %v1546
    %v1611 = vpack.c.b16 %v1555, %v1551
    %v1612 = vpack.c.b16 %v1556, %v1552
    %v1613 = vpack.c.b16 %v1557, %v1553
    %v1614 = vpack.c.b16 %v1558, %v1554
    %v1615 = vpack.c.b16 %v1563, %v1559
    %v1616 = vpack.c.b16 %v1564, %v1560
    %v1617 = vpack.c.b16 %v1565, %v1561
    %v1618 = vpack.c.b16 %v1566, %v1562
    %v1619 = vpack.c.b16 %v1571, %v1567
    %v1620 = vpack.c.b16 %v1572, %v1568
    %v1621 = vpack.c.b16 %v1573, %v1569
    %v1622 = vpack.c.b16 %v1574, %v1570
    %v1623 = vpack.c.b16 %v1579, %v1575
    %v1624 = vpack.c.b16 %v1580, %v1576
    %v1625 = vpack.c.b16 %v1581, %v1577
    %v1626 = vpack.c.b16 %v1582, %v1578
    %v1627 = vpack.c.b16 %v1587, %v1583
    %v1628 = vpack.c.b16 %v1588, %v1584
    %v1629 = vpack.c.b16 %v1589, %v1585
    %v1630 = vpack.c.b16 %v1590, %v1586
    %v1631 = vpack.c.b16 %v1595, %v1591
    %v1632 = vpack.c.b16 %v1596, %v1592
    %v1633 = vpack.c.b16 %v1597, %v1593
    %v1634 = vpack.c.b16 %v1598, %v1594
    %v1635 = vpack.c.b16 %v1603, %v1599
    %v1636 = vpack.c.b16 %v1604, %v1600
    %v1637 = vpack.c.b16 %v1605, %v1601
    %v1638 = vpack.c.b16 %v1606, %v1602
    %1671 = vmatpush.bf16.msra.mxu0 %v1635
    %1672 = vmatpush.bf16.msra.mxu0 %v1631
    %1673 = vmatpush.bf16.msra.mxu0 %v1627
    %1674 = vmatpush.bf16.msra.mxu0 %v1623
    %1675 = vmatpush.bf16.msra.mxu0 %v1619
    %1676 = vmatpush.bf16.msra.mxu0 %v1615
    %1677 = vmatpush.bf16.msra.mxu0 %v1611
    %1678 = vmatpush.bf16.msra.mxu0 %v1607
    %1679 = vmatmul.bf16.gmra.mxu0 %v1478
    %v1680 = vpop.f32.mrf.mxu0
    %v1681 = vadd.f32 0.0, %v1680
    %v1682 = vpop.f32.mrf.mxu0
    %1683 = vdwg.mxu0
    %1684 = vmatpush.bf16.msra.mxu0 %v1636
    %1685 = vmatpush.bf16.msra.mxu0 %v1632
    %1686 = vmatpush.bf16.msra.mxu0 %v1628
    %1687 = vmatpush.bf16.msra.mxu0 %v1624
    %1688 = vmatpush.bf16.msra.mxu0 %v1620
    %1689 = vmatpush.bf16.msra.mxu0 %v1616
    %1690 = vmatpush.bf16.msra.mxu0 %v1612
    %1691 = vmatpush.bf16.msra.mxu0 %v1608
    %1692 = vmatmul.bf16.gmra.mxu0 %v1478
    %v1693 = vpop.f32.mrf.mxu0
    %v1694 = vadd.f32 0.0, %v1693
    %v1695 = vpop.f32.mrf.mxu0
    %1696 = vdwg.mxu0
    %1697 = vmatpush.bf16.msra.mxu0 %v1637
    %1698 = vmatpush.bf16.msra.mxu0 %v1633
    %1699 = vmatpush.bf16.msra.mxu0 %v1629
    %1700 = vmatpush.bf16.msra.mxu0 %v1625
    %1701 = vmatpush.bf16.msra.mxu0 %v1621
    %1702 = vmatpush.bf16.msra.mxu0 %v1617
    %1703 = vmatpush.bf16.msra.mxu0 %v1613
    %1704 = vmatpush.bf16.msra.mxu0 %v1609
    %1705 = vmatmul.bf16.gmra.mxu0 %v1478
    %v1706 = vpop.f32.mrf.mxu0
    %v1707 = vadd.f32 0.0, %v1706
    %v1708 = vpop.f32.mrf.mxu0
    %1709 = vdwg.mxu0
    %1710 = vmatpush.bf16.msra.mxu0 %v1638
    %1711 = vmatpush.bf16.msra.mxu0 %v1634
    %1712 = vmatpush.bf16.msra.mxu0 %v1630
    %1713 = vmatpush.bf16.msra.mxu0 %v1626
    %1714 = vmatpush.bf16.msra.mxu0 %v1622
    %1715 = vmatpush.bf16.msra.mxu0 %v1618
    %1716 = vmatpush.bf16.msra.mxu0 %v1614
    %1717 = vmatpush.bf16.msra.mxu0 %v1610
    %1718 = vmatmul.bf16.gmra.mxu0 %v1478
    %v1719 = vpop.f32.mrf.mxu0
    %v1720 = vadd.f32 0.0, %v1719
    %v1721 = vpop.f32.mrf.mxu0
    %1722 = vdwg.mxu0
    %v1723 = vadd.f32 %v1474, %v1681
    %v1724 = vadd.f32 %v1475, %v1694
    %v1725 = vadd.f32 %v1476, %v1707
    %v1726 = vadd.f32 %v1477, %v1720
    %v1727 = vxor.u32 %v1723, 2147483648
    %v1728 = vxor.u32 %v1724, 2147483648
    %v1729 = vxor.u32 %v1725, 2147483648
    %v1730 = vmul.f32 %v1727, 1.442695
    %v1731 = vpow.pop %v1730
    %v1732 = vmul.f32 %v1728, 1.442695
    %v1733 = vpow.pop %v1732
    %v1734 = vmul.f32 %v1729, 1.442695
    %v1735 = vpow.pop %v1734
    %v1736 = vadd.f32 %v1731, 1.0
    %v1737 = vadd.f32 %v1733, 1.0
    %v1738 = vadd.f32 %v1735, 1.0
    %v1739 = vrcp.pop %v1736
    %v1740 = vmul.f32 %v1736, %v1739
    %v1741 = vsub.f32 1.0, %v1740
    %v1742 = vmul.f32 %v1739, %v1741
    %v1743 = vadd.f32 %v1739, %v1742
    %vm1744 = vweird.f32 %v1736
    %vm1745 = vweird.f32 %v1739
    %vm1746 = vmor %vm1744, %vm1745
    %v1747 = vsel %vm1746, %v1739, %v1743
    %v1748 = vand.u32 2147483647, %v1736
    %vm1749 = vcmp.eq.f32.partialorder %v1748, 8.507059e+37
    %v1750 = vand.u32 %v1736, 2147483648
    %v1751 = vor.u32 1.1754944e-38, %v1750
    %v1752 = vsel %vm1749, %v1751, %v1747
    %v1753 = vmul.f32 1.0, %v1752
    %v1754 = vrcp.pop %v1737
    %v1755 = vmul.f32 %v1737, %v1754
    %v1756 = vsub.f32 1.0, %v1755
    %v1757 = vmul.f32 %v1754, %v1756
    %v1758 = vadd.f32 %v1754, %v1757
    %vm1759 = vweird.f32 %v1737
    %vm1760 = vweird.f32 %v1754
    %vm1761 = vmor %vm1759, %vm1760
    %v1762 = vsel %vm1761, %v1754, %v1758
    %v1763 = vand.u32 2147483647, %v1737
    %vm1764 = vcmp.eq.f32.partialorder %v1763, 8.507059e+37
    %v1765 = vand.u32 %v1737, 2147483648
    %v1766 = vor.u32 1.1754944e-38, %v1765
    %v1767 = vsel %vm1764, %v1766, %v1762
    %v1768 = vmul.f32 1.0, %v1767
    %v1769 = vrcp.pop %v1738
    %v1770 = vmul.f32 %v1738, %v1769
    %v1771 = vsub.f32 1.0, %v1770
    %v1772 = vmul.f32 %v1769, %v1771
    %v1773 = vadd.f32 %v1769, %v1772
    %vm1774 = vweird.f32 %v1738
    %vm1775 = vweird.f32 %v1769
    %vm1776 = vmor %vm1774, %vm1775
    %v1777 = vsel %vm1776, %v1769, %v1773
    %v1778 = vand.u32 2147483647, %v1738
    %vm1779 = vcmp.eq.f32.partialorder %v1778, 8.507059e+37
    %v1780 = vand.u32 %v1738, 2147483648
    %v1781 = vor.u32 1.1754944e-38, %v1780
    %v1782 = vsel %vm1779, %v1781, %v1777
    %v1783 = vmul.f32 1.0, %v1782
    %v1784 = vtanh.pop %v1726
    %v1785 = vmul.f32 %v1768, %v1469
    %v1786 = vmul.f32 %v1753, %v1784
    %v1787 = vadd.f32 %v1785, %v1786
    %v1788 = vtanh.pop %v1787
    %v1789 = vmul.f32 %v1783, %v1788
    %s1790 = scalar_lea.vmem %s8, 32
    %1791 = vst [vmem:[%s1790] sm:$0xff] %v1789
    %v1792 = vld [vmem:[#allocation2 + $0xa0] sm:$0xff]
    %v1793 = vld [vmem:[#allocation2 + $0xa8] sm:$0xff]
    %v1794 = vld [vmem:[#allocation2 + $0xb0] sm:$0xff]
    %v1795 = vld [vmem:[#allocation2 + $0xb8] sm:$0xff]
    %v1796 = vpack.c.bf16 %v1789, %v1789
    %v1797 = vld [vmem:[#allocation6] sm:$0xff]
    %v1798 = vld [vmem:[#allocation6 + $0x8] sm:$0xff]
    %v1799 = vld [vmem:[#allocation6 + $0x10] sm:$0xff]
    %v1800 = vld [vmem:[#allocation6 + $0x18] sm:$0xff]
    %v1801 = vld [vmem:[#allocation6 + $0x20] sm:$0xff]
    %v1802 = vld [vmem:[#allocation6 + $0x28] sm:$0xff]
    %v1803 = vld [vmem:[#allocation6 + $0x30] sm:$0xff]
    %v1804 = vld [vmem:[#allocation6 + $0x38] sm:$0xff]
    %v1805 = vld [vmem:[#allocation6 + $0x40] sm:$0xff]
    %v1806 = vld [vmem:[#allocation6 + $0x48] sm:$0xff]
    %v1807 = vld [vmem:[#allocation6 + $0x50] sm:$0xff]
    %v1808 = vld [vmem:[#allocation6 + $0x58] sm:$0xff]
    %v1809 = vld [vmem:[#allocation6 + $0x60] sm:$0xff]
    %v1810 = vld [vmem:[#allocation6 + $0x68] sm:$0xff]
    %v1811 = vld [vmem:[#allocation6 + $0x70] sm:$0xff]
    %v1812 = vld [vmem:[#allocation6 + $0x78] sm:$0xff]
    %v1813 = vld [vmem:[#allocation6 + $0x80] sm:$0xff]
    %v1814 = vld [vmem:[#allocation6 + $0x88] sm:$0xff]
    %v1815 = vld [vmem:[#allocation6 + $0x90] sm:$0xff]
    %v1816 = vld [vmem:[#allocation6 + $0x98] sm:$0xff]
    %v1817 = vld [vmem:[#allocation6 + $0xa0] sm:$0xff]
    %v1818 = vld [vmem:[#allocation6 + $0xa8] sm:$0xff]
    %v1819 = vld [vmem:[#allocation6 + $0xb0] sm:$0xff]
    %v1820 = vld [vmem:[#allocation6 + $0xb8] sm:$0xff]
    %v1821 = vld [vmem:[#allocation6 + $0xc0] sm:$0xff]
    %v1822 = vld [vmem:[#allocation6 + $0xc8] sm:$0xff]
    %v1823 = vld [vmem:[#allocation6 + $0xd0] sm:$0xff]
    %v1824 = vld [vmem:[#allocation6 + $0xd8] sm:$0xff]
    %v1825 = vld [vmem:[#allocation6 + $0xe0] sm:$0xff]
    %v1826 = vld [vmem:[#allocation6 + $0xe8] sm:$0xff]
    %v1827 = vld [vmem:[#allocation6 + $0xf0] sm:$0xff]
    %v1828 = vld [vmem:[#allocation6 + $0xf8] sm:$0xff]
    %v1861 = vunpack.c.l.b16 %v1797
    %v1862 = vunpack.c.h.b16 %v1797
    %v1863 = vunpack.c.l.b16 %v1798
    %v1864 = vunpack.c.h.b16 %v1798
    %v1865 = vunpack.c.l.b16 %v1799
    %v1866 = vunpack.c.h.b16 %v1799
    %v1867 = vunpack.c.l.b16 %v1800
    %v1868 = vunpack.c.h.b16 %v1800
    %v1869 = vunpack.c.l.b16 %v1801
    %v1870 = vunpack.c.h.b16 %v1801
    %v1871 = vunpack.c.l.b16 %v1802
    %v1872 = vunpack.c.h.b16 %v1802
    %v1873 = vunpack.c.l.b16 %v1803
    %v1874 = vunpack.c.h.b16 %v1803
    %v1875 = vunpack.c.l.b16 %v1804
    %v1876 = vunpack.c.h.b16 %v1804
    %v1877 = vunpack.c.l.b16 %v1805
    %v1878 = vunpack.c.h.b16 %v1805
    %v1879 = vunpack.c.l.b16 %v1806
    %v1880 = vunpack.c.h.b16 %v1806
    %v1881 = vunpack.c.l.b16 %v1807
    %v1882 = vunpack.c.h.b16 %v1807
    %v1883 = vunpack.c.l.b16 %v1808
    %v1884 = vunpack.c.h.b16 %v1808
    %v1885 = vunpack.c.l.b16 %v1809
    %v1886 = vunpack.c.h.b16 %v1809
    %v1887 = vunpack.c.l.b16 %v1810
    %v1888 = vunpack.c.h.b16 %v1810
    %v1889 = vunpack.c.l.b16 %v1811
    %v1890 = vunpack.c.h.b16 %v1811
    %v1891 = vunpack.c.l.b16 %v1812
    %v1892 = vunpack.c.h.b16 %v1812
    %v1893 = vunpack.c.l.b16 %v1813
    %v1894 = vunpack.c.h.b16 %v1813
    %v1895 = vunpack.c.l.b16 %v1814
    %v1896 = vunpack.c.h.b16 %v1814
    %v1897 = vunpack.c.l.b16 %v1815
    %v1898 = vunpack.c.h.b16 %v1815
    %v1899 = vunpack.c.l.b16 %v1816
    %v1900 = vunpack.c.h.b16 %v1816
    %v1901 = vunpack.c.l.b16 %v1817
    %v1902 = vunpack.c.h.b16 %v1817
    %v1903 = vunpack.c.l.b16 %v1818
    %v1904 = vunpack.c.h.b16 %v1818
    %v1905 = vunpack.c.l.b16 %v1819
    %v1906 = vunpack.c.h.b16 %v1819
    %v1907 = vunpack.c.l.b16 %v1820
    %v1908 = vunpack.c.h.b16 %v1820
    %v1909 = vunpack.c.l.b16 %v1821
    %v1910 = vunpack.c.h.b16 %v1821
    %v1911 = vunpack.c.l.b16 %v1822
    %v1912 = vunpack.c.h.b16 %v1822
    %v1913 = vunpack.c.l.b16 %v1823
    %v1914 = vunpack.c.h.b16 %v1823
    %v1915 = vunpack.c.l.b16 %v1824
    %v1916 = vunpack.c.h.b16 %v1824
    %v1917 = vunpack.c.l.b16 %v1825
    %v1918 = vunpack.c.h.b16 %v1825
    %v1919 = vunpack.c.l.b16 %v1826
    %v1920 = vunpack.c.h.b16 %v1826
    %v1921 = vunpack.c.l.b16 %v1827
    %v1922 = vunpack.c.h.b16 %v1827
    %v1923 = vunpack.c.l.b16 %v1828
    %v1924 = vunpack.c.h.b16 %v1828
    %v1925 = vpack.c.b16 %v1865, %v1861
    %v1926 = vpack.c.b16 %v1866, %v1862
    %v1927 = vpack.c.b16 %v1867, %v1863
    %v1928 = vpack.c.b16 %v1868, %v1864
    %v1929 = vpack.c.b16 %v1873, %v1869
    %v1930 = vpack.c.b16 %v1874, %v1870
    %v1931 = vpack.c.b16 %v1875, %v1871
    %v1932 = vpack.c.b16 %v1876, %v1872
    %v1933 = vpack.c.b16 %v1881, %v1877
    %v1934 = vpack.c.b16 %v1882, %v1878
    %v1935 = vpack.c.b16 %v1883, %v1879
    %v1936 = vpack.c.b16 %v1884, %v1880
    %v1937 = vpack.c.b16 %v1889, %v1885
    %v1938 = vpack.c.b16 %v1890, %v1886
    %v1939 = vpack.c.b16 %v1891, %v1887
    %v1940 = vpack.c.b16 %v1892, %v1888
    %v1941 = vpack.c.b16 %v1897, %v1893
    %v1942 = vpack.c.b16 %v1898, %v1894
    %v1943 = vpack.c.b16 %v1899, %v1895
    %v1944 = vpack.c.b16 %v1900, %v1896
    %v1945 = vpack.c.b16 %v1905, %v1901
    %v1946 = vpack.c.b16 %v1906, %v1902
    %v1947 = vpack.c.b16 %v1907, %v1903
    %v1948 = vpack.c.b16 %v1908, %v1904
    %v1949 = vpack.c.b16 %v1913, %v1909
    %v1950 = vpack.c.b16 %v1914, %v1910
    %v1951 = vpack.c.b16 %v1915, %v1911
    %v1952 = vpack.c.b16 %v1916, %v1912
    %v1953 = vpack.c.b16 %v1921, %v1917
    %v1954 = vpack.c.b16 %v1922, %v1918
    %v1955 = vpack.c.b16 %v1923, %v1919
    %v1956 = vpack.c.b16 %v1924, %v1920
    %1989 = vmatpush.bf16.msra.mxu0 %v1953
    %1990 = vmatpush.bf16.msra.mxu0 %v1949
    %1991 = vmatpush.bf16.msra.mxu0 %v1945
    %1992 = vmatpush.bf16.msra.mxu0 %v1941
    %1993 = vmatpush.bf16.msra.mxu0 %v1937
    %1994 = vmatpush.bf16.msra.mxu0 %v1933
    %1995 = vmatpush.bf16.msra.mxu0 %v1929
    %1996 = vmatpush.bf16.msra.mxu0 %v1925
    %1997 = vmatmul.bf16.gmra.mxu0 %v1796
    %v1998 = vpop.f32.mrf.mxu0
    %v1999 = vadd.f32 0.0, %v1998
    %v2000 = vpop.f32.mrf.mxu0
    %2001 = vdwg.mxu0
    %2002 = vmatpush.bf16.msra.mxu0 %v1954
    %2003 = vmatpush.bf16.msra.mxu0 %v1950
    %2004 = vmatpush.bf16.msra.mxu0 %v1946
    %2005 = vmatpush.bf16.msra.mxu0 %v1942
    %2006 = vmatpush.bf16.msra.mxu0 %v1938
    %2007 = vmatpush.bf16.msra.mxu0 %v1934
    %2008 = vmatpush.bf16.msra.mxu0 %v1930
    %2009 = vmatpush.bf16.msra.mxu0 %v1926
    %2010 = vmatmul.bf16.gmra.mxu0 %v1796
    %v2011 = vpop.f32.mrf.mxu0
    %v2012 = vadd.f32 0.0, %v2011
    %v2013 = vpop.f32.mrf.mxu0
    %2014 = vdwg.mxu0
    %2015 = vmatpush.bf16.msra.mxu0 %v1955
    %2016 = vmatpush.bf16.msra.mxu0 %v1951
    %2017 = vmatpush.bf16.msra.mxu0 %v1947
    %2018 = vmatpush.bf16.msra.mxu0 %v1943
    %2019 = vmatpush.bf16.msra.mxu0 %v1939
    %2020 = vmatpush.bf16.msra.mxu0 %v1935
    %2021 = vmatpush.bf16.msra.mxu0 %v1931
    %2022 = vmatpush.bf16.msra.mxu0 %v1927
    %2023 = vmatmul.bf16.gmra.mxu0 %v1796
    %v2024 = vpop.f32.mrf.mxu0
    %v2025 = vadd.f32 0.0, %v2024
    %v2026 = vpop.f32.mrf.mxu0
    %2027 = vdwg.mxu0
    %2028 = vmatpush.bf16.msra.mxu0 %v1956
    %2029 = vmatpush.bf16.msra.mxu0 %v1952
    %2030 = vmatpush.bf16.msra.mxu0 %v1948
    %2031 = vmatpush.bf16.msra.mxu0 %v1944
    %2032 = vmatpush.bf16.msra.mxu0 %v1940
    %2033 = vmatpush.bf16.msra.mxu0 %v1936
    %2034 = vmatpush.bf16.msra.mxu0 %v1932
    %2035 = vmatpush.bf16.msra.mxu0 %v1928
    %2036 = vmatmul.bf16.gmra.mxu0 %v1796
    %v2037 = vpop.f32.mrf.mxu0
    %v2038 = vadd.f32 0.0, %v2037
    %v2039 = vpop.f32.mrf.mxu0
    %2040 = vdwg.mxu0
    %v2041 = vadd.f32 %v1792, %v1999
    %v2042 = vadd.f32 %v1793, %v2012
    %v2043 = vadd.f32 %v1794, %v2025
    %v2044 = vadd.f32 %v1795, %v2038
    %v2045 = vxor.u32 %v2041, 2147483648
    %v2046 = vxor.u32 %v2042, 2147483648
    %v2047 = vxor.u32 %v2043, 2147483648
    %v2048 = vmul.f32 %v2045, 1.442695
    %v2049 = vpow.pop %v2048
    %v2050 = vmul.f32 %v2046, 1.442695
    %v2051 = vpow.pop %v2050
    %v2052 = vmul.f32 %v2047, 1.442695
    %v2053 = vpow.pop %v2052
    %v2054 = vadd.f32 %v2049, 1.0
    %v2055 = vadd.f32 %v2051, 1.0
    %v2056 = vadd.f32 %v2053, 1.0
    %v2057 = vrcp.pop %v2054
    %v2058 = vmul.f32 %v2054, %v2057
    %v2059 = vsub.f32 1.0, %v2058
    %v2060 = vmul.f32 %v2057, %v2059
    %v2061 = vadd.f32 %v2057, %v2060
    %vm2062 = vweird.f32 %v2054
    %vm2063 = vweird.f32 %v2057
    %vm2064 = vmor %vm2062, %vm2063
    %v2065 = vsel %vm2064, %v2057, %v2061
    %v2066 = vand.u32 2147483647, %v2054
    %vm2067 = vcmp.eq.f32.partialorder %v2066, 8.507059e+37
    %v2068 = vand.u32 %v2054, 2147483648
    %v2069 = vor.u32 1.1754944e-38, %v2068
    %v2070 = vsel %vm2067, %v2069, %v2065
    %v2071 = vmul.f32 1.0, %v2070
    %v2072 = vrcp.pop %v2055
    %v2073 = vmul.f32 %v2055, %v2072
    %v2074 = vsub.f32 1.0, %v2073
    %v2075 = vmul.f32 %v2072, %v2074
    %v2076 = vadd.f32 %v2072, %v2075
    %vm2077 = vweird.f32 %v2055
    %vm2078 = vweird.f32 %v2072
    %vm2079 = vmor %vm2077, %vm2078
    %v2080 = vsel %vm2079, %v2072, %v2076
    %v2081 = vand.u32 2147483647, %v2055
    %vm2082 = vcmp.eq.f32.partialorder %v2081, 8.507059e+37
    %v2083 = vand.u32 %v2055, 2147483648
    %v2084 = vor.u32 1.1754944e-38, %v2083
    %v2085 = vsel %vm2082, %v2084, %v2080
    %v2086 = vmul.f32 1.0, %v2085
    %v2087 = vrcp.pop %v2056
    %v2088 = vmul.f32 %v2056, %v2087
    %v2089 = vsub.f32 1.0, %v2088
    %v2090 = vmul.f32 %v2087, %v2089
    %v2091 = vadd.f32 %v2087, %v2090
    %vm2092 = vweird.f32 %v2056
    %vm2093 = vweird.f32 %v2087
    %vm2094 = vmor %vm2092, %vm2093
    %v2095 = vsel %vm2094, %v2087, %v2091
    %v2096 = vand.u32 2147483647, %v2056
    %vm2097 = vcmp.eq.f32.partialorder %v2096, 8.507059e+37
    %v2098 = vand.u32 %v2056, 2147483648
    %v2099 = vor.u32 1.1754944e-38, %v2098
    %v2100 = vsel %vm2097, %v2099, %v2095
    %v2101 = vmul.f32 1.0, %v2100
    %v2102 = vtanh.pop %v2044
    %v2103 = vmul.f32 %v2086, %v1787
    %v2104 = vmul.f32 %v2071, %v2102
    %v2105 = vadd.f32 %v2103, %v2104
    %v2106 = vtanh.pop %v2105
    %v2107 = vmul.f32 %v2101, %v2106
    %s2108 = scalar_lea.vmem %s8, 40
    %2109 = vst [vmem:[%s2108] sm:$0xff] %v2107
    %v2110 = vld [vmem:[#allocation2 + $0xc0] sm:$0xff]
    %v2111 = vld [vmem:[#allocation2 + $0xc8] sm:$0xff]
    %v2112 = vld [vmem:[#allocation2 + $0xd0] sm:$0xff]
    %v2113 = vld [vmem:[#allocation2 + $0xd8] sm:$0xff]
    %v2114 = vpack.c.bf16 %v2107, %v2107
    %v2115 = vld [vmem:[#allocation6] sm:$0xff]
    %v2116 = vld [vmem:[#allocation6 + $0x8] sm:$0xff]
    %v2117 = vld [vmem:[#allocation6 + $0x10] sm:$0xff]
    %v2118 = vld [vmem:[#allocation6 + $0x18] sm:$0xff]
    %v2119 = vld [vmem:[#allocation6 + $0x20] sm:$0xff]
    %v2120 = vld [vmem:[#allocation6 + $0x28] sm:$0xff]
    %v2121 = vld [vmem:[#allocation6 + $0x30] sm:$0xff]
    %v2122 = vld [vmem:[#allocation6 + $0x38] sm:$0xff]
    %v2123 = vld [vmem:[#allocation6 + $0x40] sm:$0xff]
    %v2124 = vld [vmem:[#allocation6 + $0x48] sm:$0xff]
    %v2125 = vld [vmem:[#allocation6 + $0x50] sm:$0xff]
    %v2126 = vld [vmem:[#allocation6 + $0x58] sm:$0xff]
    %v2127 = vld [vmem:[#allocation6 + $0x60] sm:$0xff]
    %v2128 = vld [vmem:[#allocation6 + $0x68] sm:$0xff]
    %v2129 = vld [vmem:[#allocation6 + $0x70] sm:$0xff]
    %v2130 = vld [vmem:[#allocation6 + $0x78] sm:$0xff]
    %v2131 = vld [vmem:[#allocation6 + $0x80] sm:$0xff]
    %v2132 = vld [vmem:[#allocation6 + $0x88] sm:$0xff]
    %v2133 = vld [vmem:[#allocation6 + $0x90] sm:$0xff]
    %v2134 = vld [vmem:[#allocation6 + $0x98] sm:$0xff]
    %v2135 = vld [vmem:[#allocation6 + $0xa0] sm:$0xff]
    %v2136 = vld [vmem:[#allocation6 + $0xa8] sm:$0xff]
    %v2137 = vld [vmem:[#allocation6 + $0xb0] sm:$0xff]
    %v2138 = vld [vmem:[#allocation6 + $0xb8] sm:$0xff]
    %v2139 = vld [vmem:[#allocation6 + $0xc0] sm:$0xff]
    %v2140 = vld [vmem:[#allocation6 + $0xc8] sm:$0xff]
    %v2141 = vld [vmem:[#allocation6 + $0xd0] sm:$0xff]
    %v2142 = vld [vmem:[#allocation6 + $0xd8] sm:$0xff]
    %v2143 = vld [vmem:[#allocation6 + $0xe0] sm:$0xff]
    %v2144 = vld [vmem:[#allocation6 + $0xe8] sm:$0xff]
    %v2145 = vld [vmem:[#allocation6 + $0xf0] sm:$0xff]
    %v2146 = vld [vmem:[#allocation6 + $0xf8] sm:$0xff]
    %v2179 = vunpack.c.l.b16 %v2115
    %v2180 = vunpack.c.h.b16 %v2115
    %v2181 = vunpack.c.l.b16 %v2116
    %v2182 = vunpack.c.h.b16 %v2116
    %v2183 = vunpack.c.l.b16 %v2117
    %v2184 = vunpack.c.h.b16 %v2117
    %v2185 = vunpack.c.l.b16 %v2118
    %v2186 = vunpack.c.h.b16 %v2118
    %v2187 = vunpack.c.l.b16 %v2119
    %v2188 = vunpack.c.h.b16 %v2119
    %v2189 = vunpack.c.l.b16 %v2120
    %v2190 = vunpack.c.h.b16 %v2120
    %v2191 = vunpack.c.l.b16 %v2121
    %v2192 = vunpack.c.h.b16 %v2121
    %v2193 = vunpack.c.l.b16 %v2122
    %v2194 = vunpack.c.h.b16 %v2122
    %v2195 = vunpack.c.l.b16 %v2123
    %v2196 = vunpack.c.h.b16 %v2123
    %v2197 = vunpack.c.l.b16 %v2124
    %v2198 = vunpack.c.h.b16 %v2124
    %v2199 = vunpack.c.l.b16 %v2125
    %v2200 = vunpack.c.h.b16 %v2125
    %v2201 = vunpack.c.l.b16 %v2126
    %v2202 = vunpack.c.h.b16 %v2126
    %v2203 = vunpack.c.l.b16 %v2127
    %v2204 = vunpack.c.h.b16 %v2127
    %v2205 = vunpack.c.l.b16 %v2128
    %v2206 = vunpack.c.h.b16 %v2128
    %v2207 = vunpack.c.l.b16 %v2129
    %v2208 = vunpack.c.h.b16 %v2129
    %v2209 = vunpack.c.l.b16 %v2130
    %v2210 = vunpack.c.h.b16 %v2130
    %v2211 = vunpack.c.l.b16 %v2131
    %v2212 = vunpack.c.h.b16 %v2131
    %v2213 = vunpack.c.l.b16 %v2132
    %v2214 = vunpack.c.h.b16 %v2132
    %v2215 = vunpack.c.l.b16 %v2133
    %v2216 = vunpack.c.h.b16 %v2133
    %v2217 = vunpack.c.l.b16 %v2134
    %v2218 = vunpack.c.h.b16 %v2134
    %v2219 = vunpack.c.l.b16 %v2135
    %v2220 = vunpack.c.h.b16 %v2135
    %v2221 = vunpack.c.l.b16 %v2136
    %v2222 = vunpack.c.h.b16 %v2136
    %v2223 = vunpack.c.l.b16 %v2137
    %v2224 = vunpack.c.h.b16 %v2137
    %v2225 = vunpack.c.l.b16 %v2138
    %v2226 = vunpack.c.h.b16 %v2138
    %v2227 = vunpack.c.l.b16 %v2139
    %v2228 = vunpack.c.h.b16 %v2139
    %v2229 = vunpack.c.l.b16 %v2140
    %v2230 = vunpack.c.h.b16 %v2140
    %v2231 = vunpack.c.l.b16 %v2141
    %v2232 = vunpack.c.h.b16 %v2141
    %v2233 = vunpack.c.l.b16 %v2142
    %v2234 = vunpack.c.h.b16 %v2142
    %v2235 = vunpack.c.l.b16 %v2143
    %v2236 = vunpack.c.h.b16 %v2143
    %v2237 = vunpack.c.l.b16 %v2144
    %v2238 = vunpack.c.h.b16 %v2144
    %v2239 = vunpack.c.l.b16 %v2145
    %v2240 = vunpack.c.h.b16 %v2145
    %v2241 = vunpack.c.l.b16 %v2146
    %v2242 = vunpack.c.h.b16 %v2146
    %v2243 = vpack.c.b16 %v2183, %v2179
    %v2244 = vpack.c.b16 %v2184, %v2180
    %v2245 = vpack.c.b16 %v2185, %v2181
    %v2246 = vpack.c.b16 %v2186, %v2182
    %v2247 = vpack.c.b16 %v2191, %v2187
    %v2248 = vpack.c.b16 %v2192, %v2188
    %v2249 = vpack.c.b16 %v2193, %v2189
    %v2250 = vpack.c.b16 %v2194, %v2190
    %v2251 = vpack.c.b16 %v2199, %v2195
    %v2252 = vpack.c.b16 %v2200, %v2196
    %v2253 = vpack.c.b16 %v2201, %v2197
    %v2254 = vpack.c.b16 %v2202, %v2198
    %v2255 = vpack.c.b16 %v2207, %v2203
    %v2256 = vpack.c.b16 %v2208, %v2204
    %v2257 = vpack.c.b16 %v2209, %v2205
    %v2258 = vpack.c.b16 %v2210, %v2206
    %v2259 = vpack.c.b16 %v2215, %v2211
    %v2260 = vpack.c.b16 %v2216, %v2212
    %v2261 = vpack.c.b16 %v2217, %v2213
    %v2262 = vpack.c.b16 %v2218, %v2214
    %v2263 = vpack.c.b16 %v2223, %v2219
    %v2264 = vpack.c.b16 %v2224, %v2220
    %v2265 = vpack.c.b16 %v2225, %v2221
    %v2266 = vpack.c.b16 %v2226, %v2222
    %v2267 = vpack.c.b16 %v2231, %v2227
    %v2268 = vpack.c.b16 %v2232, %v2228
    %v2269 = vpack.c.b16 %v2233, %v2229
    %v2270 = vpack.c.b16 %v2234, %v2230
    %v2271 = vpack.c.b16 %v2239, %v2235
    %v2272 = vpack.c.b16 %v2240, %v2236
    %v2273 = vpack.c.b16 %v2241, %v2237
    %v2274 = vpack.c.b16 %v2242, %v2238
    %2307 = vmatpush.bf16.msra.mxu0 %v2271
    %2308 = vmatpush.bf16.msra.mxu0 %v2267
    %2309 = vmatpush.bf16.msra.mxu0 %v2263
    %2310 = vmatpush.bf16.msra.mxu0 %v2259
    %2311 = vmatpush.bf16.msra.mxu0 %v2255
    %2312 = vmatpush.bf16.msra.mxu0 %v2251
    %2313 = vmatpush.bf16.msra.mxu0 %v2247
    %2314 = vmatpush.bf16.msra.mxu0 %v2243
    %2315 = vmatmul.bf16.gmra.mxu0 %v2114
    %v2316 = vpop.f32.mrf.mxu0
    %v2317 = vadd.f32 0.0, %v2316
    %v2318 = vpop.f32.mrf.mxu0
    %2319 = vdwg.mxu0
    %2320 = vmatpush.bf16.msra.mxu0 %v2272
    %2321 = vmatpush.bf16.msra.mxu0 %v2268
    %2322 = vmatpush.bf16.msra.mxu0 %v2264
    %2323 = vmatpush.bf16.msra.mxu0 %v2260
    %2324 = vmatpush.bf16.msra.mxu0 %v2256
    %2325 = vmatpush.bf16.msra.mxu0 %v2252
    %2326 = vmatpush.bf16.msra.mxu0 %v2248
    %2327 = vmatpush.bf16.msra.mxu0 %v2244
    %2328 = vmatmul.bf16.gmra.mxu0 %v2114
    %v2329 = vpop.f32.mrf.mxu0
    %v2330 = vadd.f32 0.0, %v2329
    %v2331 = vpop.f32.mrf.mxu0
    %2332 = vdwg.mxu0
    %2333 = vmatpush.bf16.msra.mxu0 %v2273
    %2334 = vmatpush.bf16.msra.mxu0 %v2269
    %2335 = vmatpush.bf16.msra.mxu0 %v2265
    %2336 = vmatpush.bf16.msra.mxu0 %v2261
    %2337 = vmatpush.bf16.msra.mxu0 %v2257
    %2338 = vmatpush.bf16.msra.mxu0 %v2253
    %2339 = vmatpush.bf16.msra.mxu0 %v2249
    %2340 = vmatpush.bf16.msra.mxu0 %v2245
    %2341 = vmatmul.bf16.gmra.mxu0 %v2114
    %v2342 = vpop.f32.mrf.mxu0
    %v2343 = vadd.f32 0.0, %v2342
    %v2344 = vpop.f32.mrf.mxu0
    %2345 = vdwg.mxu0
    %2346 = vmatpush.bf16.msra.mxu0 %v2274
    %2347 = vmatpush.bf16.msra.mxu0 %v2270
    %2348 = vmatpush.bf16.msra.mxu0 %v2266
    %2349 = vmatpush.bf16.msra.mxu0 %v2262
    %2350 = vmatpush.bf16.msra.mxu0 %v2258
    %2351 = vmatpush.bf16.msra.mxu0 %v2254
    %2352 = vmatpush.bf16.msra.mxu0 %v2250
    %2353 = vmatpush.bf16.msra.mxu0 %v2246
    %2354 = vmatmul.bf16.gmra.mxu0 %v2114
    %v2355 = vpop.f32.mrf.mxu0
    %v2356 = vadd.f32 0.0, %v2355
    %v2357 = vpop.f32.mrf.mxu0
    %2358 = vdwg.mxu0
    %v2359 = vadd.f32 %v2110, %v2317
    %v2360 = vadd.f32 %v2111, %v2330
    %v2361 = vadd.f32 %v2112, %v2343
    %v2362 = vadd.f32 %v2113, %v2356
    %v2363 = vxor.u32 %v2359, 2147483648
    %v2364 = vxor.u32 %v2360, 2147483648
    %v2365 = vxor.u32 %v2361, 2147483648
    %v2366 = vmul.f32 %v2363, 1.442695
    %v2367 = vpow.pop %v2366
    %v2368 = vmul.f32 %v2364, 1.442695
    %v2369 = vpow.pop %v2368
    %v2370 = vmul.f32 %v2365, 1.442695
    %v2371 = vpow.pop %v2370
    %v2372 = vadd.f32 %v2367, 1.0
    %v2373 = vadd.f32 %v2369, 1.0
    %v2374 = vadd.f32 %v2371, 1.0
    %v2375 = vrcp.pop %v2372
    %v2376 = vmul.f32 %v2372, %v2375
    %v2377 = vsub.f32 1.0, %v2376
    %v2378 = vmul.f32 %v2375, %v2377
    %v2379 = vadd.f32 %v2375, %v2378
    %vm2380 = vweird.f32 %v2372
    %vm2381 = vweird.f32 %v2375
    %vm2382 = vmor %vm2380, %vm2381
    %v2383 = vsel %vm2382, %v2375, %v2379
    %v2384 = vand.u32 2147483647, %v2372
    %vm2385 = vcmp.eq.f32.partialorder %v2384, 8.507059e+37
    %v2386 = vand.u32 %v2372, 2147483648
    %v2387 = vor.u32 1.1754944e-38, %v2386
    %v2388 = vsel %vm2385, %v2387, %v2383
    %v2389 = vmul.f32 1.0, %v2388
    %v2390 = vrcp.pop %v2373
    %v2391 = vmul.f32 %v2373, %v2390
    %v2392 = vsub.f32 1.0, %v2391
    %v2393 = vmul.f32 %v2390, %v2392
    %v2394 = vadd.f32 %v2390, %v2393
    %vm2395 = vweird.f32 %v2373
    %vm2396 = vweird.f32 %v2390
    %vm2397 = vmor %vm2395, %vm2396
    %v2398 = vsel %vm2397, %v2390, %v2394
    %v2399 = vand.u32 2147483647, %v2373
    %vm2400 = vcmp.eq.f32.partialorder %v2399, 8.507059e+37
    %v2401 = vand.u32 %v2373, 2147483648
    %v2402 = vor.u32 1.1754944e-38, %v2401
    %v2403 = vsel %vm2400, %v2402, %v2398
    %v2404 = vmul.f32 1.0, %v2403
    %v2405 = vrcp.pop %v2374
    %v2406 = vmul.f32 %v2374, %v2405
    %v2407 = vsub.f32 1.0, %v2406
    %v2408 = vmul.f32 %v2405, %v2407
    %v2409 = vadd.f32 %v2405, %v2408
    %vm2410 = vweird.f32 %v2374
    %vm2411 = vweird.f32 %v2405
    %vm2412 = vmor %vm2410, %vm2411
    %v2413 = vsel %vm2412, %v2405, %v2409
    %v2414 = vand.u32 2147483647, %v2374
    %vm2415 = vcmp.eq.f32.partialorder %v2414, 8.507059e+37
    %v2416 = vand.u32 %v2374, 2147483648
    %v2417 = vor.u32 1.1754944e-38, %v2416
    %v2418 = vsel %vm2415, %v2417, %v2413
    %v2419 = vmul.f32 1.0, %v2418
    %v2420 = vtanh.pop %v2362
    %v2421 = vmul.f32 %v2404, %v2105
    %v2422 = vmul.f32 %v2389, %v2420
    %v2423 = vadd.f32 %v2421, %v2422
    %v2424 = vtanh.pop %v2423
    %v2425 = vmul.f32 %v2419, %v2424
    %s2426 = scalar_lea.vmem %s8, 48
    %2427 = vst [vmem:[%s2426] sm:$0xff] %v2425
    %v2428 = vld [vmem:[#allocation2 + $0xe0] sm:$0xff]
    %v2429 = vld [vmem:[#allocation2 + $0xe8] sm:$0xff]
    %v2430 = vld [vmem:[#allocation2 + $0xf0] sm:$0xff]
    %v2431 = vld [vmem:[#allocation2 + $0xf8] sm:$0xff]
    %v2432 = vpack.c.bf16 %v2425, %v2425
    %v2433 = vld [vmem:[#allocation6] sm:$0xff]
    %v2434 = vld [vmem:[#allocation6 + $0x8] sm:$0xff]
    %v2435 = vld [vmem:[#allocation6 + $0x10] sm:$0xff]
    %v2436 = vld [vmem:[#allocation6 + $0x18] sm:$0xff]
    %v2437 = vld [vmem:[#allocation6 + $0x20] sm:$0xff]
    %v2438 = vld [vmem:[#allocation6 + $0x28] sm:$0xff]
    %v2439 = vld [vmem:[#allocation6 + $0x30] sm:$0xff]
    %v2440 = vld [vmem:[#allocation6 + $0x38] sm:$0xff]
    %v2441 = vld [vmem:[#allocation6 + $0x40] sm:$0xff]
    %v2442 = vld [vmem:[#allocation6 + $0x48] sm:$0xff]
    %v2443 = vld [vmem:[#allocation6 + $0x50] sm:$0xff]
    %v2444 = vld [vmem:[#allocation6 + $0x58] sm:$0xff]
    %v2445 = vld [vmem:[#allocation6 + $0x60] sm:$0xff]
    %v2446 = vld [vmem:[#allocation6 + $0x68] sm:$0xff]
    %v2447 = vld [vmem:[#allocation6 + $0x70] sm:$0xff]
    %v2448 = vld [vmem:[#allocation6 + $0x78] sm:$0xff]
    %v2449 = vld [vmem:[#allocation6 + $0x80] sm:$0xff]
    %v2450 = vld [vmem:[#allocation6 + $0x88] sm:$0xff]
    %v2451 = vld [vmem:[#allocation6 + $0x90] sm:$0xff]
    %v2452 = vld [vmem:[#allocation6 + $0x98] sm:$0xff]
    %v2453 = vld [vmem:[#allocation6 + $0xa0] sm:$0xff]
    %v2454 = vld [vmem:[#allocation6 + $0xa8] sm:$0xff]
    %v2455 = vld [vmem:[#allocation6 + $0xb0] sm:$0xff]
    %v2456 = vld [vmem:[#allocation6 + $0xb8] sm:$0xff]
    %v2457 = vld [vmem:[#allocation6 + $0xc0] sm:$0xff]
    %v2458 = vld [vmem:[#allocation6 + $0xc8] sm:$0xff]
    %v2459 = vld [vmem:[#allocation6 + $0xd0] sm:$0xff]
    %v2460 = vld [vmem:[#allocation6 + $0xd8] sm:$0xff]
    %v2461 = vld [vmem:[#allocation6 + $0xe0] sm:$0xff]
    %v2462 = vld [vmem:[#allocation6 + $0xe8] sm:$0xff]
    %v2463 = vld [vmem:[#allocation6 + $0xf0] sm:$0xff]
    %v2464 = vld [vmem:[#allocation6 + $0xf8] sm:$0xff]
    %v2497 = vunpack.c.l.b16 %v2433
    %v2498 = vunpack.c.h.b16 %v2433
    %v2499 = vunpack.c.l.b16 %v2434
    %v2500 = vunpack.c.h.b16 %v2434
    %v2501 = vunpack.c.l.b16 %v2435
    %v2502 = vunpack.c.h.b16 %v2435
    %v2503 = vunpack.c.l.b16 %v2436
    %v2504 = vunpack.c.h.b16 %v2436
    %v2505 = vunpack.c.l.b16 %v2437
    %v2506 = vunpack.c.h.b16 %v2437
    %v2507 = vunpack.c.l.b16 %v2438
    %v2508 = vunpack.c.h.b16 %v2438
    %v2509 = vunpack.c.l.b16 %v2439
    %v2510 = vunpack.c.h.b16 %v2439
    %v2511 = vunpack.c.l.b16 %v2440
    %v2512 = vunpack.c.h.b16 %v2440
    %v2513 = vunpack.c.l.b16 %v2441
    %v2514 = vunpack.c.h.b16 %v2441
    %v2515 = vunpack.c.l.b16 %v2442
    %v2516 = vunpack.c.h.b16 %v2442
    %v2517 = vunpack.c.l.b16 %v2443
    %v2518 = vunpack.c.h.b16 %v2443
    %v2519 = vunpack.c.l.b16 %v2444
    %v2520 = vunpack.c.h.b16 %v2444
    %v2521 = vunpack.c.l.b16 %v2445
    %v2522 = vunpack.c.h.b16 %v2445
    %v2523 = vunpack.c.l.b16 %v2446
    %v2524 = vunpack.c.h.b16 %v2446
    %v2525 = vunpack.c.l.b16 %v2447
    %v2526 = vunpack.c.h.b16 %v2447
    %v2527 = vunpack.c.l.b16 %v2448
    %v2528 = vunpack.c.h.b16 %v2448
    %v2529 = vunpack.c.l.b16 %v2449
    %v2530 = vunpack.c.h.b16 %v2449
    %v2531 = vunpack.c.l.b16 %v2450
    %v2532 = vunpack.c.h.b16 %v2450
    %v2533 = vunpack.c.l.b16 %v2451
    %v2534 = vunpack.c.h.b16 %v2451
    %v2535 = vunpack.c.l.b16 %v2452
    %v2536 = vunpack.c.h.b16 %v2452
    %v2537 = vunpack.c.l.b16 %v2453
    %v2538 = vunpack.c.h.b16 %v2453
    %v2539 = vunpack.c.l.b16 %v2454
    %v2540 = vunpack.c.h.b16 %v2454
    %v2541 = vunpack.c.l.b16 %v2455
    %v2542 = vunpack.c.h.b16 %v2455
    %v2543 = vunpack.c.l.b16 %v2456
    %v2544 = vunpack.c.h.b16 %v2456
    %v2545 = vunpack.c.l.b16 %v2457
    %v2546 = vunpack.c.h.b16 %v2457
    %v2547 = vunpack.c.l.b16 %v2458
    %v2548 = vunpack.c.h.b16 %v2458
    %v2549 = vunpack.c.l.b16 %v2459
    %v2550 = vunpack.c.h.b16 %v2459
    %v2551 = vunpack.c.l.b16 %v2460
    %v2552 = vunpack.c.h.b16 %v2460
    %v2553 = vunpack.c.l.b16 %v2461
    %v2554 = vunpack.c.h.b16 %v2461
    %v2555 = vunpack.c.l.b16 %v2462
    %v2556 = vunpack.c.h.b16 %v2462
    %v2557 = vunpack.c.l.b16 %v2463
    %v2558 = vunpack.c.h.b16 %v2463
    %v2559 = vunpack.c.l.b16 %v2464
    %v2560 = vunpack.c.h.b16 %v2464
    %v2561 = vpack.c.b16 %v2501, %v2497
    %v2562 = vpack.c.b16 %v2502, %v2498
    %v2563 = vpack.c.b16 %v2503, %v2499
    %v2564 = vpack.c.b16 %v2504, %v2500
    %v2565 = vpack.c.b16 %v2509, %v2505
    %v2566 = vpack.c.b16 %v2510, %v2506
    %v2567 = vpack.c.b16 %v2511, %v2507
    %v2568 = vpack.c.b16 %v2512, %v2508
    %v2569 = vpack.c.b16 %v2517, %v2513
    %v2570 = vpack.c.b16 %v2518, %v2514
    %v2571 = vpack.c.b16 %v2519, %v2515
    %v2572 = vpack.c.b16 %v2520, %v2516
    %v2573 = vpack.c.b16 %v2525, %v2521
    %v2574 = vpack.c.b16 %v2526, %v2522
    %v2575 = vpack.c.b16 %v2527, %v2523
    %v2576 = vpack.c.b16 %v2528, %v2524
    %v2577 = vpack.c.b16 %v2533, %v2529
    %v2578 = vpack.c.b16 %v2534, %v2530
    %v2579 = vpack.c.b16 %v2535, %v2531
    %v2580 = vpack.c.b16 %v2536, %v2532
    %v2581 = vpack.c.b16 %v2541, %v2537
    %v2582 = vpack.c.b16 %v2542, %v2538
    %v2583 = vpack.c.b16 %v2543, %v2539
    %v2584 = vpack.c.b16 %v2544, %v2540
    %v2585 = vpack.c.b16 %v2549, %v2545
    %v2586 = vpack.c.b16 %v2550, %v2546
    %v2587 = vpack.c.b16 %v2551, %v2547
    %v2588 = vpack.c.b16 %v2552, %v2548
    %v2589 = vpack.c.b16 %v2557, %v2553
    %v2590 = vpack.c.b16 %v2558, %v2554
    %v2591 = vpack.c.b16 %v2559, %v2555
    %v2592 = vpack.c.b16 %v2560, %v2556
    %2625 = vmatpush.bf16.msra.mxu0 %v2589
    %2626 = vmatpush.bf16.msra.mxu0 %v2585
    %2627 = vmatpush.bf16.msra.mxu0 %v2581
    %2628 = vmatpush.bf16.msra.mxu0 %v2577
    %2629 = vmatpush.bf16.msra.mxu0 %v2573
    %2630 = vmatpush.bf16.msra.mxu0 %v2569
    %2631 = vmatpush.bf16.msra.mxu0 %v2565
    %2632 = vmatpush.bf16.msra.mxu0 %v2561
    %2633 = vmatmul.bf16.gmra.mxu0 %v2432
    %v2634 = vpop.f32.mrf.mxu0
    %v2635 = vadd.f32 0.0, %v2634
    %v2636 = vpop.f32.mrf.mxu0
    %2637 = vdwg.mxu0
    %2638 = vmatpush.bf16.msra.mxu0 %v2590
    %2639 = vmatpush.bf16.msra.mxu0 %v2586
    %2640 = vmatpush.bf16.msra.mxu0 %v2582
    %2641 = vmatpush.bf16.msra.mxu0 %v2578
    %2642 = vmatpush.bf16.msra.mxu0 %v2574
    %2643 = vmatpush.bf16.msra.mxu0 %v2570
    %2644 = vmatpush.bf16.msra.mxu0 %v2566
    %2645 = vmatpush.bf16.msra.mxu0 %v2562
    %2646 = vmatmul.bf16.gmra.mxu0 %v2432
    %v2647 = vpop.f32.mrf.mxu0
    %v2648 = vadd.f32 0.0, %v2647
    %v2649 = vpop.f32.mrf.mxu0
    %2650 = vdwg.mxu0
    %2651 = vmatpush.bf16.msra.mxu0 %v2591
    %2652 = vmatpush.bf16.msra.mxu0 %v2587
    %2653 = vmatpush.bf16.msra.mxu0 %v2583
    %2654 = vmatpush.bf16.msra.mxu0 %v2579
    %2655 = vmatpush.bf16.msra.mxu0 %v2575
    %2656 = vmatpush.bf16.msra.mxu0 %v2571
    %2657 = vmatpush.bf16.msra.mxu0 %v2567
    %2658 = vmatpush.bf16.msra.mxu0 %v2563
    %2659 = vmatmul.bf16.gmra.mxu0 %v2432
    %v2660 = vpop.f32.mrf.mxu0
    %v2661 = vadd.f32 0.0, %v2660
    %v2662 = vpop.f32.mrf.mxu0
    %2663 = vdwg.mxu0
    %2664 = vmatpush.bf16.msra.mxu0 %v2592
    %2665 = vmatpush.bf16.msra.mxu0 %v2588
    %2666 = vmatpush.bf16.msra.mxu0 %v2584
    %2667 = vmatpush.bf16.msra.mxu0 %v2580
    %2668 = vmatpush.bf16.msra.mxu0 %v2576
    %2669 = vmatpush.bf16.msra.mxu0 %v2572
    %2670 = vmatpush.bf16.msra.mxu0 %v2568
    %2671 = vmatpush.bf16.msra.mxu0 %v2564
    %2672 = vmatmul.bf16.gmra.mxu0 %v2432
    %v2673 = vpop.f32.mrf.mxu0
    %v2674 = vadd.f32 0.0, %v2673
    %v2675 = vpop.f32.mrf.mxu0
    %2676 = vdwg.mxu0
    %v2677 = vadd.f32 %v2428, %v2635
    %v2678 = vadd.f32 %v2429, %v2648
    %v2679 = vadd.f32 %v2430, %v2661
    %v2680 = vadd.f32 %v2431, %v2674
    %v2681 = vxor.u32 %v2677, 2147483648
    %v2682 = vxor.u32 %v2678, 2147483648
    %v2683 = vxor.u32 %v2679, 2147483648
    %v2684 = vmul.f32 %v2681, 1.442695
    %v2685 = vpow.pop %v2684
    %v2686 = vmul.f32 %v2682, 1.442695
    %v2687 = vpow.pop %v2686
    %v2688 = vmul.f32 %v2683, 1.442695
    %v2689 = vpow.pop %v2688
    %v2690 = vadd.f32 %v2685, 1.0
    %v2691 = vadd.f32 %v2687, 1.0
    %v2692 = vadd.f32 %v2689, 1.0
    %v2693 = vrcp.pop %v2690
    %v2694 = vmul.f32 %v2690, %v2693
    %v2695 = vsub.f32 1.0, %v2694
    %v2696 = vmul.f32 %v2693, %v2695
    %v2697 = vadd.f32 %v2693, %v2696
    %vm2698 = vweird.f32 %v2690
    %vm2699 = vweird.f32 %v2693
    %vm2700 = vmor %vm2698, %vm2699
    %v2701 = vsel %vm2700, %v2693, %v2697
    %v2702 = vand.u32 2147483647, %v2690
    %vm2703 = vcmp.eq.f32.partialorder %v2702, 8.507059e+37
    %v2704 = vand.u32 %v2690, 2147483648
    %v2705 = vor.u32 1.1754944e-38, %v2704
    %v2706 = vsel %vm2703, %v2705, %v2701
    %v2707 = vmul.f32 1.0, %v2706
    %v2708 = vrcp.pop %v2691
    %v2709 = vmul.f32 %v2691, %v2708
    %v2710 = vsub.f32 1.0, %v2709
    %v2711 = vmul.f32 %v2708, %v2710
    %v2712 = vadd.f32 %v2708, %v2711
    %vm2713 = vweird.f32 %v2691
    %vm2714 = vweird.f32 %v2708
    %vm2715 = vmor %vm2713, %vm2714
    %v2716 = vsel %vm2715, %v2708, %v2712
    %v2717 = vand.u32 2147483647, %v2691
    %vm2718 = vcmp.eq.f32.partialorder %v2717, 8.507059e+37
    %v2719 = vand.u32 %v2691, 2147483648
    %v2720 = vor.u32 1.1754944e-38, %v2719
    %v2721 = vsel %vm2718, %v2720, %v2716
    %v2722 = vmul.f32 1.0, %v2721
    %v2723 = vrcp.pop %v2692
    %v2724 = vmul.f32 %v2692, %v2723
    %v2725 = vsub.f32 1.0, %v2724
    %v2726 = vmul.f32 %v2723, %v2725
    %v2727 = vadd.f32 %v2723, %v2726
    %vm2728 = vweird.f32 %v2692
    %vm2729 = vweird.f32 %v2723
    %vm2730 = vmor %vm2728, %vm2729
    %v2731 = vsel %vm2730, %v2723, %v2727
    %v2732 = vand.u32 2147483647, %v2692
    %vm2733 = vcmp.eq.f32.partialorder %v2732, 8.507059e+37
    %v2734 = vand.u32 %v2692, 2147483648
    %v2735 = vor.u32 1.1754944e-38, %v2734
    %v2736 = vsel %vm2733, %v2735, %v2731
    %v2737 = vmul.f32 1.0, %v2736
    %v2738 = vtanh.pop %v2680
    %v2739 = vmul.f32 %v2722, %v2423
    %v2740 = vmul.f32 %v2707, %v2738
    %v2741 = vadd.f32 %v2739, %v2740
    %v2742 = vtanh.pop %v2741
    %v2743 = vmul.f32 %v2737, %v2742
    %s2744 = scalar_lea.vmem %s8, 56
    %2745 = vst [vmem:[%s2744] sm:$0xff] %v2743
    %s2746 = scalar_lea.vmem %s8, 64
    %2747 = vst [vmem:[%s2746] sm:$0xff] %v2741
    %v2748 = vpack.c.bf16 %v2743, %v2743
    %v2749 = vld [vmem:[#allocation8] sm:$0xff]
    %v2750 = vld [vmem:[#allocation8 + $0x8] sm:$0xff]
    %v2751 = vld [vmem:[#allocation8 + $0x10] sm:$0xff]
    %v2752 = vld [vmem:[#allocation8 + $0x18] sm:$0xff]
    %v2753 = vld [vmem:[#allocation8 + $0x20] sm:$0xff]
    %v2754 = vld [vmem:[#allocation8 + $0x28] sm:$0xff]
    %v2755 = vld [vmem:[#allocation8 + $0x30] sm:$0xff]
    %v2756 = vld [vmem:[#allocation8 + $0x38] sm:$0xff]
    %v2757 = vld [vmem:[#allocation8 + $0x40] sm:$0xff]
    %v2758 = vld [vmem:[#allocation8 + $0x48] sm:$0xff]
    %v2759 = vld [vmem:[#allocation8 + $0x50] sm:$0xff]
    %v2760 = vld [vmem:[#allocation8 + $0x58] sm:$0xff]
    %v2761 = vld [vmem:[#allocation8 + $0x60] sm:$0xff]
    %v2762 = vld [vmem:[#allocation8 + $0x68] sm:$0xff]
    %v2763 = vld [vmem:[#allocation8 + $0x70] sm:$0xff]
    %v2764 = vld [vmem:[#allocation8 + $0x78] sm:$0xff]
    %v2765 = vld [vmem:[#allocation8 + $0x80] sm:$0xff]
    %v2766 = vld [vmem:[#allocation8 + $0x88] sm:$0xff]
    %v2767 = vld [vmem:[#allocation8 + $0x90] sm:$0xff]
    %v2768 = vld [vmem:[#allocation8 + $0x98] sm:$0xff]
    %v2769 = vld [vmem:[#allocation8 + $0xa0] sm:$0xff]
    %v2770 = vld [vmem:[#allocation8 + $0xa8] sm:$0xff]
    %v2771 = vld [vmem:[#allocation8 + $0xb0] sm:$0xff]
    %v2772 = vld [vmem:[#allocation8 + $0xb8] sm:$0xff]
    %v2773 = vld [vmem:[#allocation8 + $0xc0] sm:$0xff]
    %v2774 = vld [vmem:[#allocation8 + $0xc8] sm:$0xff]
    %v2775 = vld [vmem:[#allocation8 + $0xd0] sm:$0xff]
    %v2776 = vld [vmem:[#allocation8 + $0xd8] sm:$0xff]
    %v2777 = vld [vmem:[#allocation8 + $0xe0] sm:$0xff]
    %v2778 = vld [vmem:[#allocation8 + $0xe8] sm:$0xff]
    %v2779 = vld [vmem:[#allocation8 + $0xf0] sm:$0xff]
    %v2780 = vld [vmem:[#allocation8 + $0xf8] sm:$0xff]
    %v2781 = vld [vmem:[#allocation8 + $0x100] sm:$0xff]
    %v2782 = vld [vmem:[#allocation8 + $0x108] sm:$0xff]
    %v2783 = vld [vmem:[#allocation8 + $0x110] sm:$0xff]
    %v2784 = vld [vmem:[#allocation8 + $0x118] sm:$0xff]
    %v2785 = vld [vmem:[#allocation8 + $0x120] sm:$0xff]
    %v2786 = vld [vmem:[#allocation8 + $0x128] sm:$0xff]
    %v2787 = vld [vmem:[#allocation8 + $0x130] sm:$0xff]
    %v2788 = vld [vmem:[#allocation8 + $0x138] sm:$0xff]
    %v2789 = vld [vmem:[#allocation8 + $0x140] sm:$0xff]
    %v2790 = vld [vmem:[#allocation8 + $0x148] sm:$0xff]
    %v2791 = vld [vmem:[#allocation8 + $0x150] sm:$0xff]
    %v2792 = vld [vmem:[#allocation8 + $0x158] sm:$0xff]
    %v2793 = vld [vmem:[#allocation8 + $0x160] sm:$0xff]
    %v2794 = vld [vmem:[#allocation8 + $0x168] sm:$0xff]
    %v2795 = vld [vmem:[#allocation8 + $0x170] sm:$0xff]
    %v2796 = vld [vmem:[#allocation8 + $0x178] sm:$0xff]
    %v2797 = vld [vmem:[#allocation8 + $0x180] sm:$0xff]
    %v2798 = vld [vmem:[#allocation8 + $0x188] sm:$0xff]
    %v2799 = vld [vmem:[#allocation8 + $0x190] sm:$0xff]
    %v2800 = vld [vmem:[#allocation8 + $0x198] sm:$0xff]
    %v2801 = vld [vmem:[#allocation8 + $0x1a0] sm:$0xff]
    %v2802 = vld [vmem:[#allocation8 + $0x1a8] sm:$0xff]
    %v2803 = vld [vmem:[#allocation8 + $0x1b0] sm:$0xff]
    %v2804 = vld [vmem:[#allocation8 + $0x1b8] sm:$0xff]
    %v2805 = vld [vmem:[#allocation8 + $0x1c0] sm:$0xff]
    %v2806 = vld [vmem:[#allocation8 + $0x1c8] sm:$0xff]
    %v2807 = vld [vmem:[#allocation8 + $0x1d0] sm:$0xff]
    %v2808 = vld [vmem:[#allocation8 + $0x1d8] sm:$0xff]
    %v2809 = vld [vmem:[#allocation8 + $0x1e0] sm:$0xff]
    %v2810 = vld [vmem:[#allocation8 + $0x1e8] sm:$0xff]
    %v2811 = vld [vmem:[#allocation8 + $0x1f0] sm:$0xff]
    %v2812 = vld [vmem:[#allocation8 + $0x1f8] sm:$0xff]
    %v2813 = vld [vmem:[%s3 + $0x4] sm:$0xff]
    %v2815 = vperm.slane %v2813, 0
    %v2816 = vperm.slane %v2813, 1
    %v2817 = vperm.slane %v2813, 2
    %v2818 = vperm.slane %v2813, 3
    %v2819 = vperm.slane %v2813, 4
    %v2820 = vperm.slane %v2813, 5
    %v2821 = vperm.slane %v2813, 6
    %v2822 = vperm.slane %v2813, 7
    %v2895 = vunpack.c.l.b16 %v2749
    %v2896 = vunpack.c.h.b16 %v2749
    %v2897 = vunpack.c.l.b16 %v2750
    %v2898 = vunpack.c.h.b16 %v2750
    %v2899 = vunpack.c.l.b16 %v2751
    %v2900 = vunpack.c.h.b16 %v2751
    %v2901 = vunpack.c.l.b16 %v2752
    %v2902 = vunpack.c.h.b16 %v2752
    %v2903 = vunpack.c.l.b16 %v2753
    %v2904 = vunpack.c.h.b16 %v2753
    %v2905 = vunpack.c.l.b16 %v2754
    %v2906 = vunpack.c.h.b16 %v2754
    %v2907 = vunpack.c.l.b16 %v2755
    %v2908 = vunpack.c.h.b16 %v2755
    %v2909 = vunpack.c.l.b16 %v2756
    %v2910 = vunpack.c.h.b16 %v2756
    %v2911 = vunpack.c.l.b16 %v2757
    %v2912 = vunpack.c.h.b16 %v2757
    %v2913 = vunpack.c.l.b16 %v2758
    %v2914 = vunpack.c.h.b16 %v2758
    %v2915 = vunpack.c.l.b16 %v2759
    %v2916 = vunpack.c.h.b16 %v2759
    %v2917 = vunpack.c.l.b16 %v2760
    %v2918 = vunpack.c.h.b16 %v2760
    %v2919 = vunpack.c.l.b16 %v2761
    %v2920 = vunpack.c.h.b16 %v2761
    %v2921 = vunpack.c.l.b16 %v2762
    %v2922 = vunpack.c.h.b16 %v2762
    %v2923 = vunpack.c.l.b16 %v2763
    %v2924 = vunpack.c.h.b16 %v2763
    %v2925 = vunpack.c.l.b16 %v2764
    %v2926 = vunpack.c.h.b16 %v2764
    %v2927 = vunpack.c.l.b16 %v2765
    %v2928 = vunpack.c.h.b16 %v2765
    %v2929 = vunpack.c.l.b16 %v2766
    %v2930 = vunpack.c.h.b16 %v2766
    %v2931 = vunpack.c.l.b16 %v2767
    %v2932 = vunpack.c.h.b16 %v2767
    %v2933 = vunpack.c.l.b16 %v2768
    %v2934 = vunpack.c.h.b16 %v2768
    %v2935 = vunpack.c.l.b16 %v2769
    %v2936 = vunpack.c.h.b16 %v2769
    %v2937 = vunpack.c.l.b16 %v2770
    %v2938 = vunpack.c.h.b16 %v2770
    %v2939 = vunpack.c.l.b16 %v2771
    %v2940 = vunpack.c.h.b16 %v2771
    %v2941 = vunpack.c.l.b16 %v2772
    %v2942 = vunpack.c.h.b16 %v2772
    %v2943 = vunpack.c.l.b16 %v2773
    %v2944 = vunpack.c.h.b16 %v2773
    %v2945 = vunpack.c.l.b16 %v2774
    %v2946 = vunpack.c.h.b16 %v2774
    %v2947 = vunpack.c.l.b16 %v2775
    %v2948 = vunpack.c.h.b16 %v2775
    %v2949 = vunpack.c.l.b16 %v2776
    %v2950 = vunpack.c.h.b16 %v2776
    %v2951 = vunpack.c.l.b16 %v2777
    %v2952 = vunpack.c.h.b16 %v2777
    %v2953 = vunpack.c.l.b16 %v2778
    %v2954 = vunpack.c.h.b16 %v2778
    %v2955 = vunpack.c.l.b16 %v2779
    %v2956 = vunpack.c.h.b16 %v2779
    %v2957 = vunpack.c.l.b16 %v2780
    %v2958 = vunpack.c.h.b16 %v2780
    %v2959 = vunpack.c.l.b16 %v2781
    %v2960 = vunpack.c.h.b16 %v2781
    %v2961 = vunpack.c.l.b16 %v2782
    %v2962 = vunpack.c.h.b16 %v2782
    %v2963 = vunpack.c.l.b16 %v2783
    %v2964 = vunpack.c.h.b16 %v2783
    %v2965 = vunpack.c.l.b16 %v2784
    %v2966 = vunpack.c.h.b16 %v2784
    %v2967 = vunpack.c.l.b16 %v2785
    %v2968 = vunpack.c.h.b16 %v2785
    %v2969 = vunpack.c.l.b16 %v2786
    %v2970 = vunpack.c.h.b16 %v2786
    %v2971 = vunpack.c.l.b16 %v2787
    %v2972 = vunpack.c.h.b16 %v2787
    %v2973 = vunpack.c.l.b16 %v2788
    %v2974 = vunpack.c.h.b16 %v2788
    %v2975 = vunpack.c.l.b16 %v2789
    %v2976 = vunpack.c.h.b16 %v2789
    %v2977 = vunpack.c.l.b16 %v2790
    %v2978 = vunpack.c.h.b16 %v2790
    %v2979 = vunpack.c.l.b16 %v2791
    %v2980 = vunpack.c.h.b16 %v2791
    %v2981 = vunpack.c.l.b16 %v2792
    %v2982 = vunpack.c.h.b16 %v2792
    %v2983 = vunpack.c.l.b16 %v2793
    %v2984 = vunpack.c.h.b16 %v2793
    %v2985 = vunpack.c.l.b16 %v2794
    %v2986 = vunpack.c.h.b16 %v2794
    %v2987 = vunpack.c.l.b16 %v2795
    %v2988 = vunpack.c.h.b16 %v2795
    %v2989 = vunpack.c.l.b16 %v2796
    %v2990 = vunpack.c.h.b16 %v2796
    %v2991 = vunpack.c.l.b16 %v2797
    %v2992 = vunpack.c.h.b16 %v2797
    %v2993 = vunpack.c.l.b16 %v2798
    %v2994 = vunpack.c.h.b16 %v2798
    %v2995 = vunpack.c.l.b16 %v2799
    %v2996 = vunpack.c.h.b16 %v2799
    %v2997 = vunpack.c.l.b16 %v2800
    %v2998 = vunpack.c.h.b16 %v2800
    %v2999 = vunpack.c.l.b16 %v2801
    %v3000 = vunpack.c.h.b16 %v2801
    %v3001 = vunpack.c.l.b16 %v2802
    %v3002 = vunpack.c.h.b16 %v2802
    %v3003 = vunpack.c.l.b16 %v2803
    %v3004 = vunpack.c.h.b16 %v2803
    %v3005 = vunpack.c.l.b16 %v2804
    %v3006 = vunpack.c.h.b16 %v2804
    %v3007 = vunpack.c.l.b16 %v2805
    %v3008 = vunpack.c.h.b16 %v2805
    %v3009 = vunpack.c.l.b16 %v2806
    %v3010 = vunpack.c.h.b16 %v2806
    %v3011 = vunpack.c.l.b16 %v2807
    %v3012 = vunpack.c.h.b16 %v2807
    %v3013 = vunpack.c.l.b16 %v2808
    %v3014 = vunpack.c.h.b16 %v2808
    %v3015 = vunpack.c.l.b16 %v2809
    %v3016 = vunpack.c.h.b16 %v2809
    %v3017 = vunpack.c.l.b16 %v2810
    %v3018 = vunpack.c.h.b16 %v2810
    %v3019 = vunpack.c.l.b16 %v2811
    %v3020 = vunpack.c.h.b16 %v2811
    %v3021 = vunpack.c.l.b16 %v2812
    %v3022 = vunpack.c.h.b16 %v2812
    %v3023 = vpack.c.b16 %v2903, %v2895
    %v3024 = vpack.c.b16 %v2904, %v2896
    %v3025 = vpack.c.b16 %v2905, %v2897
    %v3026 = vpack.c.b16 %v2906, %v2898
    %v3027 = vpack.c.b16 %v2907, %v2899
    %v3028 = vpack.c.b16 %v2908, %v2900
    %v3029 = vpack.c.b16 %v2909, %v2901
    %v3030 = vpack.c.b16 %v2910, %v2902
    %v3031 = vpack.c.b16 %v2919, %v2911
    %v3032 = vpack.c.b16 %v2920, %v2912
    %v3033 = vpack.c.b16 %v2921, %v2913
    %v3034 = vpack.c.b16 %v2922, %v2914
    %v3035 = vpack.c.b16 %v2923, %v2915
    %v3036 = vpack.c.b16 %v2924, %v2916
    %v3037 = vpack.c.b16 %v2925, %v2917
    %v3038 = vpack.c.b16 %v2926, %v2918
    %v3039 = vpack.c.b16 %v2935, %v2927
    %v3040 = vpack.c.b16 %v2936, %v2928
    %v3041 = vpack.c.b16 %v2937, %v2929
    %v3042 = vpack.c.b16 %v2938, %v2930
    %v3043 = vpack.c.b16 %v2939, %v2931
    %v3044 = vpack.c.b16 %v2940, %v2932
    %v3045 = vpack.c.b16 %v2941, %v2933
    %v3046 = vpack.c.b16 %v2942, %v2934
    %v3047 = vpack.c.b16 %v2951, %v2943
    %v3048 = vpack.c.b16 %v2952, %v2944
    %v3049 = vpack.c.b16 %v2953, %v2945
    %v3050 = vpack.c.b16 %v2954, %v2946
    %v3051 = vpack.c.b16 %v2955, %v2947
    %v3052 = vpack.c.b16 %v2956, %v2948
    %v3053 = vpack.c.b16 %v2957, %v2949
    %v3054 = vpack.c.b16 %v2958, %v2950
    %v3055 = vpack.c.b16 %v2967, %v2959
    %v3056 = vpack.c.b16 %v2968, %v2960
    %v3057 = vpack.c.b16 %v2969, %v2961
    %v3058 = vpack.c.b16 %v2970, %v2962
    %v3059 = vpack.c.b16 %v2971, %v2963
    %v3060 = vpack.c.b16 %v2972, %v2964
    %v3061 = vpack.c.b16 %v2973, %v2965
    %v3062 = vpack.c.b16 %v2974, %v2966
    %v3063 = vpack.c.b16 %v2983, %v2975
    %v3064 = vpack.c.b16 %v2984, %v2976
    %v3065 = vpack.c.b16 %v2985, %v2977
    %v3066 = vpack.c.b16 %v2986, %v2978
    %v3067 = vpack.c.b16 %v2987, %v2979
    %v3068 = vpack.c.b16 %v2988, %v2980
    %v3069 = vpack.c.b16 %v2989, %v2981
    %v3070 = vpack.c.b16 %v2990, %v2982
    %v3071 = vpack.c.b16 %v2999, %v2991
    %v3072 = vpack.c.b16 %v3000, %v2992
    %v3073 = vpack.c.b16 %v3001, %v2993
    %v3074 = vpack.c.b16 %v3002, %v2994
    %v3075 = vpack.c.b16 %v3003, %v2995
    %v3076 = vpack.c.b16 %v3004, %v2996
    %v3077 = vpack.c.b16 %v3005, %v2997
    %v3078 = vpack.c.b16 %v3006, %v2998
    %v3079 = vpack.c.b16 %v3015, %v3007
    %v3080 = vpack.c.b16 %v3016, %v3008
    %v3081 = vpack.c.b16 %v3017, %v3009
    %v3082 = vpack.c.b16 %v3018, %v3010
    %v3083 = vpack.c.b16 %v3019, %v3011
    %v3084 = vpack.c.b16 %v3020, %v3012
    %v3085 = vpack.c.b16 %v3021, %v3013
    %v3086 = vpack.c.b16 %v3022, %v3014
    %3151 = vmatpush.bf16.msra.mxu0 %v3079
    %3152 = vmatpush.bf16.msra.mxu0 %v3071
    %3153 = vmatpush.bf16.msra.mxu0 %v3063
    %3154 = vmatpush.bf16.msra.mxu0 %v3055
    %3155 = vmatpush.bf16.msra.mxu0 %v3047
    %3156 = vmatpush.bf16.msra.mxu0 %v3039
    %3157 = vmatpush.bf16.msra.mxu0 %v3031
    %3158 = vmatpush.bf16.msra.mxu0 %v3023
    %3159 = vmatmul.bf16.gmra.mxu0 %v2748
    %v3160 = vpop.f32.mrf.mxu0
    %v3161 = vadd.f32 %v2815, %v3160
    %v3162 = vpop.f32.mrf.mxu0
    %3163 = vdwg.mxu0
    %3164 = vmatpush.bf16.msra.mxu0 %v3080
    %3165 = vmatpush.bf16.msra.mxu0 %v3072
    %3166 = vmatpush.bf16.msra.mxu0 %v3064
    %3167 = vmatpush.bf16.msra.mxu0 %v3056
    %3168 = vmatpush.bf16.msra.mxu0 %v3048
    %3169 = vmatpush.bf16.msra.mxu0 %v3040
    %3170 = vmatpush.bf16.msra.mxu0 %v3032
    %3171 = vmatpush.bf16.msra.mxu0 %v3024
    %3172 = vmatmul.bf16.gmra.mxu0 %v2748
    %v3173 = vpop.f32.mrf.mxu0
    %v3174 = vadd.f32 %v2816, %v3173
    %v3175 = vpop.f32.mrf.mxu0
    %3176 = vdwg.mxu0
    %3177 = vmatpush.bf16.msra.mxu0 %v3081
    %3178 = vmatpush.bf16.msra.mxu0 %v3073
    %3179 = vmatpush.bf16.msra.mxu0 %v3065
    %3180 = vmatpush.bf16.msra.mxu0 %v3057
    %3181 = vmatpush.bf16.msra.mxu0 %v3049
    %3182 = vmatpush.bf16.msra.mxu0 %v3041
    %3183 = vmatpush.bf16.msra.mxu0 %v3033
    %3184 = vmatpush.bf16.msra.mxu0 %v3025
    %3185 = vmatmul.bf16.gmra.mxu0 %v2748
    %v3186 = vpop.f32.mrf.mxu0
    %v3187 = vadd.f32 %v2817, %v3186
    %v3188 = vpop.f32.mrf.mxu0
    %3189 = vdwg.mxu0
    %3190 = vmatpush.bf16.msra.mxu0 %v3082
    %3191 = vmatpush.bf16.msra.mxu0 %v3074
    %3192 = vmatpush.bf16.msra.mxu0 %v3066
    %3193 = vmatpush.bf16.msra.mxu0 %v3058
    %3194 = vmatpush.bf16.msra.mxu0 %v3050
    %3195 = vmatpush.bf16.msra.mxu0 %v3042
    %3196 = vmatpush.bf16.msra.mxu0 %v3034
    %3197 = vmatpush.bf16.msra.mxu0 %v3026
    %3198 = vmatmul.bf16.gmra.mxu0 %v2748
    %v3199 = vpop.f32.mrf.mxu0
    %v3200 = vadd.f32 %v2818, %v3199
    %v3201 = vpop.f32.mrf.mxu0
    %3202 = vdwg.mxu0
    %3203 = vmatpush.bf16.msra.mxu0 %v3083
    %3204 = vmatpush.bf16.msra.mxu0 %v3075
    %3205 = vmatpush.bf16.msra.mxu0 %v3067
    %3206 = vmatpush.bf16.msra.mxu0 %v3059
    %3207 = vmatpush.bf16.msra.mxu0 %v3051
    %3208 = vmatpush.bf16.msra.mxu0 %v3043
    %3209 = vmatpush.bf16.msra.mxu0 %v3035
    %3210 = vmatpush.bf16.msra.mxu0 %v3027
    %3211 = vmatmul.bf16.gmra.mxu0 %v2748
    %v3212 = vpop.f32.mrf.mxu0
    %v3213 = vadd.f32 %v2819, %v3212
    %v3214 = vpop.f32.mrf.mxu0
    %3215 = vdwg.mxu0
    %3216 = vmatpush.bf16.msra.mxu0 %v3084
    %3217 = vmatpush.bf16.msra.mxu0 %v3076
    %3218 = vmatpush.bf16.msra.mxu0 %v3068
    %3219 = vmatpush.bf16.msra.mxu0 %v3060
    %3220 = vmatpush.bf16.msra.mxu0 %v3052
    %3221 = vmatpush.bf16.msra.mxu0 %v3044
    %3222 = vmatpush.bf16.msra.mxu0 %v3036
    %3223 = vmatpush.bf16.msra.mxu0 %v3028
    %3224 = vmatmul.bf16.gmra.mxu0 %v2748
    %v3225 = vpop.f32.mrf.mxu0
    %v3226 = vadd.f32 %v2820, %v3225
    %v3227 = vpop.f32.mrf.mxu0
    %3228 = vdwg.mxu0
    %3229 = vmatpush.bf16.msra.mxu0 %v3085
    %3230 = vmatpush.bf16.msra.mxu0 %v3077
    %3231 = vmatpush.bf16.msra.mxu0 %v3069
    %3232 = vmatpush.bf16.msra.mxu0 %v3061
    %3233 = vmatpush.bf16.msra.mxu0 %v3053
    %3234 = vmatpush.bf16.msra.mxu0 %v3045
    %3235 = vmatpush.bf16.msra.mxu0 %v3037
    %3236 = vmatpush.bf16.msra.mxu0 %v3029
    %3237 = vmatmul.bf16.gmra.mxu0 %v2748
    %v3238 = vpop.f32.mrf.mxu0
    %v3239 = vadd.f32 %v2821, %v3238
    %v3240 = vpop.f32.mrf.mxu0
    %3241 = vdwg.mxu0
    %3242 = vmatpush.bf16.msra.mxu0 %v3086
    %3243 = vmatpush.bf16.msra.mxu0 %v3078
    %3244 = vmatpush.bf16.msra.mxu0 %v3070
    %3245 = vmatpush.bf16.msra.mxu0 %v3062
    %3246 = vmatpush.bf16.msra.mxu0 %v3054
    %3247 = vmatpush.bf16.msra.mxu0 %v3046
    %3248 = vmatpush.bf16.msra.mxu0 %v3038
    %3249 = vmatpush.bf16.msra.mxu0 %v3030
    %3250 = vmatmul.bf16.gmra.mxu0 %v2748
    %v3251 = vpop.f32.mrf.mxu0
    %v3252 = vadd.f32 %v2822, %v3251
    %v3253 = vpop.f32.mrf.mxu0
    %3254 = vdwg.mxu0
    %v3255 = vmax.f32 %v3161, 0.0
    %v3256 = vmax.f32 %v3174, 0.0
    %v3257 = vmax.f32 %v3187, 0.0
    %v3258 = vmax.f32 %v3200, 0.0
    %v3259 = vmax.f32 %v3213, 0.0
    %v3260 = vmax.f32 %v3226, 0.0
    %v3261 = vmax.f32 %v3239, 0.0
    %v3262 = vmax.f32 %v3252, 0.0
    %v3263 = vpack.c.bf16 %v3255, %v3255
    %v3264 = vpack.c.bf16 %v3256, %v3256
    %v3265 = vpack.c.bf16 %v3257, %v3257
    %v3266 = vpack.c.bf16 %v3258, %v3258
    %v3267 = vpack.c.bf16 %v3259, %v3259
    %v3268 = vpack.c.bf16 %v3260, %v3260
    %v3269 = vpack.c.bf16 %v3261, %v3261
    %v3270 = vpack.c.bf16 %v3262, %v3262
    %v3271 = vld [vmem:[#allocation9] sm:$0xf]
    %v3272 = vld [vmem:[#allocation9 + $0x4] sm:$0xf]
    %v3273 = vld [vmem:[#allocation9 + $0x8] sm:$0xf]
    %v3274 = vld [vmem:[#allocation9 + $0xc] sm:$0xf]
    %v3275 = vld [vmem:[#allocation9 + $0x10] sm:$0xf]
    %v3276 = vld [vmem:[#allocation9 + $0x14] sm:$0xf]
    %v3277 = vld [vmem:[#allocation9 + $0x18] sm:$0xf]
    %v3278 = vld [vmem:[#allocation9 + $0x1c] sm:$0xf]
    %v3279 = vld [vmem:[#allocation9 + $0x20] sm:$0xf]
    %v3280 = vld [vmem:[#allocation9 + $0x24] sm:$0xf]
    %v3281 = vld [vmem:[#allocation9 + $0x28] sm:$0xf]
    %v3282 = vld [vmem:[#allocation9 + $0x2c] sm:$0xf]
    %v3283 = vld [vmem:[#allocation9 + $0x30] sm:$0xf]
    %v3284 = vld [vmem:[#allocation9 + $0x34] sm:$0xf]
    %v3285 = vld [vmem:[#allocation9 + $0x38] sm:$0xf]
    %v3286 = vld [vmem:[#allocation9 + $0x3c] sm:$0xf]
    %v3287 = vld [vmem:[#allocation9 + $0x40] sm:$0xf]
    %v3288 = vld [vmem:[#allocation9 + $0x44] sm:$0xf]
    %v3289 = vld [vmem:[#allocation9 + $0x48] sm:$0xf]
    %v3290 = vld [vmem:[#allocation9 + $0x4c] sm:$0xf]
    %v3291 = vld [vmem:[#allocation9 + $0x50] sm:$0xf]
    %v3292 = vld [vmem:[#allocation9 + $0x54] sm:$0xf]
    %v3293 = vld [vmem:[#allocation9 + $0x58] sm:$0xf]
    %v3294 = vld [vmem:[#allocation9 + $0x5c] sm:$0xf]
    %v3295 = vld [vmem:[#allocation9 + $0x60] sm:$0xf]
    %v3296 = vld [vmem:[#allocation9 + $0x64] sm:$0xf]
    %v3297 = vld [vmem:[#allocation9 + $0x68] sm:$0xf]
    %v3298 = vld [vmem:[#allocation9 + $0x6c] sm:$0xf]
    %v3299 = vld [vmem:[#allocation9 + $0x70] sm:$0xf]
    %v3300 = vld [vmem:[#allocation9 + $0x74] sm:$0xf]
    %v3301 = vld [vmem:[#allocation9 + $0x78] sm:$0xf]
    %v3302 = vld [vmem:[#allocation9 + $0x7c] sm:$0xf]
    %v3303 = vld [vmem:[#allocation9 + $0x80] sm:$0xf]
    %v3304 = vld [vmem:[#allocation9 + $0x84] sm:$0xf]
    %v3305 = vld [vmem:[#allocation9 + $0x88] sm:$0xf]
    %v3306 = vld [vmem:[#allocation9 + $0x8c] sm:$0xf]
    %v3307 = vld [vmem:[#allocation9 + $0x90] sm:$0xf]
    %v3308 = vld [vmem:[#allocation9 + $0x94] sm:$0xf]
    %v3309 = vld [vmem:[#allocation9 + $0x98] sm:$0xf]
    %v3310 = vld [vmem:[#allocation9 + $0x9c] sm:$0xf]
    %v3311 = vld [vmem:[#allocation9 + $0xa0] sm:$0xf]
    %v3312 = vld [vmem:[#allocation9 + $0xa4] sm:$0xf]
    %v3313 = vld [vmem:[#allocation9 + $0xa8] sm:$0xf]
    %v3314 = vld [vmem:[#allocation9 + $0xac] sm:$0xf]
    %v3315 = vld [vmem:[#allocation9 + $0xb0] sm:$0xf]
    %v3316 = vld [vmem:[#allocation9 + $0xb4] sm:$0xf]
    %v3317 = vld [vmem:[#allocation9 + $0xb8] sm:$0xf]
    %v3318 = vld [vmem:[#allocation9 + $0xbc] sm:$0xf]
    %v3319 = vld [vmem:[#allocation9 + $0xc0] sm:$0xf]
    %v3320 = vld [vmem:[#allocation9 + $0xc4] sm:$0xf]
    %v3321 = vld [vmem:[#allocation9 + $0xc8] sm:$0xf]
    %v3322 = vld [vmem:[#allocation9 + $0xcc] sm:$0xf]
    %v3323 = vld [vmem:[#allocation9 + $0xd0] sm:$0xf]
    %v3324 = vld [vmem:[#allocation9 + $0xd4] sm:$0xf]
    %v3325 = vld [vmem:[#allocation9 + $0xd8] sm:$0xf]
    %v3326 = vld [vmem:[#allocation9 + $0xdc] sm:$0xf]
    %v3327 = vld [vmem:[#allocation9 + $0xe0] sm:$0xf]
    %v3328 = vld [vmem:[#allocation9 + $0xe4] sm:$0xf]
    %v3329 = vld [vmem:[#allocation9 + $0xe8] sm:$0xf]
    %v3330 = vld [vmem:[#allocation9 + $0xec] sm:$0xf]
    %v3331 = vld [vmem:[#allocation9 + $0xf0] sm:$0xf]
    %v3332 = vld [vmem:[#allocation9 + $0xf4] sm:$0xf]
    %v3333 = vld [vmem:[#allocation9 + $0xf8] sm:$0xf]
    %v3334 = vld [vmem:[#allocation9 + $0xfc] sm:$0xf]
    %v3335 = vld [vmem:[#allocation9 + $0x100] sm:$0xf]
    %v3336 = vld [vmem:[#allocation9 + $0x104] sm:$0xf]
    %v3337 = vld [vmem:[#allocation9 + $0x108] sm:$0xf]
    %v3338 = vld [vmem:[#allocation9 + $0x10c] sm:$0xf]
    %v3339 = vld [vmem:[#allocation9 + $0x110] sm:$0xf]
    %v3340 = vld [vmem:[#allocation9 + $0x114] sm:$0xf]
    %v3341 = vld [vmem:[#allocation9 + $0x118] sm:$0xf]
    %v3342 = vld [vmem:[#allocation9 + $0x11c] sm:$0xf]
    %v3343 = vld [vmem:[#allocation9 + $0x120] sm:$0xf]
    %v3344 = vld [vmem:[#allocation9 + $0x124] sm:$0xf]
    %v3345 = vld [vmem:[#allocation9 + $0x128] sm:$0xf]
    %v3346 = vld [vmem:[#allocation9 + $0x12c] sm:$0xf]
    %v3347 = vld [vmem:[#allocation9 + $0x130] sm:$0xf]
    %v3348 = vld [vmem:[#allocation9 + $0x134] sm:$0xf]
    %v3349 = vld [vmem:[#allocation9 + $0x138] sm:$0xf]
    %v3350 = vld [vmem:[#allocation9 + $0x13c] sm:$0xf]
    %v3351 = vld [vmem:[#allocation9 + $0x140] sm:$0xf]
    %v3352 = vld [vmem:[#allocation9 + $0x144] sm:$0xf]
    %v3353 = vld [vmem:[#allocation9 + $0x148] sm:$0xf]
    %v3354 = vld [vmem:[#allocation9 + $0x14c] sm:$0xf]
    %v3355 = vld [vmem:[#allocation9 + $0x150] sm:$0xf]
    %v3356 = vld [vmem:[#allocation9 + $0x154] sm:$0xf]
    %v3357 = vld [vmem:[#allocation9 + $0x158] sm:$0xf]
    %v3358 = vld [vmem:[#allocation9 + $0x15c] sm:$0xf]
    %v3359 = vld [vmem:[#allocation9 + $0x160] sm:$0xf]
    %v3360 = vld [vmem:[#allocation9 + $0x164] sm:$0xf]
    %v3361 = vld [vmem:[#allocation9 + $0x168] sm:$0xf]
    %v3362 = vld [vmem:[#allocation9 + $0x16c] sm:$0xf]
    %v3363 = vld [vmem:[#allocation9 + $0x170] sm:$0xf]
    %v3364 = vld [vmem:[#allocation9 + $0x174] sm:$0xf]
    %v3365 = vld [vmem:[#allocation9 + $0x178] sm:$0xf]
    %v3366 = vld [vmem:[#allocation9 + $0x17c] sm:$0xf]
    %v3367 = vld [vmem:[#allocation9 + $0x180] sm:$0xf]
    %v3368 = vld [vmem:[#allocation9 + $0x184] sm:$0xf]
    %v3369 = vld [vmem:[#allocation9 + $0x188] sm:$0xf]
    %v3370 = vld [vmem:[#allocation9 + $0x18c] sm:$0xf]
    %v3371 = vld [vmem:[#allocation9 + $0x190] sm:$0xf]
    %v3372 = vld [vmem:[#allocation9 + $0x194] sm:$0xf]
    %v3373 = vld [vmem:[#allocation9 + $0x198] sm:$0xf]
    %v3374 = vld [vmem:[#allocation9 + $0x19c] sm:$0xf]
    %v3375 = vld [vmem:[#allocation9 + $0x1a0] sm:$0xf]
    %v3376 = vld [vmem:[#allocation9 + $0x1a4] sm:$0xf]
    %v3377 = vld [vmem:[#allocation9 + $0x1a8] sm:$0xf]
    %v3378 = vld [vmem:[#allocation9 + $0x1ac] sm:$0xf]
    %v3379 = vld [vmem:[#allocation9 + $0x1b0] sm:$0xf]
    %v3380 = vld [vmem:[#allocation9 + $0x1b4] sm:$0xf]
    %v3381 = vld [vmem:[#allocation9 + $0x1b8] sm:$0xf]
    %v3382 = vld [vmem:[#allocation9 + $0x1bc] sm:$0xf]
    %v3383 = vld [vmem:[#allocation9 + $0x1c0] sm:$0xf]
    %v3384 = vld [vmem:[#allocation9 + $0x1c4] sm:$0xf]
    %v3385 = vld [vmem:[#allocation9 + $0x1c8] sm:$0xf]
    %v3386 = vld [vmem:[#allocation9 + $0x1cc] sm:$0xf]
    %v3387 = vld [vmem:[#allocation9 + $0x1d0] sm:$0xf]
    %v3388 = vld [vmem:[#allocation9 + $0x1d4] sm:$0xf]
    %v3389 = vld [vmem:[#allocation9 + $0x1d8] sm:$0xf]
    %v3390 = vld [vmem:[#allocation9 + $0x1dc] sm:$0xf]
    %v3391 = vld [vmem:[#allocation9 + $0x1e0] sm:$0xf]
    %v3392 = vld [vmem:[#allocation9 + $0x1e4] sm:$0xf]
    %v3393 = vld [vmem:[#allocation9 + $0x1e8] sm:$0xf]
    %v3394 = vld [vmem:[#allocation9 + $0x1ec] sm:$0xf]
    %v3395 = vld [vmem:[#allocation9 + $0x1f0] sm:$0xf]
    %v3396 = vld [vmem:[#allocation9 + $0x1f4] sm:$0xf]
    %v3397 = vld [vmem:[#allocation9 + $0x1f8] sm:$0xf]
    %v3398 = vld [vmem:[#allocation9 + $0x1fc] sm:$0xf]
    %v3399 = vld [vmem:[%s3 + $0xc] sm:$0x1]
    %v3401 = vperm.slane %v3399, 0
    %v3531 = vunpack.c.l.b16 %v3271
    %v3532 = vunpack.c.l.b16 %v3272
    %v3533 = vunpack.c.l.b16 %v3273
    %v3534 = vunpack.c.l.b16 %v3274
    %v3535 = vunpack.c.l.b16 %v3275
    %v3536 = vunpack.c.l.b16 %v3276
    %v3537 = vunpack.c.l.b16 %v3277
    %v3538 = vunpack.c.l.b16 %v3278
    %v3539 = vunpack.c.l.b16 %v3279
    %v3540 = vunpack.c.l.b16 %v3280
    %v3541 = vunpack.c.l.b16 %v3281
    %v3542 = vunpack.c.l.b16 %v3282
    %v3543 = vunpack.c.l.b16 %v3283
    %v3544 = vunpack.c.l.b16 %v3284
    %v3545 = vunpack.c.l.b16 %v3285
    %v3546 = vunpack.c.l.b16 %v3286
    %v3547 = vunpack.c.l.b16 %v3287
    %v3548 = vunpack.c.l.b16 %v3288
    %v3549 = vunpack.c.l.b16 %v3289
    %v3550 = vunpack.c.l.b16 %v3290
    %v3551 = vunpack.c.l.b16 %v3291
    %v3552 = vunpack.c.l.b16 %v3292
    %v3553 = vunpack.c.l.b16 %v3293
    %v3554 = vunpack.c.l.b16 %v3294
    %v3555 = vunpack.c.l.b16 %v3295
    %v3556 = vunpack.c.l.b16 %v3296
    %v3557 = vunpack.c.l.b16 %v3297
    %v3558 = vunpack.c.l.b16 %v3298
    %v3559 = vunpack.c.l.b16 %v3299
    %v3560 = vunpack.c.l.b16 %v3300
    %v3561 = vunpack.c.l.b16 %v3301
    %v3562 = vunpack.c.l.b16 %v3302
    %v3563 = vunpack.c.l.b16 %v3303
    %v3564 = vunpack.c.l.b16 %v3304
    %v3565 = vunpack.c.l.b16 %v3305
    %v3566 = vunpack.c.l.b16 %v3306
    %v3567 = vunpack.c.l.b16 %v3307
    %v3568 = vunpack.c.l.b16 %v3308
    %v3569 = vunpack.c.l.b16 %v3309
    %v3570 = vunpack.c.l.b16 %v3310
    %v3571 = vunpack.c.l.b16 %v3311
    %v3572 = vunpack.c.l.b16 %v3312
    %v3573 = vunpack.c.l.b16 %v3313
    %v3574 = vunpack.c.l.b16 %v3314
    %v3575 = vunpack.c.l.b16 %v3315
    %v3576 = vunpack.c.l.b16 %v3316
    %v3577 = vunpack.c.l.b16 %v3317
    %v3578 = vunpack.c.l.b16 %v3318
    %v3579 = vunpack.c.l.b16 %v3319
    %v3580 = vunpack.c.l.b16 %v3320
    %v3581 = vunpack.c.l.b16 %v3321
    %v3582 = vunpack.c.l.b16 %v3322
    %v3583 = vunpack.c.l.b16 %v3323
    %v3584 = vunpack.c.l.b16 %v3324
    %v3585 = vunpack.c.l.b16 %v3325
    %v3586 = vunpack.c.l.b16 %v3326
    %v3587 = vunpack.c.l.b16 %v3327
    %v3588 = vunpack.c.l.b16 %v3328
    %v3589 = vunpack.c.l.b16 %v3329
    %v3590 = vunpack.c.l.b16 %v3330
    %v3591 = vunpack.c.l.b16 %v3331
    %v3592 = vunpack.c.l.b16 %v3332
    %v3593 = vunpack.c.l.b16 %v3333
    %v3594 = vunpack.c.l.b16 %v3334
    %v3595 = vunpack.c.l.b16 %v3335
    %v3596 = vunpack.c.l.b16 %v3336
    %v3597 = vunpack.c.l.b16 %v3337
    %v3598 = vunpack.c.l.b16 %v3338
    %v3599 = vunpack.c.l.b16 %v3339
    %v3600 = vunpack.c.l.b16 %v3340
    %v3601 = vunpack.c.l.b16 %v3341
    %v3602 = vunpack.c.l.b16 %v3342
    %v3603 = vunpack.c.l.b16 %v3343
    %v3604 = vunpack.c.l.b16 %v3344
    %v3605 = vunpack.c.l.b16 %v3345
    %v3606 = vunpack.c.l.b16 %v3346
    %v3607 = vunpack.c.l.b16 %v3347
    %v3608 = vunpack.c.l.b16 %v3348
    %v3609 = vunpack.c.l.b16 %v3349
    %v3610 = vunpack.c.l.b16 %v3350
    %v3611 = vunpack.c.l.b16 %v3351
    %v3612 = vunpack.c.l.b16 %v3352
    %v3613 = vunpack.c.l.b16 %v3353
    %v3614 = vunpack.c.l.b16 %v3354
    %v3615 = vunpack.c.l.b16 %v3355
    %v3616 = vunpack.c.l.b16 %v3356
    %v3617 = vunpack.c.l.b16 %v3357
    %v3618 = vunpack.c.l.b16 %v3358
    %v3619 = vunpack.c.l.b16 %v3359
    %v3620 = vunpack.c.l.b16 %v3360
    %v3621 = vunpack.c.l.b16 %v3361
    %v3622 = vunpack.c.l.b16 %v3362
    %v3623 = vunpack.c.l.b16 %v3363
    %v3624 = vunpack.c.l.b16 %v3364
    %v3625 = vunpack.c.l.b16 %v3365
    %v3626 = vunpack.c.l.b16 %v3366
    %v3627 = vunpack.c.l.b16 %v3367
    %v3628 = vunpack.c.l.b16 %v3368
    %v3629 = vunpack.c.l.b16 %v3369
    %v3630 = vunpack.c.l.b16 %v3370
    %v3631 = vunpack.c.l.b16 %v3371
    %v3632 = vunpack.c.l.b16 %v3372
    %v3633 = vunpack.c.l.b16 %v3373
    %v3634 = vunpack.c.l.b16 %v3374
    %v3635 = vunpack.c.l.b16 %v3375
    %v3636 = vunpack.c.l.b16 %v3376
    %v3637 = vunpack.c.l.b16 %v3377
    %v3638 = vunpack.c.l.b16 %v3378
    %v3639 = vunpack.c.l.b16 %v3379
    %v3640 = vunpack.c.l.b16 %v3380
    %v3641 = vunpack.c.l.b16 %v3381
    %v3642 = vunpack.c.l.b16 %v3382
    %v3643 = vunpack.c.l.b16 %v3383
    %v3644 = vunpack.c.l.b16 %v3384
    %v3645 = vunpack.c.l.b16 %v3385
    %v3646 = vunpack.c.l.b16 %v3386
    %v3647 = vunpack.c.l.b16 %v3387
    %v3648 = vunpack.c.l.b16 %v3388
    %v3649 = vunpack.c.l.b16 %v3389
    %v3650 = vunpack.c.l.b16 %v3390
    %v3651 = vunpack.c.l.b16 %v3391
    %v3652 = vunpack.c.l.b16 %v3392
    %v3653 = vunpack.c.l.b16 %v3393
    %v3654 = vunpack.c.l.b16 %v3394
    %v3655 = vunpack.c.l.b16 %v3395
    %v3656 = vunpack.c.l.b16 %v3396
    %v3657 = vunpack.c.l.b16 %v3397
    %v3658 = vunpack.c.l.b16 %v3398
    %v3659 = vpack.c.b16 %v3532, %v3531
    %v3660 = vpack.c.b16 %v3534, %v3533
    %v3661 = vpack.c.b16 %v3536, %v3535
    %v3662 = vpack.c.b16 %v3538, %v3537
    %v3663 = vpack.c.b16 %v3540, %v3539
    %v3664 = vpack.c.b16 %v3542, %v3541
    %v3665 = vpack.c.b16 %v3544, %v3543
    %v3666 = vpack.c.b16 %v3546, %v3545
    %v3667 = vpack.c.b16 %v3548, %v3547
    %v3668 = vpack.c.b16 %v3550, %v3549
    %v3669 = vpack.c.b16 %v3552, %v3551
    %v3670 = vpack.c.b16 %v3554, %v3553
    %v3671 = vpack.c.b16 %v3556, %v3555
    %v3672 = vpack.c.b16 %v3558, %v3557
    %v3673 = vpack.c.b16 %v3560, %v3559
    %v3674 = vpack.c.b16 %v3562, %v3561
    %v3675 = vpack.c.b16 %v3564, %v3563
    %v3676 = vpack.c.b16 %v3566, %v3565
    %v3677 = vpack.c.b16 %v3568, %v3567
    %v3678 = vpack.c.b16 %v3570, %v3569
    %v3679 = vpack.c.b16 %v3572, %v3571
    %v3680 = vpack.c.b16 %v3574, %v3573
    %v3681 = vpack.c.b16 %v3576, %v3575
    %v3682 = vpack.c.b16 %v3578, %v3577
    %v3683 = vpack.c.b16 %v3580, %v3579
    %v3684 = vpack.c.b16 %v3582, %v3581
    %v3685 = vpack.c.b16 %v3584, %v3583
    %v3686 = vpack.c.b16 %v3586, %v3585
    %v3687 = vpack.c.b16 %v3588, %v3587
    %v3688 = vpack.c.b16 %v3590, %v3589
    %v3689 = vpack.c.b16 %v3592, %v3591
    %v3690 = vpack.c.b16 %v3594, %v3593
    %v3691 = vpack.c.b16 %v3596, %v3595
    %v3692 = vpack.c.b16 %v3598, %v3597
    %v3693 = vpack.c.b16 %v3600, %v3599
    %v3694 = vpack.c.b16 %v3602, %v3601
    %v3695 = vpack.c.b16 %v3604, %v3603
    %v3696 = vpack.c.b16 %v3606, %v3605
    %v3697 = vpack.c.b16 %v3608, %v3607
    %v3698 = vpack.c.b16 %v3610, %v3609
    %v3699 = vpack.c.b16 %v3612, %v3611
    %v3700 = vpack.c.b16 %v3614, %v3613
    %v3701 = vpack.c.b16 %v3616, %v3615
    %v3702 = vpack.c.b16 %v3618, %v3617
    %v3703 = vpack.c.b16 %v3620, %v3619
    %v3704 = vpack.c.b16 %v3622, %v3621
    %v3705 = vpack.c.b16 %v3624, %v3623
    %v3706 = vpack.c.b16 %v3626, %v3625
    %v3707 = vpack.c.b16 %v3628, %v3627
    %v3708 = vpack.c.b16 %v3630, %v3629
    %v3709 = vpack.c.b16 %v3632, %v3631
    %v3710 = vpack.c.b16 %v3634, %v3633
    %v3711 = vpack.c.b16 %v3636, %v3635
    %v3712 = vpack.c.b16 %v3638, %v3637
    %v3713 = vpack.c.b16 %v3640, %v3639
    %v3714 = vpack.c.b16 %v3642, %v3641
    %v3715 = vpack.c.b16 %v3644, %v3643
    %v3716 = vpack.c.b16 %v3646, %v3645
    %v3717 = vpack.c.b16 %v3648, %v3647
    %v3718 = vpack.c.b16 %v3650, %v3649
    %v3719 = vpack.c.b16 %v3652, %v3651
    %v3720 = vpack.c.b16 %v3654, %v3653
    %v3721 = vpack.c.b16 %v3656, %v3655
    %v3722 = vpack.c.b16 %v3658, %v3657
    %3787 = vmatpush.bf16.msra.mxu0 %v3666
    %3788 = vmatpush.bf16.msra.mxu0 %v3665
    %3789 = vmatpush.bf16.msra.mxu0 %v3664
    %3790 = vmatpush.bf16.msra.mxu0 %v3663
    %3791 = vmatpush.bf16.msra.mxu0 %v3662
    %3792 = vmatpush.bf16.msra.mxu0 %v3661
    %3793 = vmatpush.bf16.msra.mxu0 %v3660
    %3794 = vmatpush.bf16.msra.mxu0 %v3659
    %3795 = vmatmul.bf16.gmra.mxu0 %v3263
    %v3796 = vpop.f32.mrf.mxu0
    %v3797 = vadd.f32 %v3401, %v3796
    %v3798 = vpop.f32.mrf.mxu0
    %3799 = vdwg.mxu0
    %3800 = vmatpush.bf16.msra.mxu0 %v3674
    %3801 = vmatpush.bf16.msra.mxu0 %v3673
    %3802 = vmatpush.bf16.msra.mxu0 %v3672
    %3803 = vmatpush.bf16.msra.mxu0 %v3671
    %3804 = vmatpush.bf16.msra.mxu0 %v3670
    %3805 = vmatpush.bf16.msra.mxu0 %v3669
    %3806 = vmatpush.bf16.msra.mxu0 %v3668
    %3807 = vmatpush.bf16.msra.mxu0 %v3667
    %3808 = vmatmul.bf16.gmra.mxu0 %v3264
    %v3809 = vpop.f32.mrf.mxu0
    %v3810 = vadd.f32 %v3797, %v3809
    %v3811 = vpop.f32.mrf.mxu0
    %3812 = vdwg.mxu0
    %3813 = vmatpush.bf16.msra.mxu0 %v3682
    %3814 = vmatpush.bf16.msra.mxu0 %v3681
    %3815 = vmatpush.bf16.msra.mxu0 %v3680
    %3816 = vmatpush.bf16.msra.mxu0 %v3679
    %3817 = vmatpush.bf16.msra.mxu0 %v3678
    %3818 = vmatpush.bf16.msra.mxu0 %v3677
    %3819 = vmatpush.bf16.msra.mxu0 %v3676
    %3820 = vmatpush.bf16.msra.mxu0 %v3675
    %3821 = vmatmul.bf16.gmra.mxu0 %v3265
    %v3822 = vpop.f32.mrf.mxu0
    %v3823 = vadd.f32 %v3810, %v3822
    %v3824 = vpop.f32.mrf.mxu0
    %3825 = vdwg.mxu0
    %3826 = vmatpush.bf16.msra.mxu0 %v3690
    %3827 = vmatpush.bf16.msra.mxu0 %v3689
    %3828 = vmatpush.bf16.msra.mxu0 %v3688
    %3829 = vmatpush.bf16.msra.mxu0 %v3687
    %3830 = vmatpush.bf16.msra.mxu0 %v3686
    %3831 = vmatpush.bf16.msra.mxu0 %v3685
    %3832 = vmatpush.bf16.msra.mxu0 %v3684
    %3833 = vmatpush.bf16.msra.mxu0 %v3683
    %3834 = vmatmul.bf16.gmra.mxu0 %v3266
    %v3835 = vpop.f32.mrf.mxu0
    %v3836 = vadd.f32 %v3823, %v3835
    %v3837 = vpop.f32.mrf.mxu0
    %3838 = vdwg.mxu0
    %3839 = vmatpush.bf16.msra.mxu0 %v3698
    %3840 = vmatpush.bf16.msra.mxu0 %v3697
    %3841 = vmatpush.bf16.msra.mxu0 %v3696
    %3842 = vmatpush.bf16.msra.mxu0 %v3695
    %3843 = vmatpush.bf16.msra.mxu0 %v3694
    %3844 = vmatpush.bf16.msra.mxu0 %v3693
    %3845 = vmatpush.bf16.msra.mxu0 %v3692
    %3846 = vmatpush.bf16.msra.mxu0 %v3691
    %3847 = vmatmul.bf16.gmra.mxu0 %v3267
    %v3848 = vpop.f32.mrf.mxu0
    %v3849 = vadd.f32 %v3836, %v3848
    %v3850 = vpop.f32.mrf.mxu0
    %3851 = vdwg.mxu0
    %3852 = vmatpush.bf16.msra.mxu0 %v3706
    %3853 = vmatpush.bf16.msra.mxu0 %v3705
    %3854 = vmatpush.bf16.msra.mxu0 %v3704
    %3855 = vmatpush.bf16.msra.mxu0 %v3703
    %3856 = vmatpush.bf16.msra.mxu0 %v3702
    %3857 = vmatpush.bf16.msra.mxu0 %v3701
    %3858 = vmatpush.bf16.msra.mxu0 %v3700
    %3859 = vmatpush.bf16.msra.mxu0 %v3699
    %3860 = vmatmul.bf16.gmra.mxu0 %v3268
    %v3861 = vpop.f32.mrf.mxu0
    %v3862 = vadd.f32 %v3849, %v3861
    %v3863 = vpop.f32.mrf.mxu0
    %3864 = vdwg.mxu0
    %3865 = vmatpush.bf16.msra.mxu0 %v3714
    %3866 = vmatpush.bf16.msra.mxu0 %v3713
    %3867 = vmatpush.bf16.msra.mxu0 %v3712
    %3868 = vmatpush.bf16.msra.mxu0 %v3711
    %3869 = vmatpush.bf16.msra.mxu0 %v3710
    %3870 = vmatpush.bf16.msra.mxu0 %v3709
    %3871 = vmatpush.bf16.msra.mxu0 %v3708
    %3872 = vmatpush.bf16.msra.mxu0 %v3707
    %3873 = vmatmul.bf16.gmra.mxu0 %v3269
    %v3874 = vpop.f32.mrf.mxu0
    %v3875 = vadd.f32 %v3862, %v3874
    %v3876 = vpop.f32.mrf.mxu0
    %3877 = vdwg.mxu0
    %3878 = vmatpush.bf16.msra.mxu0 %v3722
    %3879 = vmatpush.bf16.msra.mxu0 %v3721
    %3880 = vmatpush.bf16.msra.mxu0 %v3720
    %3881 = vmatpush.bf16.msra.mxu0 %v3719
    %3882 = vmatpush.bf16.msra.mxu0 %v3718
    %3883 = vmatpush.bf16.msra.mxu0 %v3717
    %3884 = vmatpush.bf16.msra.mxu0 %v3716
    %3885 = vmatpush.bf16.msra.mxu0 %v3715
    %3886 = vmatmul.bf16.gmra.mxu0 %v3270
    %v3887 = vpop.f32.mrf.mxu0
    %v3888 = vadd.f32 %v3875, %v3887
    %v3889 = vpop.f32.mrf.mxu0
    %3890 = vdwg.mxu0
    %v3891 = vmax.f32 %v3888, 0.0
    %v3892 = vpack.c.bf16 %v3891, %v3891
    %v3893 = vld [vmem:[%s6] sm:$0xf]
    %v3894 = vld [vmem:[%s6 + $0x4] sm:$0xf]
    %v3895 = vld [vmem:[%s6 + $0x8] sm:$0xf]
    %v3896 = vld [vmem:[%s6 + $0xc] sm:$0xf]
    %v3897 = vld [vmem:[%s6 + $0x10] sm:$0xf]
    %v3898 = vld [vmem:[%s6 + $0x14] sm:$0xf]
    %v3899 = vld [vmem:[%s6 + $0x18] sm:$0xf]
    %v3900 = vld [vmem:[%s6 + $0x1c] sm:$0xf]
    %v3901 = vld [vmem:[%s6 + $0x20] sm:$0xf]
    %v3902 = vld [vmem:[%s6 + $0x24] sm:$0xf]
    %v3903 = vld [vmem:[%s6 + $0x28] sm:$0xf]
    %v3904 = vld [vmem:[%s6 + $0x2c] sm:$0xf]
    %v3905 = vld [vmem:[%s6 + $0x30] sm:$0xf]
    %v3906 = vld [vmem:[%s6 + $0x34] sm:$0xf]
    %v3907 = vld [vmem:[%s6 + $0x38] sm:$0xf]
    %v3908 = vld [vmem:[%s6 + $0x3c] sm:$0xf]
    %v3909 = vld [vmem:[%s3 + $0xd] sm:$0x1]
    %v3911 = vperm.slane %v3909, 0
    %v3929 = vunpack.c.l.b16 %v3893
    %v3930 = vunpack.c.l.b16 %v3894
    %v3931 = vunpack.c.l.b16 %v3895
    %v3932 = vunpack.c.l.b16 %v3896
    %v3933 = vunpack.c.l.b16 %v3897
    %v3934 = vunpack.c.l.b16 %v3898
    %v3935 = vunpack.c.l.b16 %v3899
    %v3936 = vunpack.c.l.b16 %v3900
    %v3937 = vunpack.c.l.b16 %v3901
    %v3938 = vunpack.c.l.b16 %v3902
    %v3939 = vunpack.c.l.b16 %v3903
    %v3940 = vunpack.c.l.b16 %v3904
    %v3941 = vunpack.c.l.b16 %v3905
    %v3942 = vunpack.c.l.b16 %v3906
    %v3943 = vunpack.c.l.b16 %v3907
    %v3944 = vunpack.c.l.b16 %v3908
    %v3945 = vpack.c.b16 %v3930, %v3929
    %v3946 = vpack.c.b16 %v3932, %v3931
    %v3947 = vpack.c.b16 %v3934, %v3933
    %v3948 = vpack.c.b16 %v3936, %v3935
    %v3949 = vpack.c.b16 %v3938, %v3937
    %v3950 = vpack.c.b16 %v3940, %v3939
    %v3951 = vpack.c.b16 %v3942, %v3941
    %v3952 = vpack.c.b16 %v3944, %v3943
    %3961 = vmatpush.bf16.msra.mxu0 %v3952
    %3962 = vmatpush.bf16.msra.mxu0 %v3951
    %3963 = vmatpush.bf16.msra.mxu0 %v3950
    %3964 = vmatpush.bf16.msra.mxu0 %v3949
    %3965 = vmatpush.bf16.msra.mxu0 %v3948
    %3966 = vmatpush.bf16.msra.mxu0 %v3947
    %3967 = vmatpush.bf16.msra.mxu0 %v3946
    %3968 = vmatpush.bf16.msra.mxu0 %v3945
    %3969 = vmatmul.bf16.gmra.mxu0 %v3892
    %v3970 = vpop.f32.mrf.mxu0
    %v3971 = vadd.f32 %v3911, %v3970
    %v3972 = vpop.f32.mrf.mxu0
    %3973 = vdwg.mxu0
    %v3974 = vxor.u32 %v3971, 2147483648
    %v3975 = vmul.f32 %v3974, 1.442695
    %v3976 = vpow.pop %v3975
    %v3977 = vadd.f32 %v3976, 1.0
    %v3978 = vrcp.pop %v3977
    %v3979 = vmul.f32 %v3977, %v3978
    %v3980 = vsub.f32 1.0, %v3979
    %v3981 = vmul.f32 %v3978, %v3980
    %v3982 = vadd.f32 %v3978, %v3981
    %vm3983 = vweird.f32 %v3977
    %vm3984 = vweird.f32 %v3978
    %vm3985 = vmor %vm3983, %vm3984
    %v3986 = vsel %vm3985, %v3978, %v3982
    %v3987 = vand.u32 2147483647, %v3977
    %vm3988 = vcmp.eq.f32.partialorder %v3987, 8.507059e+37
    %v3989 = vand.u32 %v3977, 2147483648
    %v3990 = vor.u32 1.1754944e-38, %v3989
    %v3991 = vsel %vm3988, %v3990, %v3986
    %v3992 = vmul.f32 1.0, %v3991
    %vm3993 = vcmask 72704
    %3994 = vst.msk [vmem:[#allocation11] sm:$0xff] %vm3993, %v3992
    // Predicated region
    $region46: #{lstm_encoder_forward.1} parent=1 // pred_check
      _
    $region47: #{lstm_encoder_forward.1} parent=1 // pred_check_branch
      %3996 = sbr.rel (0) target = $region49
    $region48: #{lstm_encoder_forward.1} parent=1 // pred_region
      %3998 = vsyncadd [#allocation5], 0
      %s4000 = sshll.u32 [#allocation11], 4
      %s4001 = int_to_ptr.vmem [resolvable:$true] %s4000
      %s4002 = sshll.u32 %s7, 4
      %s4003 = int_to_ptr.hbm [resolvable:$true] %s4002
      %4005 = dma.vmem_to_hbm [thread:$0]  %s4001, 128, %s4003, [#allocation5]
    $region49: #{lstm_encoder_forward.1} parent=1 // pred_fallthru
      _
    // Predicated region
    $region50: #{lstm_encoder_forward.1} parent=1 // pred_check
      _
    $region51: #{lstm_encoder_forward.1} parent=1 // pred_check_branch
      %4007 = sbr.rel (0) target = $region53
    $region52: #{lstm_encoder_forward.1} parent=1 // pred_region
      _
    $region53: #{lstm_encoder_forward.1} parent=1 // pred_fallthru
      _
    // Predicated region
    $region54: #{lstm_encoder_forward.1} parent=1 // pred_check
      _
    $region55: #{lstm_encoder_forward.1} parent=1 // pred_check_branch
      %4009 = sbr.rel (0) target = $region57
    $region56: #{lstm_encoder_forward.1} parent=1 // pred_region
      %4011 = dma.done [#allocation5], 128
    $region57: #{lstm_encoder_forward.1} parent=1 // pred_fallthru
      _
    // Predicated region
    $region58: #{lstm_encoder_forward.1} parent=1 // pred_check
      _
    $region59: #{lstm_encoder_forward.1} parent=1 // pred_check_branch
      %4013 = sbr.rel (0) target = $region61
    $region60: #{lstm_encoder_forward.1} parent=1 // pred_region
      _
    $region61: #{lstm_encoder_forward.1} parent=1 // pred_fallthru
      _
    %4014 = vsyncpa [#allocation4], 1
    %4015 = vsyncpa [#allocation7], 1
    %4016 = vsyncpa [#allocation10], 1
    %4017 = vsyncpa [#allocation5], 1

</llo_original>
